<compile_context>
chip_gen: v6e
topology: v6e:2x2x1
jax: 0.10.0
libtpu: 0.0.40
codegen_flags: <defaults>
</compile_context>

<pallas_src>
import jax
import jax.numpy as jnp
from jax.experimental import pallas as pl
from jax.experimental.pallas import tpu as pltpu

F = 4                    # feature size of Linear(4, 4)
LANES = 128              # TPU vreg lane width
GROUPS = LANES // F      # 32 batch items per 128-lane row
MAX_TILE_ROWS = 1024     # (1024, 128) f32 = 512 KiB per block


def _round_up(n, m):
    return ((n + m - 1) // m) * m


def _dot(a, b):
    # Full-precision f32 MXU matmul (the MXU is otherwise idle in this model).
    return jnp.dot(a, b, precision=jax.lax.Precision.HIGHEST,
                   preferred_element_type=jnp.float32)


def _fused_mlp_kernel(x_ref, w0_ref, w1_ref, w2_ref, ones_ref, b_ref, o_ref):
    """One (r_tile, 128) slab.  Lane l holds feature l%4 of batch item
    row*32 + l//4, so all per-item 4-wide mixing / reductions are 128x128
    block-diagonal matmuls and every load/store stays fully dense."""
    x = x_ref[...]                       # single coalesced full-block load
    w0 = w0_ref[...]
    ones_bd = ones_ref[...]              # kron(I_32, ones(4,4))
    b0 = b_ref[0:1, :]                   # (1,128) bias rows, sublane-broadcast
    b1 = b_ref[1:2, :]
    b2 = b_ref[2:3, :]

    # g1 = softmax(x @ W0 + b0) within each 4-lane feature group.
    h = _dot(x, w0) + b0
    # Stabiliser: subtract the per-group mean (uniform within a group, so the
    # softmax value is mathematically unchanged).  Safe unless the within-group
    # spread of h exceeds ~115, impossible here since |W0|,|b0| <= 0.5.
    c = _dot(h, ones_bd) * 0.25
    p = jnp.exp(h - c)
    denom = _dot(p, ones_bd)             # per-group sum, broadcast to the group
    g1 = p / denom                       # exact divide (no approx reciprocal)

    # Sequential affine chain (same rounding order as the reference).
    g2 = _dot(g1, w0) + b0
    g3 = _dot(g2, w1_ref[...]) + b1
    g4 = _dot(g3, w2_ref[...]) + b2

    # ELU.  TODO(synk): jnp.expm1 would be marginally more accurate near 0;
    # exp(x)-1 stays within the guaranteed Mosaic elementwise set.
    neg = jnp.exp(jnp.minimum(g4, 0.0)) - 1.0
    o_ref[...] = jnp.where(g4 > 0.0, g4, neg)   # single coalesced store


def model_forward(x, params):
    """x: (B, 4) float32.  params: dict name -> (w, b), w stored (F_in, F_out)."""
    w0, b0 = params["linear"]
    w1, b1 = params["linear1"]
    w2, b2 = params["linear2"]

    B = x.shape[0]

    # ---- tiling: (B, 4) -> (R, 128) slabs; no transpose (free row-major view).
    r_needed = pl.cdiv(B, GROUPS)                  # 128-lane rows of real data
    nb = max(1, pl.cdiv(r_needed, MAX_TILE_ROWS))
    if r_needed >= 16:
        nb = max(nb, 2)                            # >=2 grid steps for v7x's 2 TCs
    r_tile = _round_up(pl.cdiv(r_needed, nb), 8)   # (8,128)-aligned block rows
    r_total = nb * r_tile
    b_padded = r_total * GROUPS

    x_pad = jnp.pad(x, ((0, b_padded - B), (0, 0)))   # finite (zero) pad lanes
    x_slab = x_pad.reshape(r_total, LANES)            # free reshape, no relayout

    # ---- 128x128 block-diagonal operators (built once, VMEM-resident).
    eye = jnp.eye(GROUPS, dtype=jnp.float32)
    w0_bd = jnp.kron(eye, w0)
    w1_bd = jnp.kron(eye, w1)
    w2_bd = jnp.kron(eye, w2)
    ones_bd = jnp.kron(eye, jnp.ones((F, F), jnp.float32))
    b_rows = jnp.stack([jnp.tile(b0, GROUPS),
                        jnp.tile(b1, GROUPS),
                        jnp.tile(b2, GROUPS)])        # (3, 128)

    weight_spec = pl.BlockSpec((LANES, LANES), lambda i: (0, 0))  # constant index
    cost = pl.CostEstimate(
        flops=6 * 2 * r_total * LANES * LANES,
        transcendentals=2 * r_total * LANES,
        bytes_accessed=(2 * r_total * LANES * 4
                        + 4 * LANES * LANES * 4 + 3 * LANES * 4),
    )

    out_slab = pl.pallas_call(
        _fused_mlp_kernel,
        out_shape=jax.ShapeDtypeStruct((r_total, LANES), jnp.float32),
        grid=(nb,),
        in_specs=[
            pl.BlockSpec((r_tile, LANES), lambda i: (i, 0)),   # activations
            weight_spec, weight_spec, weight_spec, weight_spec,
            pl.BlockSpec((3, LANES), lambda i: (0, 0)),        # bias rows
        ],
        out_specs=pl.BlockSpec((r_tile, LANES), lambda i: (i, 0)),
        compiler_params=pltpu.CompilerParams(
            dimension_semantics=("parallel",),       # shards blocks across TCs
            vmem_limit_bytes=32 * 1024 * 1024),      # fits v5e/v6e/v7x comfortably
        cost_estimate=cost,
    )(x_slab, w0_bd, w1_bd, w2_bd, ones_bd, b_rows)

    return out_slab.reshape(b_padded, F)[:B]         # free reshape + pad slice


def init_params(key):
    """Deterministic Linear(4,4) params, PyTorch-style U(-1/sqrt(in), 1/sqrt(in))."""
    bound = 1.0 / (F ** 0.5)
    params = {}
    for name in ("linear", "linear1", "linear2"):
        key, kw, kb = jax.random.split(key, 3)
        w = jax.random.uniform(kw, (F, F), jnp.float32, -bound, bound)  # (F_in, F_out)
        b = jax.random.uniform(kb, (F,), jnp.float32, -bound, bound)
        params[name] = (w, b)
    return params


def reference_forward(x, params):
    """Pure-JAX reference matching the (interpreted) PyTorch semantics."""
    hdot = lambda a, b: jnp.dot(a, b, precision=jax.lax.Precision.HIGHEST)
    w0, b0 = params["linear"]
    w1, b1 = params["linear1"]
    w2, b2 = params["linear2"]
    h = hdot(x, w0) + b0
    g1 = jax.nn.softmax(h, axis=-1)
    g2 = hdot(g1, w0) + b0
    g3 = hdot(g2, w1) + b1
    g4 = hdot(g3, w2) + b2
    return jax.nn.elu(g4)


if __name__ == "__main__":
    key = jax.random.PRNGKey(0)
    key, kx1, kx2 = jax.random.split(key, 3)
    params = init_params(key)

    # Small case (single block).
    x_small = jax.random.normal(kx1, (8, F), jnp.float32)
    out_small = jax.block_until_ready(model_forward(x_small, params))
    ref_small = reference_forward(x_small, params)
    assert out_small.shape == (8, F)
    assert jnp.allclose(out_small, ref_small, atol=1e-5, rtol=1e-4), \
        "mismatch vs reference (small batch)"

    # Larger, non-multiple-of-128 case: exercises padding + multi-block grid.
    x_big = jax.random.normal(kx2, (1000, F), jnp.float32)
    out_big = jax.block_until_ready(model_forward(x_big, params))
    ref_big = reference_forward(x_big, params)
    assert out_big.shape == (1000, F)
    assert jnp.allclose(out_big, ref_big, atol=1e-5, rtol=1e-4), \
        "mismatch vs reference (padded / multi-block batch)"

    print("KERNEL_OK")
</pallas_src>

<mosaic_0001>
module attributes {stable_mosaic.version = 11 : i64} {
  func.func @_fused_mlp_kernel(%arg0: i32, %arg1: memref<8x128xf32, #tpu.memory_space<vmem>>, %arg2: memref<128x128xf32, #tpu.memory_space<vmem>>, %arg3: memref<128x128xf32, #tpu.memory_space<vmem>>, %arg4: memref<128x128xf32, #tpu.memory_space<vmem>>, %arg5: memref<128x128xf32, #tpu.memory_space<vmem>>, %arg6: memref<3x128xf32, #tpu.memory_space<vmem>>, %arg7: memref<8x128xf32, #tpu.memory_space<vmem>>) attributes {dimension_semantics = [#tpu.dimension_semantics<parallel>], iteration_bounds = array<i64: 1>, scalar_prefetch = 0 : i64, scratch_operands = 0 : i64, tpu.core_type = #tpu.core_type<tc>, window_params = [{transform_indices = @transform_0, window_bounds = array<i64: 8, 128>}, {pipeline_mode = #tpu.pipeline_mode<synchronous>, transform_indices = @transform_1, window_bounds = array<i64: 128, 128>}, {pipeline_mode = #tpu.pipeline_mode<synchronous>, transform_indices = @transform_2, window_bounds = array<i64: 128, 128>}, {pipeline_mode = #tpu.pipeline_mode<synchronous>, transform_indices = @transform_3, window_bounds = array<i64: 128, 128>}, {pipeline_mode = #tpu.pipeline_mode<synchronous>, transform_indices = @transform_4, window_bounds = array<i64: 128, 128>}, {pipeline_mode = #tpu.pipeline_mode<synchronous>, transform_indices = @transform_5, window_bounds = array<i64: 3, 128>}, {transform_indices = @transform_6, window_bounds = array<i64: 8, 128>}]} {
    %c0 = arith.constant 0 : index
    %c0_0 = arith.constant 0 : index
    %0 = vector.load %arg1[%c0, %c0_0] : memref<8x128xf32, #tpu.memory_space<vmem>>, vector<8x128xf32>
    %c0_1 = arith.constant 0 : index
    %c0_2 = arith.constant 0 : index
    %1 = vector.load %arg2[%c0_1, %c0_2] : memref<128x128xf32, #tpu.memory_space<vmem>>, vector<128x128xf32>
    %c0_3 = arith.constant 0 : index
    %c0_4 = arith.constant 0 : index
    %2 = vector.load %arg5[%c0_3, %c0_4] : memref<128x128xf32, #tpu.memory_space<vmem>>, vector<128x128xf32>
    %c0_5 = arith.constant 0 : index
    %c0_6 = arith.constant 0 : index
    %3 = vector.load %arg6[%c0_5, %c0_6] : memref<3x128xf32, #tpu.memory_space<vmem>>, vector<1x128xf32>
    %c1 = arith.constant 1 : index
    %c0_7 = arith.constant 0 : index
    %4 = vector.load %arg6[%c1, %c0_7] : memref<3x128xf32, #tpu.memory_space<vmem>>, vector<1x128xf32>
    %c2 = arith.constant 2 : index
    %c0_8 = arith.constant 0 : index
    %5 = vector.load %arg6[%c2, %c0_8] : memref<3x128xf32, #tpu.memory_space<vmem>>, vector<1x128xf32>
    %cst = arith.constant dense<0.000000e+00> : vector<8x128xf32>
    %6 = tpu.matmul %0, %1, %cst {dimension_numbers = #tpu.dot_dimension_numbers<[1], [0], [0], [1], [0, 0, 1, 1], [], []>, precision = #tpu.contract_precision<fp32>} : vector<8x128xf32>, vector<128x128xf32>, vector<8x128xf32> -> vector<8x128xf32>
    %7 = vector.broadcast %3 : vector<1x128xf32> to vector<8x128xf32>
    %8 = arith.addf %6, %7 : vector<8x128xf32>
    %cst_9 = arith.constant dense<0.000000e+00> : vector<8x128xf32>
    %9 = tpu.matmul %8, %2, %cst_9 {dimension_numbers = #tpu.dot_dimension_numbers<[1], [0], [0], [1], [0, 0, 1, 1], [], []>, precision = #tpu.contract_precision<fp32>} : vector<8x128xf32>, vector<128x128xf32>, vector<8x128xf32> -> vector<8x128xf32>
    %cst_10 = arith.constant 2.500000e-01 : f32
    %10 = vector.broadcast %cst_10 : f32 to vector<8x128xf32>
    %11 = arith.mulf %9, %10 : vector<8x128xf32>
    %12 = arith.subf %8, %11 : vector<8x128xf32>
    %13 = math.exp %12 : vector<8x128xf32>
    %cst_11 = arith.constant dense<0.000000e+00> : vector<8x128xf32>
    %14 = tpu.matmul %13, %2, %cst_11 {dimension_numbers = #tpu.dot_dimension_numbers<[1], [0], [0], [1], [0, 0, 1, 1], [], []>, precision = #tpu.contract_precision<fp32>} : vector<8x128xf32>, vector<128x128xf32>, vector<8x128xf32> -> vector<8x128xf32>
    %15 = arith.divf %13, %14 : vector<8x128xf32>
    %cst_12 = arith.constant dense<0.000000e+00> : vector<8x128xf32>
    %16 = tpu.matmul %15, %1, %cst_12 {dimension_numbers = #tpu.dot_dimension_numbers<[1], [0], [0], [1], [0, 0, 1, 1], [], []>, precision = #tpu.contract_precision<fp32>} : vector<8x128xf32>, vector<128x128xf32>, vector<8x128xf32> -> vector<8x128xf32>
    %17 = vector.broadcast %3 : vector<1x128xf32> to vector<8x128xf32>
    %18 = arith.addf %16, %17 : vector<8x128xf32>
    %c0_13 = arith.constant 0 : index
    %c0_14 = arith.constant 0 : index
    %19 = vector.load %arg3[%c0_13, %c0_14] : memref<128x128xf32, #tpu.memory_space<vmem>>, vector<128x128xf32>
    %cst_15 = arith.constant dense<0.000000e+00> : vector<8x128xf32>
    %20 = tpu.matmul %18, %19, %cst_15 {dimension_numbers = #tpu.dot_dimension_numbers<[1], [0], [0], [1], [0, 0, 1, 1], [], []>, precision = #tpu.contract_precision<fp32>} : vector<8x128xf32>, vector<128x128xf32>, vector<8x128xf32> -> vector<8x128xf32>
    %21 = vector.broadcast %4 : vector<1x128xf32> to vector<8x128xf32>
    %22 = arith.addf %20, %21 : vector<8x128xf32>
    %c0_16 = arith.constant 0 : index
    %c0_17 = arith.constant 0 : index
    %23 = vector.load %arg4[%c0_16, %c0_17] : memref<128x128xf32, #tpu.memory_space<vmem>>, vector<128x128xf32>
    %cst_18 = arith.constant dense<0.000000e+00> : vector<8x128xf32>
    %24 = tpu.matmul %22, %23, %cst_18 {dimension_numbers = #tpu.dot_dimension_numbers<[1], [0], [0], [1], [0, 0, 1, 1], [], []>, precision = #tpu.contract_precision<fp32>} : vector<8x128xf32>, vector<128x128xf32>, vector<8x128xf32> -> vector<8x128xf32>
    %25 = vector.broadcast %5 : vector<1x128xf32> to vector<8x128xf32>
    %26 = arith.addf %24, %25 : vector<8x128xf32>
    %cst_19 = arith.constant 0.000000e+00 : f32
    %27 = vector.broadcast %cst_19 : f32 to vector<8x128xf32>
    %28 = arith.minimumf %26, %27 : vector<8x128xf32>
    %29 = math.exp %28 : vector<8x128xf32>
    %cst_20 = arith.constant 1.000000e+00 : f32
    %30 = vector.broadcast %cst_20 : f32 to vector<8x128xf32>
    %31 = arith.subf %29, %30 : vector<8x128xf32>
    %cst_21 = arith.constant 0.000000e+00 : f32
    %32 = vector.broadcast %cst_21 : f32 to vector<8x128xf32>
    %33 = arith.cmpf ogt, %26, %32 : vector<8x128xf32>
    %34 = arith.select %33, %26, %31 : vector<8x128xi1>, vector<8x128xf32>
    %c0_22 = arith.constant 0 : index
    %c0_23 = arith.constant 0 : index
    %35 = vector.load %arg7[%c0_22, %c0_23] : memref<8x128xf32, #tpu.memory_space<vmem>>, vector<8x128xf32>
    tpu.vector_store %arg7[%c0_22, %c0_23], %34 {strides = array<i32>} : memref<8x128xf32, #tpu.memory_space<vmem>>, vector<8x128xf32>,
    return
  }
  func.func @transform_0(%arg0: i32) -> (i32, i32) {
    %c0_i32 = arith.constant 0 : i32
    %c0_i32_0 = arith.constant 0 : i32
    return %arg0, %c0_i32 : i32, i32
  }
  func.func @transform_1(%arg0: i32) -> (i32, i32) {
    %c0_i32 = arith.constant 0 : i32
    %c0_i32_0 = arith.constant 0 : i32
    %c0_i32_1 = arith.constant 0 : i32
    return %c0_i32, %c0_i32_0 : i32, i32
  }
  func.func @transform_2(%arg0: i32) -> (i32, i32) {
    %c0_i32 = arith.constant 0 : i32
    %c0_i32_0 = arith.constant 0 : i32
    %c0_i32_1 = arith.constant 0 : i32
    return %c0_i32, %c0_i32_0 : i32, i32
  }
  func.func @transform_3(%arg0: i32) -> (i32, i32) {
    %c0_i32 = arith.constant 0 : i32
    %c0_i32_0 = arith.constant 0 : i32
    %c0_i32_1 = arith.constant 0 : i32
    return %c0_i32, %c0_i32_0 : i32, i32
  }
  func.func @transform_4(%arg0: i32) -> (i32, i32) {
    %c0_i32 = arith.constant 0 : i32
    %c0_i32_0 = arith.constant 0 : i32
    %c0_i32_1 = arith.constant 0 : i32
    return %c0_i32, %c0_i32_0 : i32, i32
  }
  func.func @transform_5(%arg0: i32) -> (i32, i32) {
    %c0_i32 = arith.constant 0 : i32
    %c0_i32_0 = arith.constant 0 : i32
    %c0_i32_1 = arith.constant 0 : i32
    return %c0_i32, %c0_i32_0 : i32, i32
  }
  func.func @transform_6(%arg0: i32) -> (i32, i32) {
    %c0_i32 = arith.constant 0 : i32
    %c0_i32_0 = arith.constant 0 : i32
    return %arg0, %c0_i32 : i32, i32
  }
}

</mosaic_0001>

<llo_original>
// kernel: tpu_custom_call.1
$region0: #{tpu_custom_call.1}
  #allocation0 [shape = 'u32[]', space=smem, size = 0x4, offset = 0x4, fixed_abs, tag = 'smem constant byte address 0x4 - core index']
  #allocation1 [shape = 'u32[144,128]{1,0:T(1,128)}', space=vmem, size = 0x12000, scoped, tag = 'internal scratch']
  %s0 = inlined_call_operand.hbm [shape: f32[8,128], index: 0, kind: input, shape index: {}]
  %s1 = inlined_call_operand.hbm [shape: f32[128,128], index: 1, kind: input, shape index: {}]
  %s2 = inlined_call_operand.hbm [shape: f32[128,128], index: 2, kind: input, shape index: {}]
  %s3 = inlined_call_operand.hbm [shape: f32[128,128], index: 3, kind: input, shape index: {}]
  %s4 = inlined_call_operand.hbm [shape: f32[128,128], index: 4, kind: input, shape index: {}]
  %s5 = inlined_call_operand.vmem [shape: f32[3,128], index: 5, kind: input, shape index: {}]
  %s6 = inlined_call_operand.hbm [shape: f32[8,128], index: 6, kind: output, shape index: {}]
  %s7 = sld [smem:[#allocation0]]
  $region54: #{tpu_custom_call.1} parent=0
    _
  %s9 = ssub.s32 1, %s7
  %s10 = scalar_select 0, %s9, %s7
  $region1: #{tpu_custom_call.1} parent=0
    #allocation2 [shape = 'u8[4096]{0}', space=vmem, size = 0x1000, scoped, tag = 'input window, operand 0, single buffered']
    #allocation3 [shape = 's32[1]{0}', space=sflag, size = 0x4, scoped, tag = 'scoped memory for tpu_custom_call.1']
    #allocation4 [shape = 's32[1]{0}', space=sflag, size = 0x4, scoped, tag = 'scoped memory for tpu_custom_call.1']
    #allocation5 [shape = 'u8[65536]{0}', space=vmem, size = 0x10000, scoped, tag = 'input window, operand 1, single buffered']
    #allocation6 [shape = 's32[1]{0}', space=sflag, size = 0x4, scoped, tag = 'scoped memory for tpu_custom_call.1']
    #allocation7 [shape = 'u8[65536]{0}', space=vmem, size = 0x10000, scoped, tag = 'input window, operand 2, single buffered']
    #allocation8 [shape = 'u8[65536]{0}', space=vmem, size = 0x10000, scoped, tag = 'input window, operand 3, single buffered']
    #allocation9 [shape = 's32[1]{0}', space=sflag, size = 0x4, scoped, tag = 'scoped memory for tpu_custom_call.1']
    #allocation10 [shape = 'u8[65536]{0}', space=vmem, size = 0x10000, scoped, tag = 'input window, operand 4, single buffered']
    #allocation11 [shape = 'u8[4096]{0}', space=vmem, size = 0x1000, scoped, tag = 'output window, operand 0, single buffered']
    %11 = vsyncpa [#allocation3], 0
    %12 = vsyncpa [#allocation6], 0
    %13 = vsyncpa [#allocation9], 0
    %14 = vsyncpa [#allocation4], 0
    // Predicated region
    $region2: #{tpu_custom_call.1} parent=1 // pred_check
      _
    $region3: #{tpu_custom_call.1} parent=1 // pred_check_branch
      %16 = sbr.rel (0) target = $region5
    $region4: #{tpu_custom_call.1} parent=1 // pred_region
      %s18 = ssub.s32 128, 128
      %19 = vsyncadd [#allocation3], %s18
      %s21 = sshll.u32 [#allocation2], 4
      %s22 = int_to_ptr.vmem [resolvable:$true] %s21
      %24 = dma.hbm_to_vmem [thread:$0]  %s0, 128, %s22, [#allocation3]
    $region5: #{tpu_custom_call.1} parent=1 // pred_fallthru
      _
    // Predicated region
    $region6: #{tpu_custom_call.1} parent=1 // pred_check
      _
    $region7: #{tpu_custom_call.1} parent=1 // pred_check_branch
      %26 = sbr.rel (0) target = $region9
    $region8: #{tpu_custom_call.1} parent=1 // pred_region
      %s28 = ssub.s32 2048, 2048
      %29 = vsyncadd [#allocation6], %s28
      %s30 = sshll.u32 [#allocation5], 4
      %s31 = int_to_ptr.vmem [resolvable:$true] %s30
      %36 = dma.hbm_to_vmem [thread:$0]  %s1, 2048, %s31, [#allocation6], 128, 128, 8
    $region9: #{tpu_custom_call.1} parent=1 // pred_fallthru
      _
    // Predicated region
    $region10: #{tpu_custom_call.1} parent=1 // pred_check
      _
    $region11: #{tpu_custom_call.1} parent=1 // pred_check_branch
      %38 = sbr.rel (0) target = $region13
    $region12: #{tpu_custom_call.1} parent=1 // pred_region
      %s40 = ssub.s32 2048, 2048
      %41 = vsyncadd [#allocation6], %s40
      %s42 = sshll.u32 [#allocation7], 4
      %s43 = int_to_ptr.vmem [resolvable:$true] %s42
      %48 = dma.hbm_to_vmem [thread:$0]  %s2, 2048, %s43, [#allocation6], 128, 128, 8
    $region13: #{tpu_custom_call.1} parent=1 // pred_fallthru
      _
    // Predicated region
    $region14: #{tpu_custom_call.1} parent=1 // pred_check
      _
    $region15: #{tpu_custom_call.1} parent=1 // pred_check_branch
      %50 = sbr.rel (0) target = $region17
    $region16: #{tpu_custom_call.1} parent=1 // pred_region
      %s52 = ssub.s32 2048, 2048
      %53 = vsyncadd [#allocation9], %s52
      %s54 = sshll.u32 [#allocation8], 4
      %s55 = int_to_ptr.vmem [resolvable:$true] %s54
      %60 = dma.hbm_to_vmem [thread:$0]  %s3, 2048, %s55, [#allocation9], 128, 128, 8
    $region17: #{tpu_custom_call.1} parent=1 // pred_fallthru
      _
    // Predicated region
    $region18: #{tpu_custom_call.1} parent=1 // pred_check
      _
    $region19: #{tpu_custom_call.1} parent=1 // pred_check_branch
      %62 = sbr.rel (0) target = $region21
    $region20: #{tpu_custom_call.1} parent=1 // pred_region
      %s64 = ssub.s32 2048, 2048
      %65 = vsyncadd [#allocation9], %s64
      %s66 = sshll.u32 [#allocation10], 4
      %s67 = int_to_ptr.vmem [resolvable:$true] %s66
      %72 = dma.hbm_to_vmem [thread:$0]  %s4, 2048, %s67, [#allocation9], 128, 128, 8
    $region21: #{tpu_custom_call.1} parent=1 // pred_fallthru
      _
    // Predicated region
    $region22: #{tpu_custom_call.1} parent=1 // pred_check
      _
    $region23: #{tpu_custom_call.1} parent=1 // pred_check_branch
      %74 = sbr.rel (0) target = $region25
    $region24: #{tpu_custom_call.1} parent=1 // pred_region
      _
    $region25: #{tpu_custom_call.1} parent=1 // pred_fallthru
      _
    // Predicated region
    $region26: #{tpu_custom_call.1} parent=1 // pred_check
      _
    $region27: #{tpu_custom_call.1} parent=1 // pred_check_branch
      %76 = sbr.rel (0) target = $region29
    $region28: #{tpu_custom_call.1} parent=1 // pred_region
      %77 = dma.done [#allocation3], 128
    $region29: #{tpu_custom_call.1} parent=1 // pred_fallthru
      _
    // Predicated region
    $region30: #{tpu_custom_call.1} parent=1 // pred_check
      _
    $region31: #{tpu_custom_call.1} parent=1 // pred_check_branch
      %79 = sbr.rel (0) target = $region33
    $region32: #{tpu_custom_call.1} parent=1 // pred_region
      %80 = dma.done [#allocation6], 2048
    $region33: #{tpu_custom_call.1} parent=1 // pred_fallthru
      _
    // Predicated region
    $region34: #{tpu_custom_call.1} parent=1 // pred_check
      _
    $region35: #{tpu_custom_call.1} parent=1 // pred_check_branch
      %82 = sbr.rel (0) target = $region37
    $region36: #{tpu_custom_call.1} parent=1 // pred_region
      %83 = dma.done [#allocation6], 2048
    $region37: #{tpu_custom_call.1} parent=1 // pred_fallthru
      _
    // Predicated region
    $region38: #{tpu_custom_call.1} parent=1 // pred_check
      _
    $region39: #{tpu_custom_call.1} parent=1 // pred_check_branch
      %85 = sbr.rel (0) target = $region41
    $region40: #{tpu_custom_call.1} parent=1 // pred_region
      %86 = dma.done [#allocation9], 2048
    $region41: #{tpu_custom_call.1} parent=1 // pred_fallthru
      _
    // Predicated region
    $region42: #{tpu_custom_call.1} parent=1 // pred_check
      _
    $region43: #{tpu_custom_call.1} parent=1 // pred_check_branch
      %88 = sbr.rel (0) target = $region45
    $region44: #{tpu_custom_call.1} parent=1 // pred_region
      %89 = dma.done [#allocation9], 2048
    $region45: #{tpu_custom_call.1} parent=1 // pred_fallthru
      _
    %v90 = vld [vmem:[#allocation2] sm:$0xff]
    %v91 = vld [vmem:[#allocation5] sm:$0xff]
    %v92 = vld [vmem:[#allocation5 + $0x8] sm:$0xff]
    %v93 = vld [vmem:[#allocation5 + $0x10] sm:$0xff]
    %v94 = vld [vmem:[#allocation5 + $0x18] sm:$0xff]
    %v95 = vld [vmem:[#allocation5 + $0x20] sm:$0xff]
    %v96 = vld [vmem:[#allocation5 + $0x28] sm:$0xff]
    %v97 = vld [vmem:[#allocation5 + $0x30] sm:$0xff]
    %v98 = vld [vmem:[#allocation5 + $0x38] sm:$0xff]
    %v99 = vld [vmem:[#allocation5 + $0x40] sm:$0xff]
    %v100 = vld [vmem:[#allocation5 + $0x48] sm:$0xff]
    %v101 = vld [vmem:[#allocation5 + $0x50] sm:$0xff]
    %v102 = vld [vmem:[#allocation5 + $0x58] sm:$0xff]
    %v103 = vld [vmem:[#allocation5 + $0x60] sm:$0xff]
    %v104 = vld [vmem:[#allocation5 + $0x68] sm:$0xff]
    %v105 = vld [vmem:[#allocation5 + $0x70] sm:$0xff]
    %v106 = vld [vmem:[#allocation5 + $0x78] sm:$0xff]
    %v107 = vld [vmem:[#allocation10] sm:$0xff]
    %v108 = vld [vmem:[#allocation10 + $0x8] sm:$0xff]
    %v109 = vld [vmem:[#allocation10 + $0x10] sm:$0xff]
    %v110 = vld [vmem:[#allocation10 + $0x18] sm:$0xff]
    %v111 = vld [vmem:[#allocation10 + $0x20] sm:$0xff]
    %v112 = vld [vmem:[#allocation10 + $0x28] sm:$0xff]
    %v113 = vld [vmem:[#allocation10 + $0x30] sm:$0xff]
    %v114 = vld [vmem:[#allocation10 + $0x38] sm:$0xff]
    %v115 = vld [vmem:[#allocation10 + $0x40] sm:$0xff]
    %v116 = vld [vmem:[#allocation10 + $0x48] sm:$0xff]
    %v117 = vld [vmem:[#allocation10 + $0x50] sm:$0xff]
    %v118 = vld [vmem:[#allocation10 + $0x58] sm:$0xff]
    %v119 = vld [vmem:[#allocation10 + $0x60] sm:$0xff]
    %v120 = vld [vmem:[#allocation10 + $0x68] sm:$0xff]
    %v121 = vld [vmem:[#allocation10 + $0x70] sm:$0xff]
    %v122 = vld [vmem:[#allocation10 + $0x78] sm:$0xff]
    %v123 = vld [vmem:[%s5] sm:$0x1]
    %v124 = vld [vmem:[%s5 + $0x1] sm:$0x1]
    %v125 = vld [vmem:[%s5 + $0x2] sm:$0x1]
    %v126 = vlaneseq
    %v127 = vshrl.u32 %v126, 7
    %v128 = vsub.s32 0, %v127
    %v129 = vrot.slane %v123, %v128
    %130 = vmatprep.subr.mxu0 0.0
    %v131 = vand.u32 %v106, 4294901760
    %132 = vmatpush1.msra.mxu0 %v131
    %133 = vmatprep.subr.mxu0 0.0
    %v134 = vand.u32 %v105, 4294901760
    %135 = vmatpush1.msra.mxu0 %v134
    %136 = vmatprep.subr.mxu0 0.0
    %v137 = vand.u32 %v104, 4294901760
    %138 = vmatpush1.msra.mxu0 %v137
    %139 = vmatprep.subr.mxu0 0.0
    %v140 = vand.u32 %v103, 4294901760
    %141 = vmatpush1.msra.mxu0 %v140
    %142 = vmatprep.subr.mxu0 0.0
    %v143 = vand.u32 %v102, 4294901760
    %144 = vmatpush1.msra.mxu0 %v143
    %145 = vmatprep.subr.mxu0 0.0
    %v146 = vand.u32 %v101, 4294901760
    %147 = vmatpush1.msra.mxu0 %v146
    %148 = vmatprep.subr.mxu0 0.0
    %v149 = vand.u32 %v100, 4294901760
    %150 = vmatpush1.msra.mxu0 %v149
    %151 = vmatprep.subr.mxu0 0.0
    %v152 = vand.u32 %v99, 4294901760
    %153 = vmatpush1.msra.mxu0 %v152
    %154 = vmatprep.subr.mxu0 0.0
    %v155 = vand.u32 %v98, 4294901760
    %156 = vmatpush1.msra.mxu0 %v155
    %157 = vmatprep.subr.mxu0 0.0
    %v158 = vand.u32 %v97, 4294901760
    %159 = vmatpush1.msra.mxu0 %v158
    %160 = vmatprep.subr.mxu0 0.0
    %v161 = vand.u32 %v96, 4294901760
    %162 = vmatpush1.msra.mxu0 %v161
    %163 = vmatprep.subr.mxu0 0.0
    %v164 = vand.u32 %v95, 4294901760
    %165 = vmatpush1.msra.mxu0 %v164
    %166 = vmatprep.subr.mxu0 0.0
    %v167 = vand.u32 %v94, 4294901760
    %168 = vmatpush1.msra.mxu0 %v167
    %169 = vmatprep.subr.mxu0 0.0
    %v170 = vand.u32 %v93, 4294901760
    %171 = vmatpush1.msra.mxu0 %v170
    %172 = vmatprep.subr.mxu0 0.0
    %v173 = vand.u32 %v92, 4294901760
    %174 = vmatpush1.msra.mxu0 %v173
    %175 = vmatprep.subr.mxu0 0.0
    %v176 = vand.u32 %v91, 4294901760
    %177 = vmatpush1.msra.mxu0 %v176
    %178 = vmatprep.subr.mxu0 0.0
    %179 = vmatpush2.msra.mxu0 0.0
    %180 = vmatprep.subr.mxu0 0.0
    %181 = vmatpush2.msra.mxu0 0.0
    %182 = vmatprep.subr.mxu0 0.0
    %183 = vmatpush2.msra.mxu0 0.0
    %184 = vmatprep.subr.mxu0 0.0
    %185 = vmatpush2.msra.mxu0 0.0
    %186 = vmatprep.subr.mxu0 0.0
    %187 = vmatpush2.msra.mxu0 0.0
    %188 = vmatprep.subr.mxu0 0.0
    %189 = vmatpush2.msra.mxu0 0.0
    %190 = vmatprep.subr.mxu0 0.0
    %191 = vmatpush2.msra.mxu0 0.0
    %192 = vmatprep.subr.mxu0 0.0
    %193 = vmatpush2.msra.mxu0 0.0
    %194 = vmatprep.subr.mxu0 0.0
    %195 = vmatpush2.msra.mxu0 0.0
    %196 = vmatprep.subr.mxu0 0.0
    %197 = vmatpush2.msra.mxu0 0.0
    %198 = vmatprep.subr.mxu0 0.0
    %199 = vmatpush2.msra.mxu0 0.0
    %200 = vmatprep.subr.mxu0 0.0
    %201 = vmatpush2.msra.mxu0 0.0
    %202 = vmatprep.subr.mxu0 0.0
    %203 = vmatpush2.msra.mxu0 0.0
    %204 = vmatprep.subr.mxu0 0.0
    %205 = vmatpush2.msra.mxu0 0.0
    %206 = vmatprep.subr.mxu0 0.0
    %207 = vmatpush2.msra.mxu0 0.0
    %208 = vmatprep.subr.mxu0 0.0
    %209 = vmatpush2.msra.mxu0 0.0
    %210 = vmatprep.mubr.f32.mxu0 0.0
    %v211 = vand.u32 %v90, 4294901760
    %v212 = vsub.f32 %v90, %v211
    %v213 = vand.u32 %v212, 4294901760
    %v214 = vsub.f32 %v212, %v213
    %v215 = vand.u32 %v214, 4294901760
    %216 = vmatmul.mubr.f32.gmra.mxu0 %v215
    %v217 = vpop.f32.mrf.mxu0
    %v218 = vadd.f32 %v129, %v217
    %v219 = vpop.f32.mrf.mxu0
    %220 = vdwg.mxu0
    %221 = vmatprep.subr.mxu0 0.0
    %v222 = vand.u32 %v106, 4294901760
    %v223 = vsub.f32 %v106, %v222
    %v224 = vand.u32 %v223, 4294901760
    %v225 = vsub.f32 %v223, %v224
    %v226 = vand.u32 %v225, 4294901760
    %227 = vmatpush1.msra.mxu0 %v226
    %228 = vmatprep.subr.mxu0 0.0
    %v229 = vand.u32 %v105, 4294901760
    %v230 = vsub.f32 %v105, %v229
    %v231 = vand.u32 %v230, 4294901760
    %v232 = vsub.f32 %v230, %v231
    %v233 = vand.u32 %v232, 4294901760
    %234 = vmatpush1.msra.mxu0 %v233
    %235 = vmatprep.subr.mxu0 0.0
    %v236 = vand.u32 %v104, 4294901760
    %v237 = vsub.f32 %v104, %v236
    %v238 = vand.u32 %v237, 4294901760
    %v239 = vsub.f32 %v237, %v238
    %v240 = vand.u32 %v239, 4294901760
    %241 = vmatpush1.msra.mxu0 %v240
    %242 = vmatprep.subr.mxu0 0.0
    %v243 = vand.u32 %v103, 4294901760
    %v244 = vsub.f32 %v103, %v243
    %v245 = vand.u32 %v244, 4294901760
    %v246 = vsub.f32 %v244, %v245
    %v247 = vand.u32 %v246, 4294901760
    %248 = vmatpush1.msra.mxu0 %v247
    %249 = vmatprep.subr.mxu0 0.0
    %v250 = vand.u32 %v102, 4294901760
    %v251 = vsub.f32 %v102, %v250
    %v252 = vand.u32 %v251, 4294901760
    %v253 = vsub.f32 %v251, %v252
    %v254 = vand.u32 %v253, 4294901760
    %255 = vmatpush1.msra.mxu0 %v254
    %256 = vmatprep.subr.mxu0 0.0
    %v257 = vand.u32 %v101, 4294901760
    %v258 = vsub.f32 %v101, %v257
    %v259 = vand.u32 %v258, 4294901760
    %v260 = vsub.f32 %v258, %v259
    %v261 = vand.u32 %v260, 4294901760
    %262 = vmatpush1.msra.mxu0 %v261
    %263 = vmatprep.subr.mxu0 0.0
    %v264 = vand.u32 %v100, 4294901760
    %v265 = vsub.f32 %v100, %v264
    %v266 = vand.u32 %v265, 4294901760
    %v267 = vsub.f32 %v265, %v266
    %v268 = vand.u32 %v267, 4294901760
    %269 = vmatpush1.msra.mxu0 %v268
    %270 = vmatprep.subr.mxu0 0.0
    %v271 = vand.u32 %v99, 4294901760
    %v272 = vsub.f32 %v99, %v271
    %v273 = vand.u32 %v272, 4294901760
    %v274 = vsub.f32 %v272, %v273
    %v275 = vand.u32 %v274, 4294901760
    %276 = vmatpush1.msra.mxu0 %v275
    %277 = vmatprep.subr.mxu0 0.0
    %v278 = vand.u32 %v98, 4294901760
    %v279 = vsub.f32 %v98, %v278
    %v280 = vand.u32 %v279, 4294901760
    %v281 = vsub.f32 %v279, %v280
    %v282 = vand.u32 %v281, 4294901760
    %283 = vmatpush1.msra.mxu0 %v282
    %284 = vmatprep.subr.mxu0 0.0
    %v285 = vand.u32 %v97, 4294901760
    %v286 = vsub.f32 %v97, %v285
    %v287 = vand.u32 %v286, 4294901760
    %v288 = vsub.f32 %v286, %v287
    %v289 = vand.u32 %v288, 4294901760
    %290 = vmatpush1.msra.mxu0 %v289
    %291 = vmatprep.subr.mxu0 0.0
    %v292 = vand.u32 %v96, 4294901760
    %v293 = vsub.f32 %v96, %v292
    %v294 = vand.u32 %v293, 4294901760
    %v295 = vsub.f32 %v293, %v294
    %v296 = vand.u32 %v295, 4294901760
    %297 = vmatpush1.msra.mxu0 %v296
    %298 = vmatprep.subr.mxu0 0.0
    %v299 = vand.u32 %v95, 4294901760
    %v300 = vsub.f32 %v95, %v299
    %v301 = vand.u32 %v300, 4294901760
    %v302 = vsub.f32 %v300, %v301
    %v303 = vand.u32 %v302, 4294901760
    %304 = vmatpush1.msra.mxu0 %v303
    %305 = vmatprep.subr.mxu0 0.0
    %v306 = vand.u32 %v94, 4294901760
    %v307 = vsub.f32 %v94, %v306
    %v308 = vand.u32 %v307, 4294901760
    %v309 = vsub.f32 %v307, %v308
    %v310 = vand.u32 %v309, 4294901760
    %311 = vmatpush1.msra.mxu0 %v310
    %312 = vmatprep.subr.mxu0 0.0
    %v313 = vand.u32 %v93, 4294901760
    %v314 = vsub.f32 %v93, %v313
    %v315 = vand.u32 %v314, 4294901760
    %v316 = vsub.f32 %v314, %v315
    %v317 = vand.u32 %v316, 4294901760
    %318 = vmatpush1.msra.mxu0 %v317
    %319 = vmatprep.subr.mxu0 0.0
    %v320 = vand.u32 %v92, 4294901760
    %v321 = vsub.f32 %v92, %v320
    %v322 = vand.u32 %v321, 4294901760
    %v323 = vsub.f32 %v321, %v322
    %v324 = vand.u32 %v323, 4294901760
    %325 = vmatpush1.msra.mxu0 %v324
    %326 = vmatprep.subr.mxu0 0.0
    %v327 = vand.u32 %v91, 4294901760
    %v328 = vsub.f32 %v91, %v327
    %v329 = vand.u32 %v328, 4294901760
    %v330 = vsub.f32 %v328, %v329
    %v331 = vand.u32 %v330, 4294901760
    %332 = vmatpush1.msra.mxu0 %v331
    %333 = vmatprep.subr.mxu0 0.0
    %334 = vmatpush2.msra.mxu0 0.0
    %335 = vmatprep.subr.mxu0 0.0
    %336 = vmatpush2.msra.mxu0 0.0
    %337 = vmatprep.subr.mxu0 0.0
    %338 = vmatpush2.msra.mxu0 0.0
    %339 = vmatprep.subr.mxu0 0.0
    %340 = vmatpush2.msra.mxu0 0.0
    %341 = vmatprep.subr.mxu0 0.0
    %342 = vmatpush2.msra.mxu0 0.0
    %343 = vmatprep.subr.mxu0 0.0
    %344 = vmatpush2.msra.mxu0 0.0
    %345 = vmatprep.subr.mxu0 0.0
    %346 = vmatpush2.msra.mxu0 0.0
    %347 = vmatprep.subr.mxu0 0.0
    %348 = vmatpush2.msra.mxu0 0.0
    %349 = vmatprep.subr.mxu0 0.0
    %350 = vmatpush2.msra.mxu0 0.0
    %351 = vmatprep.subr.mxu0 0.0
    %352 = vmatpush2.msra.mxu0 0.0
    %353 = vmatprep.subr.mxu0 0.0
    %354 = vmatpush2.msra.mxu0 0.0
    %355 = vmatprep.subr.mxu0 0.0
    %356 = vmatpush2.msra.mxu0 0.0
    %357 = vmatprep.subr.mxu0 0.0
    %358 = vmatpush2.msra.mxu0 0.0
    %359 = vmatprep.subr.mxu0 0.0
    %360 = vmatpush2.msra.mxu0 0.0
    %361 = vmatprep.subr.mxu0 0.0
    %362 = vmatpush2.msra.mxu0 0.0
    %363 = vmatprep.subr.mxu0 0.0
    %364 = vmatpush2.msra.mxu0 0.0
    %365 = vmatprep.mubr.f32.mxu0 0.0
    %v366 = vand.u32 %v90, 4294901760
    %367 = vmatmul.mubr.f32.gmra.mxu0 %v366
    %v368 = vpop.f32.mrf.mxu0
    %v369 = vadd.f32 %v218, %v368
    %v370 = vpop.f32.mrf.mxu0
    %371 = vdwg.mxu0
    %372 = vmatprep.subr.mxu0 0.0
    %v373 = vand.u32 %v106, 4294901760
    %v374 = vsub.f32 %v106, %v373
    %375 = vmatpush1.msra.mxu0 %v374
    %376 = vmatprep.subr.mxu0 0.0
    %v377 = vand.u32 %v105, 4294901760
    %v378 = vsub.f32 %v105, %v377
    %379 = vmatpush1.msra.mxu0 %v378
    %380 = vmatprep.subr.mxu0 0.0
    %v381 = vand.u32 %v104, 4294901760
    %v382 = vsub.f32 %v104, %v381
    %383 = vmatpush1.msra.mxu0 %v382
    %384 = vmatprep.subr.mxu0 0.0
    %v385 = vand.u32 %v103, 4294901760
    %v386 = vsub.f32 %v103, %v385
    %387 = vmatpush1.msra.mxu0 %v386
    %388 = vmatprep.subr.mxu0 0.0
    %v389 = vand.u32 %v102, 4294901760
    %v390 = vsub.f32 %v102, %v389
    %391 = vmatpush1.msra.mxu0 %v390
    %392 = vmatprep.subr.mxu0 0.0
    %v393 = vand.u32 %v101, 4294901760
    %v394 = vsub.f32 %v101, %v393
    %395 = vmatpush1.msra.mxu0 %v394
    %396 = vmatprep.subr.mxu0 0.0
    %v397 = vand.u32 %v100, 4294901760
    %v398 = vsub.f32 %v100, %v397
    %399 = vmatpush1.msra.mxu0 %v398
    %400 = vmatprep.subr.mxu0 0.0
    %v401 = vand.u32 %v99, 4294901760
    %v402 = vsub.f32 %v99, %v401
    %403 = vmatpush1.msra.mxu0 %v402
    %404 = vmatprep.subr.mxu0 0.0
    %v405 = vand.u32 %v98, 4294901760
    %v406 = vsub.f32 %v98, %v405
    %407 = vmatpush1.msra.mxu0 %v406
    %408 = vmatprep.subr.mxu0 0.0
    %v409 = vand.u32 %v97, 4294901760
    %v410 = vsub.f32 %v97, %v409
    %411 = vmatpush1.msra.mxu0 %v410
    %412 = vmatprep.subr.mxu0 0.0
    %v413 = vand.u32 %v96, 4294901760
    %v414 = vsub.f32 %v96, %v413
    %415 = vmatpush1.msra.mxu0 %v414
    %416 = vmatprep.subr.mxu0 0.0
    %v417 = vand.u32 %v95, 4294901760
    %v418 = vsub.f32 %v95, %v417
    %419 = vmatpush1.msra.mxu0 %v418
    %420 = vmatprep.subr.mxu0 0.0
    %v421 = vand.u32 %v94, 4294901760
    %v422 = vsub.f32 %v94, %v421
    %423 = vmatpush1.msra.mxu0 %v422
    %424 = vmatprep.subr.mxu0 0.0
    %v425 = vand.u32 %v93, 4294901760
    %v426 = vsub.f32 %v93, %v425
    %427 = vmatpush1.msra.mxu0 %v426
    %428 = vmatprep.subr.mxu0 0.0
    %v429 = vand.u32 %v92, 4294901760
    %v430 = vsub.f32 %v92, %v429
    %431 = vmatpush1.msra.mxu0 %v430
    %432 = vmatprep.subr.mxu0 0.0
    %v433 = vand.u32 %v91, 4294901760
    %v434 = vsub.f32 %v91, %v433
    %435 = vmatpush1.msra.mxu0 %v434
    %436 = vmatprep.subr.mxu0 0.0
    %437 = vmatpush2.msra.mxu0 0.0
    %438 = vmatprep.subr.mxu0 0.0
    %439 = vmatpush2.msra.mxu0 0.0
    %440 = vmatprep.subr.mxu0 0.0
    %441 = vmatpush2.msra.mxu0 0.0
    %442 = vmatprep.subr.mxu0 0.0
    %443 = vmatpush2.msra.mxu0 0.0
    %444 = vmatprep.subr.mxu0 0.0
    %445 = vmatpush2.msra.mxu0 0.0
    %446 = vmatprep.subr.mxu0 0.0
    %447 = vmatpush2.msra.mxu0 0.0
    %448 = vmatprep.subr.mxu0 0.0
    %449 = vmatpush2.msra.mxu0 0.0
    %450 = vmatprep.subr.mxu0 0.0
    %451 = vmatpush2.msra.mxu0 0.0
    %452 = vmatprep.subr.mxu0 0.0
    %453 = vmatpush2.msra.mxu0 0.0
    %454 = vmatprep.subr.mxu0 0.0
    %455 = vmatpush2.msra.mxu0 0.0
    %456 = vmatprep.subr.mxu0 0.0
    %457 = vmatpush2.msra.mxu0 0.0
    %458 = vmatprep.subr.mxu0 0.0
    %459 = vmatpush2.msra.mxu0 0.0
    %460 = vmatprep.subr.mxu0 0.0
    %461 = vmatpush2.msra.mxu0 0.0
    %462 = vmatprep.subr.mxu0 0.0
    %463 = vmatpush2.msra.mxu0 0.0
    %464 = vmatprep.subr.mxu0 0.0
    %465 = vmatpush2.msra.mxu0 0.0
    %466 = vmatprep.subr.mxu0 0.0
    %467 = vmatpush2.msra.mxu0 0.0
    %468 = vmatprep.mubr.f32.mxu0 0.0
    %v469 = vand.u32 %v90, 4294901760
    %v470 = vsub.f32 %v90, %v469
    %471 = vmatmul.mubr.f32.gmra.mxu0 %v470
    %v472 = vpop.f32.mrf.mxu0
    %v473 = vadd.f32 %v369, %v472
    %v474 = vpop.f32.mrf.mxu0
    %475 = vdwg.mxu0
    %476 = vmatprep.subr.mxu0 0.0
    %v477 = vand.u32 %v106, 4294901760
    %478 = vmatpush1.msra.mxu0 %v477
    %479 = vmatprep.subr.mxu0 0.0
    %v480 = vand.u32 %v105, 4294901760
    %481 = vmatpush1.msra.mxu0 %v480
    %482 = vmatprep.subr.mxu0 0.0
    %v483 = vand.u32 %v104, 4294901760
    %484 = vmatpush1.msra.mxu0 %v483
    %485 = vmatprep.subr.mxu0 0.0
    %v486 = vand.u32 %v103, 4294901760
    %487 = vmatpush1.msra.mxu0 %v486
    %488 = vmatprep.subr.mxu0 0.0
    %v489 = vand.u32 %v102, 4294901760
    %490 = vmatpush1.msra.mxu0 %v489
    %491 = vmatprep.subr.mxu0 0.0
    %v492 = vand.u32 %v101, 4294901760
    %493 = vmatpush1.msra.mxu0 %v492
    %494 = vmatprep.subr.mxu0 0.0
    %v495 = vand.u32 %v100, 4294901760
    %496 = vmatpush1.msra.mxu0 %v495
    %497 = vmatprep.subr.mxu0 0.0
    %v498 = vand.u32 %v99, 4294901760
    %499 = vmatpush1.msra.mxu0 %v498
    %500 = vmatprep.subr.mxu0 0.0
    %v501 = vand.u32 %v98, 4294901760
    %502 = vmatpush1.msra.mxu0 %v501
    %503 = vmatprep.subr.mxu0 0.0
    %v504 = vand.u32 %v97, 4294901760
    %505 = vmatpush1.msra.mxu0 %v504
    %506 = vmatprep.subr.mxu0 0.0
    %v507 = vand.u32 %v96, 4294901760
    %508 = vmatpush1.msra.mxu0 %v507
    %509 = vmatprep.subr.mxu0 0.0
    %v510 = vand.u32 %v95, 4294901760
    %511 = vmatpush1.msra.mxu0 %v510
    %512 = vmatprep.subr.mxu0 0.0
    %v513 = vand.u32 %v94, 4294901760
    %514 = vmatpush1.msra.mxu0 %v513
    %515 = vmatprep.subr.mxu0 0.0
    %v516 = vand.u32 %v93, 4294901760
    %517 = vmatpush1.msra.mxu0 %v516
    %518 = vmatprep.subr.mxu0 0.0
    %v519 = vand.u32 %v92, 4294901760
    %520 = vmatpush1.msra.mxu0 %v519
    %521 = vmatprep.subr.mxu0 0.0
    %v522 = vand.u32 %v91, 4294901760
    %523 = vmatpush1.msra.mxu0 %v522
    %524 = vmatprep.subr.mxu0 0.0
    %525 = vmatpush2.msra.mxu0 0.0
    %526 = vmatprep.subr.mxu0 0.0
    %527 = vmatpush2.msra.mxu0 0.0
    %528 = vmatprep.subr.mxu0 0.0
    %529 = vmatpush2.msra.mxu0 0.0
    %530 = vmatprep.subr.mxu0 0.0
    %531 = vmatpush2.msra.mxu0 0.0
    %532 = vmatprep.subr.mxu0 0.0
    %533 = vmatpush2.msra.mxu0 0.0
    %534 = vmatprep.subr.mxu0 0.0
    %535 = vmatpush2.msra.mxu0 0.0
    %536 = vmatprep.subr.mxu0 0.0
    %537 = vmatpush2.msra.mxu0 0.0
    %538 = vmatprep.subr.mxu0 0.0
    %539 = vmatpush2.msra.mxu0 0.0
    %540 = vmatprep.subr.mxu0 0.0
    %541 = vmatpush2.msra.mxu0 0.0
    %542 = vmatprep.subr.mxu0 0.0
    %543 = vmatpush2.msra.mxu0 0.0
    %544 = vmatprep.subr.mxu0 0.0
    %545 = vmatpush2.msra.mxu0 0.0
    %546 = vmatprep.subr.mxu0 0.0
    %547 = vmatpush2.msra.mxu0 0.0
    %548 = vmatprep.subr.mxu0 0.0
    %549 = vmatpush2.msra.mxu0 0.0
    %550 = vmatprep.subr.mxu0 0.0
    %551 = vmatpush2.msra.mxu0 0.0
    %552 = vmatprep.subr.mxu0 0.0
    %553 = vmatpush2.msra.mxu0 0.0
    %554 = vmatprep.subr.mxu0 0.0
    %555 = vmatpush2.msra.mxu0 0.0
    %556 = vmatprep.mubr.f32.mxu0 0.0
    %v557 = vand.u32 %v90, 4294901760
    %v558 = vsub.f32 %v90, %v557
    %v559 = vand.u32 %v558, 4294901760
    %560 = vmatmul.mubr.f32.gmra.mxu0 %v559
    %v561 = vpop.f32.mrf.mxu0
    %v562 = vadd.f32 %v473, %v561
    %v563 = vpop.f32.mrf.mxu0
    %564 = vdwg.mxu0
    %565 = vmatprep.subr.mxu0 0.0
    %v566 = vand.u32 %v106, 4294901760
    %v567 = vsub.f32 %v106, %v566
    %v568 = vand.u32 %v567, 4294901760
    %569 = vmatpush1.msra.mxu0 %v568
    %570 = vmatprep.subr.mxu0 0.0
    %v571 = vand.u32 %v105, 4294901760
    %v572 = vsub.f32 %v105, %v571
    %v573 = vand.u32 %v572, 4294901760
    %574 = vmatpush1.msra.mxu0 %v573
    %575 = vmatprep.subr.mxu0 0.0
    %v576 = vand.u32 %v104, 4294901760
    %v577 = vsub.f32 %v104, %v576
    %v578 = vand.u32 %v577, 4294901760
    %579 = vmatpush1.msra.mxu0 %v578
    %580 = vmatprep.subr.mxu0 0.0
    %v581 = vand.u32 %v103, 4294901760
    %v582 = vsub.f32 %v103, %v581
    %v583 = vand.u32 %v582, 4294901760
    %584 = vmatpush1.msra.mxu0 %v583
    %585 = vmatprep.subr.mxu0 0.0
    %v586 = vand.u32 %v102, 4294901760
    %v587 = vsub.f32 %v102, %v586
    %v588 = vand.u32 %v587, 4294901760
    %589 = vmatpush1.msra.mxu0 %v588
    %590 = vmatprep.subr.mxu0 0.0
    %v591 = vand.u32 %v101, 4294901760
    %v592 = vsub.f32 %v101, %v591
    %v593 = vand.u32 %v592, 4294901760
    %594 = vmatpush1.msra.mxu0 %v593
    %595 = vmatprep.subr.mxu0 0.0
    %v596 = vand.u32 %v100, 4294901760
    %v597 = vsub.f32 %v100, %v596
    %v598 = vand.u32 %v597, 4294901760
    %599 = vmatpush1.msra.mxu0 %v598
    %600 = vmatprep.subr.mxu0 0.0
    %v601 = vand.u32 %v99, 4294901760
    %v602 = vsub.f32 %v99, %v601
    %v603 = vand.u32 %v602, 4294901760
    %604 = vmatpush1.msra.mxu0 %v603
    %605 = vmatprep.subr.mxu0 0.0
    %v606 = vand.u32 %v98, 4294901760
    %v607 = vsub.f32 %v98, %v606
    %v608 = vand.u32 %v607, 4294901760
    %609 = vmatpush1.msra.mxu0 %v608
    %610 = vmatprep.subr.mxu0 0.0
    %v611 = vand.u32 %v97, 4294901760
    %v612 = vsub.f32 %v97, %v611
    %v613 = vand.u32 %v612, 4294901760
    %614 = vmatpush1.msra.mxu0 %v613
    %615 = vmatprep.subr.mxu0 0.0
    %v616 = vand.u32 %v96, 4294901760
    %v617 = vsub.f32 %v96, %v616
    %v618 = vand.u32 %v617, 4294901760
    %619 = vmatpush1.msra.mxu0 %v618
    %620 = vmatprep.subr.mxu0 0.0
    %v621 = vand.u32 %v95, 4294901760
    %v622 = vsub.f32 %v95, %v621
    %v623 = vand.u32 %v622, 4294901760
    %624 = vmatpush1.msra.mxu0 %v623
    %625 = vmatprep.subr.mxu0 0.0
    %v626 = vand.u32 %v94, 4294901760
    %v627 = vsub.f32 %v94, %v626
    %v628 = vand.u32 %v627, 4294901760
    %629 = vmatpush1.msra.mxu0 %v628
    %630 = vmatprep.subr.mxu0 0.0
    %v631 = vand.u32 %v93, 4294901760
    %v632 = vsub.f32 %v93, %v631
    %v633 = vand.u32 %v632, 4294901760
    %634 = vmatpush1.msra.mxu0 %v633
    %635 = vmatprep.subr.mxu0 0.0
    %v636 = vand.u32 %v92, 4294901760
    %v637 = vsub.f32 %v92, %v636
    %v638 = vand.u32 %v637, 4294901760
    %639 = vmatpush1.msra.mxu0 %v638
    %640 = vmatprep.subr.mxu0 0.0
    %v641 = vand.u32 %v91, 4294901760
    %v642 = vsub.f32 %v91, %v641
    %v643 = vand.u32 %v642, 4294901760
    %644 = vmatpush1.msra.mxu0 %v643
    %645 = vmatprep.subr.mxu0 0.0
    %646 = vmatpush2.msra.mxu0 0.0
    %647 = vmatprep.subr.mxu0 0.0
    %648 = vmatpush2.msra.mxu0 0.0
    %649 = vmatprep.subr.mxu0 0.0
    %650 = vmatpush2.msra.mxu0 0.0
    %651 = vmatprep.subr.mxu0 0.0
    %652 = vmatpush2.msra.mxu0 0.0
    %653 = vmatprep.subr.mxu0 0.0
    %654 = vmatpush2.msra.mxu0 0.0
    %655 = vmatprep.subr.mxu0 0.0
    %656 = vmatpush2.msra.mxu0 0.0
    %657 = vmatprep.subr.mxu0 0.0
    %658 = vmatpush2.msra.mxu0 0.0
    %659 = vmatprep.subr.mxu0 0.0
    %660 = vmatpush2.msra.mxu0 0.0
    %661 = vmatprep.subr.mxu0 0.0
    %662 = vmatpush2.msra.mxu0 0.0
    %663 = vmatprep.subr.mxu0 0.0
    %664 = vmatpush2.msra.mxu0 0.0
    %665 = vmatprep.subr.mxu0 0.0
    %666 = vmatpush2.msra.mxu0 0.0
    %667 = vmatprep.subr.mxu0 0.0
    %668 = vmatpush2.msra.mxu0 0.0
    %669 = vmatprep.subr.mxu0 0.0
    %670 = vmatpush2.msra.mxu0 0.0
    %671 = vmatprep.subr.mxu0 0.0
    %672 = vmatpush2.msra.mxu0 0.0
    %673 = vmatprep.subr.mxu0 0.0
    %674 = vmatpush2.msra.mxu0 0.0
    %675 = vmatprep.subr.mxu0 0.0
    %676 = vmatpush2.msra.mxu0 0.0
    %677 = vmatprep.mubr.f32.mxu0 0.0
    %v678 = vand.u32 %v90, 4294901760
    %679 = vmatmul.mubr.f32.gmra.mxu0 %v678
    %v680 = vpop.f32.mrf.mxu0
    %v681 = vadd.f32 %v562, %v680
    %v682 = vpop.f32.mrf.mxu0
    %683 = vdwg.mxu0
    %684 = vmatprep.subr.mxu0 0.0
    %v685 = vand.u32 %v106, 4294901760
    %686 = vmatpush1.msra.mxu0 %v685
    %687 = vmatprep.subr.mxu0 0.0
    %v688 = vand.u32 %v105, 4294901760
    %689 = vmatpush1.msra.mxu0 %v688
    %690 = vmatprep.subr.mxu0 0.0
    %v691 = vand.u32 %v104, 4294901760
    %692 = vmatpush1.msra.mxu0 %v691
    %693 = vmatprep.subr.mxu0 0.0
    %v694 = vand.u32 %v103, 4294901760
    %695 = vmatpush1.msra.mxu0 %v694
    %696 = vmatprep.subr.mxu0 0.0
    %v697 = vand.u32 %v102, 4294901760
    %698 = vmatpush1.msra.mxu0 %v697
    %699 = vmatprep.subr.mxu0 0.0
    %v700 = vand.u32 %v101, 4294901760
    %701 = vmatpush1.msra.mxu0 %v700
    %702 = vmatprep.subr.mxu0 0.0
    %v703 = vand.u32 %v100, 4294901760
    %704 = vmatpush1.msra.mxu0 %v703
    %705 = vmatprep.subr.mxu0 0.0
    %v706 = vand.u32 %v99, 4294901760
    %707 = vmatpush1.msra.mxu0 %v706
    %708 = vmatprep.subr.mxu0 0.0
    %v709 = vand.u32 %v98, 4294901760
    %710 = vmatpush1.msra.mxu0 %v709
    %711 = vmatprep.subr.mxu0 0.0
    %v712 = vand.u32 %v97, 4294901760
    %713 = vmatpush1.msra.mxu0 %v712
    %714 = vmatprep.subr.mxu0 0.0
    %v715 = vand.u32 %v96, 4294901760
    %716 = vmatpush1.msra.mxu0 %v715
    %717 = vmatprep.subr.mxu0 0.0
    %v718 = vand.u32 %v95, 4294901760
    %719 = vmatpush1.msra.mxu0 %v718
    %720 = vmatprep.subr.mxu0 0.0
    %v721 = vand.u32 %v94, 4294901760
    %722 = vmatpush1.msra.mxu0 %v721
    %723 = vmatprep.subr.mxu0 0.0
    %v724 = vand.u32 %v93, 4294901760
    %725 = vmatpush1.msra.mxu0 %v724
    %726 = vmatprep.subr.mxu0 0.0
    %v727 = vand.u32 %v92, 4294901760
    %728 = vmatpush1.msra.mxu0 %v727
    %729 = vmatprep.subr.mxu0 0.0
    %v730 = vand.u32 %v91, 4294901760
    %731 = vmatpush1.msra.mxu0 %v730
    %732 = vmatprep.subr.mxu0 0.0
    %733 = vmatpush2.msra.mxu0 0.0
    %734 = vmatprep.subr.mxu0 0.0
    %735 = vmatpush2.msra.mxu0 0.0
    %736 = vmatprep.subr.mxu0 0.0
    %737 = vmatpush2.msra.mxu0 0.0
    %738 = vmatprep.subr.mxu0 0.0
    %739 = vmatpush2.msra.mxu0 0.0
    %740 = vmatprep.subr.mxu0 0.0
    %741 = vmatpush2.msra.mxu0 0.0
    %742 = vmatprep.subr.mxu0 0.0
    %743 = vmatpush2.msra.mxu0 0.0
    %744 = vmatprep.subr.mxu0 0.0
    %745 = vmatpush2.msra.mxu0 0.0
    %746 = vmatprep.subr.mxu0 0.0
    %747 = vmatpush2.msra.mxu0 0.0
    %748 = vmatprep.subr.mxu0 0.0
    %749 = vmatpush2.msra.mxu0 0.0
    %750 = vmatprep.subr.mxu0 0.0
    %751 = vmatpush2.msra.mxu0 0.0
    %752 = vmatprep.subr.mxu0 0.0
    %753 = vmatpush2.msra.mxu0 0.0
    %754 = vmatprep.subr.mxu0 0.0
    %755 = vmatpush2.msra.mxu0 0.0
    %756 = vmatprep.subr.mxu0 0.0
    %757 = vmatpush2.msra.mxu0 0.0
    %758 = vmatprep.subr.mxu0 0.0
    %759 = vmatpush2.msra.mxu0 0.0
    %760 = vmatprep.subr.mxu0 0.0
    %761 = vmatpush2.msra.mxu0 0.0
    %762 = vmatprep.subr.mxu0 0.0
    %763 = vmatpush2.msra.mxu0 0.0
    %764 = vmatprep.mubr.f32.mxu0 0.0
    %v765 = vand.u32 %v90, 4294901760
    %766 = vmatmul.mubr.f32.gmra.mxu0 %v765
    %v767 = vpop.f32.mrf.mxu0
    %v768 = vadd.f32 %v681, %v767
    %v769 = vpop.f32.mrf.mxu0
    %770 = vdwg.mxu0
    %771 = vmatprep.subr.mxu0 0.0
    %v772 = vand.u32 %v122, 4294901760
    %773 = vmatpush1.msra.mxu0 %v772
    %774 = vmatprep.subr.mxu0 0.0
    %v775 = vand.u32 %v121, 4294901760
    %776 = vmatpush1.msra.mxu0 %v775
    %777 = vmatprep.subr.mxu0 0.0
    %v778 = vand.u32 %v120, 4294901760
    %779 = vmatpush1.msra.mxu0 %v778
    %780 = vmatprep.subr.mxu0 0.0
    %v781 = vand.u32 %v119, 4294901760
    %782 = vmatpush1.msra.mxu0 %v781
    %783 = vmatprep.subr.mxu0 0.0
    %v784 = vand.u32 %v118, 4294901760
    %785 = vmatpush1.msra.mxu0 %v784
    %786 = vmatprep.subr.mxu0 0.0
    %v787 = vand.u32 %v117, 4294901760
    %788 = vmatpush1.msra.mxu0 %v787
    %789 = vmatprep.subr.mxu0 0.0
    %v790 = vand.u32 %v116, 4294901760
    %791 = vmatpush1.msra.mxu0 %v790
    %792 = vmatprep.subr.mxu0 0.0
    %v793 = vand.u32 %v115, 4294901760
    %794 = vmatpush1.msra.mxu0 %v793
    %795 = vmatprep.subr.mxu0 0.0
    %v796 = vand.u32 %v114, 4294901760
    %797 = vmatpush1.msra.mxu0 %v796
    %798 = vmatprep.subr.mxu0 0.0
    %v799 = vand.u32 %v113, 4294901760
    %800 = vmatpush1.msra.mxu0 %v799
    %801 = vmatprep.subr.mxu0 0.0
    %v802 = vand.u32 %v112, 4294901760
    %803 = vmatpush1.msra.mxu0 %v802
    %804 = vmatprep.subr.mxu0 0.0
    %v805 = vand.u32 %v111, 4294901760
    %806 = vmatpush1.msra.mxu0 %v805
    %807 = vmatprep.subr.mxu0 0.0
    %v808 = vand.u32 %v110, 4294901760
    %809 = vmatpush1.msra.mxu0 %v808
    %810 = vmatprep.subr.mxu0 0.0
    %v811 = vand.u32 %v109, 4294901760
    %812 = vmatpush1.msra.mxu0 %v811
    %813 = vmatprep.subr.mxu0 0.0
    %v814 = vand.u32 %v108, 4294901760
    %815 = vmatpush1.msra.mxu0 %v814
    %816 = vmatprep.subr.mxu0 0.0
    %v817 = vand.u32 %v107, 4294901760
    %818 = vmatpush1.msra.mxu0 %v817
    %819 = vmatprep.subr.mxu0 0.0
    %820 = vmatpush2.msra.mxu0 0.0
    %821 = vmatprep.subr.mxu0 0.0
    %822 = vmatpush2.msra.mxu0 0.0
    %823 = vmatprep.subr.mxu0 0.0
    %824 = vmatpush2.msra.mxu0 0.0
    %825 = vmatprep.subr.mxu0 0.0
    %826 = vmatpush2.msra.mxu0 0.0
    %827 = vmatprep.subr.mxu0 0.0
    %828 = vmatpush2.msra.mxu0 0.0
    %829 = vmatprep.subr.mxu0 0.0
    %830 = vmatpush2.msra.mxu0 0.0
    %831 = vmatprep.subr.mxu0 0.0
    %832 = vmatpush2.msra.mxu0 0.0
    %833 = vmatprep.subr.mxu0 0.0
    %834 = vmatpush2.msra.mxu0 0.0
    %835 = vmatprep.subr.mxu0 0.0
    %836 = vmatpush2.msra.mxu0 0.0
    %837 = vmatprep.subr.mxu0 0.0
    %838 = vmatpush2.msra.mxu0 0.0
    %839 = vmatprep.subr.mxu0 0.0
    %840 = vmatpush2.msra.mxu0 0.0
    %841 = vmatprep.subr.mxu0 0.0
    %842 = vmatpush2.msra.mxu0 0.0
    %843 = vmatprep.subr.mxu0 0.0
    %844 = vmatpush2.msra.mxu0 0.0
    %845 = vmatprep.subr.mxu0 0.0
    %846 = vmatpush2.msra.mxu0 0.0
    %847 = vmatprep.subr.mxu0 0.0
    %848 = vmatpush2.msra.mxu0 0.0
    %849 = vmatprep.subr.mxu0 0.0
    %850 = vmatpush2.msra.mxu0 0.0
    %851 = vmatprep.mubr.f32.mxu0 0.0
    %v852 = vand.u32 %v768, 4294901760
    %v853 = vsub.f32 %v768, %v852
    %v854 = vand.u32 %v853, 4294901760
    %v855 = vsub.f32 %v853, %v854
    %v856 = vand.u32 %v855, 4294901760
    %857 = vmatmul.mubr.f32.gmra.mxu0 %v856
    %v858 = vpop.f32.mrf.mxu0
    %v859 = vadd.f32 0.0, %v858
    %v860 = vpop.f32.mrf.mxu0
    %861 = vdwg.mxu0
    %862 = vmatprep.subr.mxu0 0.0
    %v863 = vand.u32 %v122, 4294901760
    %v864 = vsub.f32 %v122, %v863
    %v865 = vand.u32 %v864, 4294901760
    %v866 = vsub.f32 %v864, %v865
    %v867 = vand.u32 %v866, 4294901760
    %868 = vmatpush1.msra.mxu0 %v867
    %869 = vmatprep.subr.mxu0 0.0
    %v870 = vand.u32 %v121, 4294901760
    %v871 = vsub.f32 %v121, %v870
    %v872 = vand.u32 %v871, 4294901760
    %v873 = vsub.f32 %v871, %v872
    %v874 = vand.u32 %v873, 4294901760
    %875 = vmatpush1.msra.mxu0 %v874
    %876 = vmatprep.subr.mxu0 0.0
    %v877 = vand.u32 %v120, 4294901760
    %v878 = vsub.f32 %v120, %v877
    %v879 = vand.u32 %v878, 4294901760
    %v880 = vsub.f32 %v878, %v879
    %v881 = vand.u32 %v880, 4294901760
    %882 = vmatpush1.msra.mxu0 %v881
    %883 = vmatprep.subr.mxu0 0.0
    %v884 = vand.u32 %v119, 4294901760
    %v885 = vsub.f32 %v119, %v884
    %v886 = vand.u32 %v885, 4294901760
    %v887 = vsub.f32 %v885, %v886
    %v888 = vand.u32 %v887, 4294901760
    %889 = vmatpush1.msra.mxu0 %v888
    %890 = vmatprep.subr.mxu0 0.0
    %v891 = vand.u32 %v118, 4294901760
    %v892 = vsub.f32 %v118, %v891
    %v893 = vand.u32 %v892, 4294901760
    %v894 = vsub.f32 %v892, %v893
    %v895 = vand.u32 %v894, 4294901760
    %896 = vmatpush1.msra.mxu0 %v895
    %897 = vmatprep.subr.mxu0 0.0
    %v898 = vand.u32 %v117, 4294901760
    %v899 = vsub.f32 %v117, %v898
    %v900 = vand.u32 %v899, 4294901760
    %v901 = vsub.f32 %v899, %v900
    %v902 = vand.u32 %v901, 4294901760
    %903 = vmatpush1.msra.mxu0 %v902
    %904 = vmatprep.subr.mxu0 0.0
    %v905 = vand.u32 %v116, 4294901760
    %v906 = vsub.f32 %v116, %v905
    %v907 = vand.u32 %v906, 4294901760
    %v908 = vsub.f32 %v906, %v907
    %v909 = vand.u32 %v908, 4294901760
    %910 = vmatpush1.msra.mxu0 %v909
    %911 = vmatprep.subr.mxu0 0.0
    %v912 = vand.u32 %v115, 4294901760
    %v913 = vsub.f32 %v115, %v912
    %v914 = vand.u32 %v913, 4294901760
    %v915 = vsub.f32 %v913, %v914
    %v916 = vand.u32 %v915, 4294901760
    %917 = vmatpush1.msra.mxu0 %v916
    %918 = vmatprep.subr.mxu0 0.0
    %v919 = vand.u32 %v114, 4294901760
    %v920 = vsub.f32 %v114, %v919
    %v921 = vand.u32 %v920, 4294901760
    %v922 = vsub.f32 %v920, %v921
    %v923 = vand.u32 %v922, 4294901760
    %924 = vmatpush1.msra.mxu0 %v923
    %925 = vmatprep.subr.mxu0 0.0
    %v926 = vand.u32 %v113, 4294901760
    %v927 = vsub.f32 %v113, %v926
    %v928 = vand.u32 %v927, 4294901760
    %v929 = vsub.f32 %v927, %v928
    %v930 = vand.u32 %v929, 4294901760
    %931 = vmatpush1.msra.mxu0 %v930
    %932 = vmatprep.subr.mxu0 0.0
    %v933 = vand.u32 %v112, 4294901760
    %v934 = vsub.f32 %v112, %v933
    %v935 = vand.u32 %v934, 4294901760
    %v936 = vsub.f32 %v934, %v935
    %v937 = vand.u32 %v936, 4294901760
    %938 = vmatpush1.msra.mxu0 %v937
    %939 = vmatprep.subr.mxu0 0.0
    %v940 = vand.u32 %v111, 4294901760
    %v941 = vsub.f32 %v111, %v940
    %v942 = vand.u32 %v941, 4294901760
    %v943 = vsub.f32 %v941, %v942
    %v944 = vand.u32 %v943, 4294901760
    %945 = vmatpush1.msra.mxu0 %v944
    %946 = vmatprep.subr.mxu0 0.0
    %v947 = vand.u32 %v110, 4294901760
    %v948 = vsub.f32 %v110, %v947
    %v949 = vand.u32 %v948, 4294901760
    %v950 = vsub.f32 %v948, %v949
    %v951 = vand.u32 %v950, 4294901760
    %952 = vmatpush1.msra.mxu0 %v951
    %953 = vmatprep.subr.mxu0 0.0
    %v954 = vand.u32 %v109, 4294901760
    %v955 = vsub.f32 %v109, %v954
    %v956 = vand.u32 %v955, 4294901760
    %v957 = vsub.f32 %v955, %v956
    %v958 = vand.u32 %v957, 4294901760
    %959 = vmatpush1.msra.mxu0 %v958
    %960 = vmatprep.subr.mxu0 0.0
    %v961 = vand.u32 %v108, 4294901760
    %v962 = vsub.f32 %v108, %v961
    %v963 = vand.u32 %v962, 4294901760
    %v964 = vsub.f32 %v962, %v963
    %v965 = vand.u32 %v964, 4294901760
    %966 = vmatpush1.msra.mxu0 %v965
    %967 = vmatprep.subr.mxu0 0.0
    %v968 = vand.u32 %v107, 4294901760
    %v969 = vsub.f32 %v107, %v968
    %v970 = vand.u32 %v969, 4294901760
    %v971 = vsub.f32 %v969, %v970
    %v972 = vand.u32 %v971, 4294901760
    %973 = vmatpush1.msra.mxu0 %v972
    %974 = vmatprep.subr.mxu0 0.0
    %975 = vmatpush2.msra.mxu0 0.0
    %976 = vmatprep.subr.mxu0 0.0
    %977 = vmatpush2.msra.mxu0 0.0
    %978 = vmatprep.subr.mxu0 0.0
    %979 = vmatpush2.msra.mxu0 0.0
    %980 = vmatprep.subr.mxu0 0.0
    %981 = vmatpush2.msra.mxu0 0.0
    %982 = vmatprep.subr.mxu0 0.0
    %983 = vmatpush2.msra.mxu0 0.0
    %984 = vmatprep.subr.mxu0 0.0
    %985 = vmatpush2.msra.mxu0 0.0
    %986 = vmatprep.subr.mxu0 0.0
    %987 = vmatpush2.msra.mxu0 0.0
    %988 = vmatprep.subr.mxu0 0.0
    %989 = vmatpush2.msra.mxu0 0.0
    %990 = vmatprep.subr.mxu0 0.0
    %991 = vmatpush2.msra.mxu0 0.0
    %992 = vmatprep.subr.mxu0 0.0
    %993 = vmatpush2.msra.mxu0 0.0
    %994 = vmatprep.subr.mxu0 0.0
    %995 = vmatpush2.msra.mxu0 0.0
    %996 = vmatprep.subr.mxu0 0.0
    %997 = vmatpush2.msra.mxu0 0.0
    %998 = vmatprep.subr.mxu0 0.0
    %999 = vmatpush2.msra.mxu0 0.0
    %1000 = vmatprep.subr.mxu0 0.0
    %1001 = vmatpush2.msra.mxu0 0.0
    %1002 = vmatprep.subr.mxu0 0.0
    %1003 = vmatpush2.msra.mxu0 0.0
    %1004 = vmatprep.subr.mxu0 0.0
    %1005 = vmatpush2.msra.mxu0 0.0
    %1006 = vmatprep.mubr.f32.mxu0 0.0
    %v1007 = vand.u32 %v768, 4294901760
    %1008 = vmatmul.mubr.f32.gmra.mxu0 %v1007
    %v1009 = vpop.f32.mrf.mxu0
    %v1010 = vadd.f32 %v859, %v1009
    %v1011 = vpop.f32.mrf.mxu0
    %1012 = vdwg.mxu0
    %1013 = vmatprep.subr.mxu0 0.0
    %v1014 = vand.u32 %v122, 4294901760
    %v1015 = vsub.f32 %v122, %v1014
    %1016 = vmatpush1.msra.mxu0 %v1015
    %1017 = vmatprep.subr.mxu0 0.0
    %v1018 = vand.u32 %v121, 4294901760
    %v1019 = vsub.f32 %v121, %v1018
    %1020 = vmatpush1.msra.mxu0 %v1019
    %1021 = vmatprep.subr.mxu0 0.0
    %v1022 = vand.u32 %v120, 4294901760
    %v1023 = vsub.f32 %v120, %v1022
    %1024 = vmatpush1.msra.mxu0 %v1023
    %1025 = vmatprep.subr.mxu0 0.0
    %v1026 = vand.u32 %v119, 4294901760
    %v1027 = vsub.f32 %v119, %v1026
    %1028 = vmatpush1.msra.mxu0 %v1027
    %1029 = vmatprep.subr.mxu0 0.0
    %v1030 = vand.u32 %v118, 4294901760
    %v1031 = vsub.f32 %v118, %v1030
    %1032 = vmatpush1.msra.mxu0 %v1031
    %1033 = vmatprep.subr.mxu0 0.0
    %v1034 = vand.u32 %v117, 4294901760
    %v1035 = vsub.f32 %v117, %v1034
    %1036 = vmatpush1.msra.mxu0 %v1035
    %1037 = vmatprep.subr.mxu0 0.0
    %v1038 = vand.u32 %v116, 4294901760
    %v1039 = vsub.f32 %v116, %v1038
    %1040 = vmatpush1.msra.mxu0 %v1039
    %1041 = vmatprep.subr.mxu0 0.0
    %v1042 = vand.u32 %v115, 4294901760
    %v1043 = vsub.f32 %v115, %v1042
    %1044 = vmatpush1.msra.mxu0 %v1043
    %1045 = vmatprep.subr.mxu0 0.0
    %v1046 = vand.u32 %v114, 4294901760
    %v1047 = vsub.f32 %v114, %v1046
    %1048 = vmatpush1.msra.mxu0 %v1047
    %1049 = vmatprep.subr.mxu0 0.0
    %v1050 = vand.u32 %v113, 4294901760
    %v1051 = vsub.f32 %v113, %v1050
    %1052 = vmatpush1.msra.mxu0 %v1051
    %1053 = vmatprep.subr.mxu0 0.0
    %v1054 = vand.u32 %v112, 4294901760
    %v1055 = vsub.f32 %v112, %v1054
    %1056 = vmatpush1.msra.mxu0 %v1055
    %1057 = vmatprep.subr.mxu0 0.0
    %v1058 = vand.u32 %v111, 4294901760
    %v1059 = vsub.f32 %v111, %v1058
    %1060 = vmatpush1.msra.mxu0 %v1059
    %1061 = vmatprep.subr.mxu0 0.0
    %v1062 = vand.u32 %v110, 4294901760
    %v1063 = vsub.f32 %v110, %v1062
    %1064 = vmatpush1.msra.mxu0 %v1063
    %1065 = vmatprep.subr.mxu0 0.0
    %v1066 = vand.u32 %v109, 4294901760
    %v1067 = vsub.f32 %v109, %v1066
    %1068 = vmatpush1.msra.mxu0 %v1067
    %1069 = vmatprep.subr.mxu0 0.0
    %v1070 = vand.u32 %v108, 4294901760
    %v1071 = vsub.f32 %v108, %v1070
    %1072 = vmatpush1.msra.mxu0 %v1071
    %1073 = vmatprep.subr.mxu0 0.0
    %v1074 = vand.u32 %v107, 4294901760
    %v1075 = vsub.f32 %v107, %v1074
    %1076 = vmatpush1.msra.mxu0 %v1075
    %1077 = vmatprep.subr.mxu0 0.0
    %1078 = vmatpush2.msra.mxu0 0.0
    %1079 = vmatprep.subr.mxu0 0.0
    %1080 = vmatpush2.msra.mxu0 0.0
    %1081 = vmatprep.subr.mxu0 0.0
    %1082 = vmatpush2.msra.mxu0 0.0
    %1083 = vmatprep.subr.mxu0 0.0
    %1084 = vmatpush2.msra.mxu0 0.0
    %1085 = vmatprep.subr.mxu0 0.0
    %1086 = vmatpush2.msra.mxu0 0.0
    %1087 = vmatprep.subr.mxu0 0.0
    %1088 = vmatpush2.msra.mxu0 0.0
    %1089 = vmatprep.subr.mxu0 0.0
    %1090 = vmatpush2.msra.mxu0 0.0
    %1091 = vmatprep.subr.mxu0 0.0
    %1092 = vmatpush2.msra.mxu0 0.0
    %1093 = vmatprep.subr.mxu0 0.0
    %1094 = vmatpush2.msra.mxu0 0.0
    %1095 = vmatprep.subr.mxu0 0.0
    %1096 = vmatpush2.msra.mxu0 0.0
    %1097 = vmatprep.subr.mxu0 0.0
    %1098 = vmatpush2.msra.mxu0 0.0
    %1099 = vmatprep.subr.mxu0 0.0
    %1100 = vmatpush2.msra.mxu0 0.0
    %1101 = vmatprep.subr.mxu0 0.0
    %1102 = vmatpush2.msra.mxu0 0.0
    %1103 = vmatprep.subr.mxu0 0.0
    %1104 = vmatpush2.msra.mxu0 0.0
    %1105 = vmatprep.subr.mxu0 0.0
    %1106 = vmatpush2.msra.mxu0 0.0
    %1107 = vmatprep.subr.mxu0 0.0
    %1108 = vmatpush2.msra.mxu0 0.0
    %1109 = vmatprep.mubr.f32.mxu0 0.0
    %v1110 = vand.u32 %v768, 4294901760
    %v1111 = vsub.f32 %v768, %v1110
    %1112 = vmatmul.mubr.f32.gmra.mxu0 %v1111
    %v1113 = vpop.f32.mrf.mxu0
    %v1114 = vadd.f32 %v1010, %v1113
    %v1115 = vpop.f32.mrf.mxu0
    %1116 = vdwg.mxu0
    %1117 = vmatprep.subr.mxu0 0.0
    %v1118 = vand.u32 %v122, 4294901760
    %1119 = vmatpush1.msra.mxu0 %v1118
    %1120 = vmatprep.subr.mxu0 0.0
    %v1121 = vand.u32 %v121, 4294901760
    %1122 = vmatpush1.msra.mxu0 %v1121
    %1123 = vmatprep.subr.mxu0 0.0
    %v1124 = vand.u32 %v120, 4294901760
    %1125 = vmatpush1.msra.mxu0 %v1124
    %1126 = vmatprep.subr.mxu0 0.0
    %v1127 = vand.u32 %v119, 4294901760
    %1128 = vmatpush1.msra.mxu0 %v1127
    %1129 = vmatprep.subr.mxu0 0.0
    %v1130 = vand.u32 %v118, 4294901760
    %1131 = vmatpush1.msra.mxu0 %v1130
    %1132 = vmatprep.subr.mxu0 0.0
    %v1133 = vand.u32 %v117, 4294901760
    %1134 = vmatpush1.msra.mxu0 %v1133
    %1135 = vmatprep.subr.mxu0 0.0
    %v1136 = vand.u32 %v116, 4294901760
    %1137 = vmatpush1.msra.mxu0 %v1136
    %1138 = vmatprep.subr.mxu0 0.0
    %v1139 = vand.u32 %v115, 4294901760
    %1140 = vmatpush1.msra.mxu0 %v1139
    %1141 = vmatprep.subr.mxu0 0.0
    %v1142 = vand.u32 %v114, 4294901760
    %1143 = vmatpush1.msra.mxu0 %v1142
    %1144 = vmatprep.subr.mxu0 0.0
    %v1145 = vand.u32 %v113, 4294901760
    %1146 = vmatpush1.msra.mxu0 %v1145
    %1147 = vmatprep.subr.mxu0 0.0
    %v1148 = vand.u32 %v112, 4294901760
    %1149 = vmatpush1.msra.mxu0 %v1148
    %1150 = vmatprep.subr.mxu0 0.0
    %v1151 = vand.u32 %v111, 4294901760
    %1152 = vmatpush1.msra.mxu0 %v1151
    %1153 = vmatprep.subr.mxu0 0.0
    %v1154 = vand.u32 %v110, 4294901760
    %1155 = vmatpush1.msra.mxu0 %v1154
    %1156 = vmatprep.subr.mxu0 0.0
    %v1157 = vand.u32 %v109, 4294901760
    %1158 = vmatpush1.msra.mxu0 %v1157
    %1159 = vmatprep.subr.mxu0 0.0
    %v1160 = vand.u32 %v108, 4294901760
    %1161 = vmatpush1.msra.mxu0 %v1160
    %1162 = vmatprep.subr.mxu0 0.0
    %v1163 = vand.u32 %v107, 4294901760
    %1164 = vmatpush1.msra.mxu0 %v1163
    %1165 = vmatprep.subr.mxu0 0.0
    %1166 = vmatpush2.msra.mxu0 0.0
    %1167 = vmatprep.subr.mxu0 0.0
    %1168 = vmatpush2.msra.mxu0 0.0
    %1169 = vmatprep.subr.mxu0 0.0
    %1170 = vmatpush2.msra.mxu0 0.0
    %1171 = vmatprep.subr.mxu0 0.0
    %1172 = vmatpush2.msra.mxu0 0.0
    %1173 = vmatprep.subr.mxu0 0.0
    %1174 = vmatpush2.msra.mxu0 0.0
    %1175 = vmatprep.subr.mxu0 0.0
    %1176 = vmatpush2.msra.mxu0 0.0
    %1177 = vmatprep.subr.mxu0 0.0
    %1178 = vmatpush2.msra.mxu0 0.0
    %1179 = vmatprep.subr.mxu0 0.0
    %1180 = vmatpush2.msra.mxu0 0.0
    %1181 = vmatprep.subr.mxu0 0.0
    %1182 = vmatpush2.msra.mxu0 0.0
    %1183 = vmatprep.subr.mxu0 0.0
    %1184 = vmatpush2.msra.mxu0 0.0
    %1185 = vmatprep.subr.mxu0 0.0
    %1186 = vmatpush2.msra.mxu0 0.0
    %1187 = vmatprep.subr.mxu0 0.0
    %1188 = vmatpush2.msra.mxu0 0.0
    %1189 = vmatprep.subr.mxu0 0.0
    %1190 = vmatpush2.msra.mxu0 0.0
    %1191 = vmatprep.subr.mxu0 0.0
    %1192 = vmatpush2.msra.mxu0 0.0
    %1193 = vmatprep.subr.mxu0 0.0
    %1194 = vmatpush2.msra.mxu0 0.0
    %1195 = vmatprep.subr.mxu0 0.0
    %1196 = vmatpush2.msra.mxu0 0.0
    %1197 = vmatprep.mubr.f32.mxu0 0.0
    %v1198 = vand.u32 %v768, 4294901760
    %v1199 = vsub.f32 %v768, %v1198
    %v1200 = vand.u32 %v1199, 4294901760
    %1201 = vmatmul.mubr.f32.gmra.mxu0 %v1200
    %v1202 = vpop.f32.mrf.mxu0
    %v1203 = vadd.f32 %v1114, %v1202
    %v1204 = vpop.f32.mrf.mxu0
    %1205 = vdwg.mxu0
    %1206 = vmatprep.subr.mxu0 0.0
    %v1207 = vand.u32 %v122, 4294901760
    %v1208 = vsub.f32 %v122, %v1207
    %v1209 = vand.u32 %v1208, 4294901760
    %1210 = vmatpush1.msra.mxu0 %v1209
    %1211 = vmatprep.subr.mxu0 0.0
    %v1212 = vand.u32 %v121, 4294901760
    %v1213 = vsub.f32 %v121, %v1212
    %v1214 = vand.u32 %v1213, 4294901760
    %1215 = vmatpush1.msra.mxu0 %v1214
    %1216 = vmatprep.subr.mxu0 0.0
    %v1217 = vand.u32 %v120, 4294901760
    %v1218 = vsub.f32 %v120, %v1217
    %v1219 = vand.u32 %v1218, 4294901760
    %1220 = vmatpush1.msra.mxu0 %v1219
    %1221 = vmatprep.subr.mxu0 0.0
    %v1222 = vand.u32 %v119, 4294901760
    %v1223 = vsub.f32 %v119, %v1222
    %v1224 = vand.u32 %v1223, 4294901760
    %1225 = vmatpush1.msra.mxu0 %v1224
    %1226 = vmatprep.subr.mxu0 0.0
    %v1227 = vand.u32 %v118, 4294901760
    %v1228 = vsub.f32 %v118, %v1227
    %v1229 = vand.u32 %v1228, 4294901760
    %1230 = vmatpush1.msra.mxu0 %v1229
    %1231 = vmatprep.subr.mxu0 0.0
    %v1232 = vand.u32 %v117, 4294901760
    %v1233 = vsub.f32 %v117, %v1232
    %v1234 = vand.u32 %v1233, 4294901760
    %1235 = vmatpush1.msra.mxu0 %v1234
    %1236 = vmatprep.subr.mxu0 0.0
    %v1237 = vand.u32 %v116, 4294901760
    %v1238 = vsub.f32 %v116, %v1237
    %v1239 = vand.u32 %v1238, 4294901760
    %1240 = vmatpush1.msra.mxu0 %v1239
    %1241 = vmatprep.subr.mxu0 0.0
    %v1242 = vand.u32 %v115, 4294901760
    %v1243 = vsub.f32 %v115, %v1242
    %v1244 = vand.u32 %v1243, 4294901760
    %1245 = vmatpush1.msra.mxu0 %v1244
    %1246 = vmatprep.subr.mxu0 0.0
    %v1247 = vand.u32 %v114, 4294901760
    %v1248 = vsub.f32 %v114, %v1247
    %v1249 = vand.u32 %v1248, 4294901760
    %1250 = vmatpush1.msra.mxu0 %v1249
    %1251 = vmatprep.subr.mxu0 0.0
    %v1252 = vand.u32 %v113, 4294901760
    %v1253 = vsub.f32 %v113, %v1252
    %v1254 = vand.u32 %v1253, 4294901760
    %1255 = vmatpush1.msra.mxu0 %v1254
    %1256 = vmatprep.subr.mxu0 0.0
    %v1257 = vand.u32 %v112, 4294901760
    %v1258 = vsub.f32 %v112, %v1257
    %v1259 = vand.u32 %v1258, 4294901760
    %1260 = vmatpush1.msra.mxu0 %v1259
    %1261 = vmatprep.subr.mxu0 0.0
    %v1262 = vand.u32 %v111, 4294901760
    %v1263 = vsub.f32 %v111, %v1262
    %v1264 = vand.u32 %v1263, 4294901760
    %1265 = vmatpush1.msra.mxu0 %v1264
    %1266 = vmatprep.subr.mxu0 0.0
    %v1267 = vand.u32 %v110, 4294901760
    %v1268 = vsub.f32 %v110, %v1267
    %v1269 = vand.u32 %v1268, 4294901760
    %1270 = vmatpush1.msra.mxu0 %v1269
    %1271 = vmatprep.subr.mxu0 0.0
    %v1272 = vand.u32 %v109, 4294901760
    %v1273 = vsub.f32 %v109, %v1272
    %v1274 = vand.u32 %v1273, 4294901760
    %1275 = vmatpush1.msra.mxu0 %v1274
    %1276 = vmatprep.subr.mxu0 0.0
    %v1277 = vand.u32 %v108, 4294901760
    %v1278 = vsub.f32 %v108, %v1277
    %v1279 = vand.u32 %v1278, 4294901760
    %1280 = vmatpush1.msra.mxu0 %v1279
    %1281 = vmatprep.subr.mxu0 0.0
    %v1282 = vand.u32 %v107, 4294901760
    %v1283 = vsub.f32 %v107, %v1282
    %v1284 = vand.u32 %v1283, 4294901760
    %1285 = vmatpush1.msra.mxu0 %v1284
    %1286 = vmatprep.subr.mxu0 0.0
    %1287 = vmatpush2.msra.mxu0 0.0
    %1288 = vmatprep.subr.mxu0 0.0
    %1289 = vmatpush2.msra.mxu0 0.0
    %1290 = vmatprep.subr.mxu0 0.0
    %1291 = vmatpush2.msra.mxu0 0.0
    %1292 = vmatprep.subr.mxu0 0.0
    %1293 = vmatpush2.msra.mxu0 0.0
    %1294 = vmatprep.subr.mxu0 0.0
    %1295 = vmatpush2.msra.mxu0 0.0
    %1296 = vmatprep.subr.mxu0 0.0
    %1297 = vmatpush2.msra.mxu0 0.0
    %1298 = vmatprep.subr.mxu0 0.0
    %1299 = vmatpush2.msra.mxu0 0.0
    %1300 = vmatprep.subr.mxu0 0.0
    %1301 = vmatpush2.msra.mxu0 0.0
    %1302 = vmatprep.subr.mxu0 0.0
    %1303 = vmatpush2.msra.mxu0 0.0
    %1304 = vmatprep.subr.mxu0 0.0
    %1305 = vmatpush2.msra.mxu0 0.0
    %1306 = vmatprep.subr.mxu0 0.0
    %1307 = vmatpush2.msra.mxu0 0.0
    %1308 = vmatprep.subr.mxu0 0.0
    %1309 = vmatpush2.msra.mxu0 0.0
    %1310 = vmatprep.subr.mxu0 0.0
    %1311 = vmatpush2.msra.mxu0 0.0
    %1312 = vmatprep.subr.mxu0 0.0
    %1313 = vmatpush2.msra.mxu0 0.0
    %1314 = vmatprep.subr.mxu0 0.0
    %1315 = vmatpush2.msra.mxu0 0.0
    %1316 = vmatprep.subr.mxu0 0.0
    %1317 = vmatpush2.msra.mxu0 0.0
    %1318 = vmatprep.mubr.f32.mxu0 0.0
    %v1319 = vand.u32 %v768, 4294901760
    %1320 = vmatmul.mubr.f32.gmra.mxu0 %v1319
    %v1321 = vpop.f32.mrf.mxu0
    %v1322 = vadd.f32 %v1203, %v1321
    %v1323 = vpop.f32.mrf.mxu0
    %1324 = vdwg.mxu0
    %1325 = vmatprep.subr.mxu0 0.0
    %v1326 = vand.u32 %v122, 4294901760
    %1327 = vmatpush1.msra.mxu0 %v1326
    %1328 = vmatprep.subr.mxu0 0.0
    %v1329 = vand.u32 %v121, 4294901760
    %1330 = vmatpush1.msra.mxu0 %v1329
    %1331 = vmatprep.subr.mxu0 0.0
    %v1332 = vand.u32 %v120, 4294901760
    %1333 = vmatpush1.msra.mxu0 %v1332
    %1334 = vmatprep.subr.mxu0 0.0
    %v1335 = vand.u32 %v119, 4294901760
    %1336 = vmatpush1.msra.mxu0 %v1335
    %1337 = vmatprep.subr.mxu0 0.0
    %v1338 = vand.u32 %v118, 4294901760
    %1339 = vmatpush1.msra.mxu0 %v1338
    %1340 = vmatprep.subr.mxu0 0.0
    %v1341 = vand.u32 %v117, 4294901760
    %1342 = vmatpush1.msra.mxu0 %v1341
    %1343 = vmatprep.subr.mxu0 0.0
    %v1344 = vand.u32 %v116, 4294901760
    %1345 = vmatpush1.msra.mxu0 %v1344
    %1346 = vmatprep.subr.mxu0 0.0
    %v1347 = vand.u32 %v115, 4294901760
    %1348 = vmatpush1.msra.mxu0 %v1347
    %1349 = vmatprep.subr.mxu0 0.0
    %v1350 = vand.u32 %v114, 4294901760
    %1351 = vmatpush1.msra.mxu0 %v1350
    %1352 = vmatprep.subr.mxu0 0.0
    %v1353 = vand.u32 %v113, 4294901760
    %1354 = vmatpush1.msra.mxu0 %v1353
    %1355 = vmatprep.subr.mxu0 0.0
    %v1356 = vand.u32 %v112, 4294901760
    %1357 = vmatpush1.msra.mxu0 %v1356
    %1358 = vmatprep.subr.mxu0 0.0
    %v1359 = vand.u32 %v111, 4294901760
    %1360 = vmatpush1.msra.mxu0 %v1359
    %1361 = vmatprep.subr.mxu0 0.0
    %v1362 = vand.u32 %v110, 4294901760
    %1363 = vmatpush1.msra.mxu0 %v1362
    %1364 = vmatprep.subr.mxu0 0.0
    %v1365 = vand.u32 %v109, 4294901760
    %1366 = vmatpush1.msra.mxu0 %v1365
    %1367 = vmatprep.subr.mxu0 0.0
    %v1368 = vand.u32 %v108, 4294901760
    %1369 = vmatpush1.msra.mxu0 %v1368
    %1370 = vmatprep.subr.mxu0 0.0
    %v1371 = vand.u32 %v107, 4294901760
    %1372 = vmatpush1.msra.mxu0 %v1371
    %1373 = vmatprep.subr.mxu0 0.0
    %1374 = vmatpush2.msra.mxu0 0.0
    %1375 = vmatprep.subr.mxu0 0.0
    %1376 = vmatpush2.msra.mxu0 0.0
    %1377 = vmatprep.subr.mxu0 0.0
    %1378 = vmatpush2.msra.mxu0 0.0
    %1379 = vmatprep.subr.mxu0 0.0
    %1380 = vmatpush2.msra.mxu0 0.0
    %1381 = vmatprep.subr.mxu0 0.0
    %1382 = vmatpush2.msra.mxu0 0.0
    %1383 = vmatprep.subr.mxu0 0.0
    %1384 = vmatpush2.msra.mxu0 0.0
    %1385 = vmatprep.subr.mxu0 0.0
    %1386 = vmatpush2.msra.mxu0 0.0
    %1387 = vmatprep.subr.mxu0 0.0
    %1388 = vmatpush2.msra.mxu0 0.0
    %1389 = vmatprep.subr.mxu0 0.0
    %1390 = vmatpush2.msra.mxu0 0.0
    %1391 = vmatprep.subr.mxu0 0.0
    %1392 = vmatpush2.msra.mxu0 0.0
    %1393 = vmatprep.subr.mxu0 0.0
    %1394 = vmatpush2.msra.mxu0 0.0
    %1395 = vmatprep.subr.mxu0 0.0
    %1396 = vmatpush2.msra.mxu0 0.0
    %1397 = vmatprep.subr.mxu0 0.0
    %1398 = vmatpush2.msra.mxu0 0.0
    %1399 = vmatprep.subr.mxu0 0.0
    %1400 = vmatpush2.msra.mxu0 0.0
    %1401 = vmatprep.subr.mxu0 0.0
    %1402 = vmatpush2.msra.mxu0 0.0
    %1403 = vmatprep.subr.mxu0 0.0
    %1404 = vmatpush2.msra.mxu0 0.0
    %1405 = vmatprep.mubr.f32.mxu0 0.0
    %v1406 = vand.u32 %v768, 4294901760
    %1407 = vmatmul.mubr.f32.gmra.mxu0 %v1406
    %v1408 = vpop.f32.mrf.mxu0
    %v1409 = vadd.f32 %v1322, %v1408
    %v1410 = vpop.f32.mrf.mxu0
    %1411 = vdwg.mxu0
    %v1412 = vmul.f32 %v1409, 0.25
    %v1413 = vsub.f32 %v768, %v1412
    %v1414 = vmul.f32 %v1413, 1.442695
    %v1415 = vpow.pop %v1414
    %1416 = vmatprep.subr.mxu0 0.0
    %v1417 = vand.u32 %v122, 4294901760
    %1418 = vmatpush1.msra.mxu0 %v1417
    %1419 = vmatprep.subr.mxu0 0.0
    %v1420 = vand.u32 %v121, 4294901760
    %1421 = vmatpush1.msra.mxu0 %v1420
    %1422 = vmatprep.subr.mxu0 0.0
    %v1423 = vand.u32 %v120, 4294901760
    %1424 = vmatpush1.msra.mxu0 %v1423
    %1425 = vmatprep.subr.mxu0 0.0
    %v1426 = vand.u32 %v119, 4294901760
    %1427 = vmatpush1.msra.mxu0 %v1426
    %1428 = vmatprep.subr.mxu0 0.0
    %v1429 = vand.u32 %v118, 4294901760
    %1430 = vmatpush1.msra.mxu0 %v1429
    %1431 = vmatprep.subr.mxu0 0.0
    %v1432 = vand.u32 %v117, 4294901760
    %1433 = vmatpush1.msra.mxu0 %v1432
    %1434 = vmatprep.subr.mxu0 0.0
    %v1435 = vand.u32 %v116, 4294901760
    %1436 = vmatpush1.msra.mxu0 %v1435
    %1437 = vmatprep.subr.mxu0 0.0
    %v1438 = vand.u32 %v115, 4294901760
    %1439 = vmatpush1.msra.mxu0 %v1438
    %1440 = vmatprep.subr.mxu0 0.0
    %v1441 = vand.u32 %v114, 4294901760
    %1442 = vmatpush1.msra.mxu0 %v1441
    %1443 = vmatprep.subr.mxu0 0.0
    %v1444 = vand.u32 %v113, 4294901760
    %1445 = vmatpush1.msra.mxu0 %v1444
    %1446 = vmatprep.subr.mxu0 0.0
    %v1447 = vand.u32 %v112, 4294901760
    %1448 = vmatpush1.msra.mxu0 %v1447
    %1449 = vmatprep.subr.mxu0 0.0
    %v1450 = vand.u32 %v111, 4294901760
    %1451 = vmatpush1.msra.mxu0 %v1450
    %1452 = vmatprep.subr.mxu0 0.0
    %v1453 = vand.u32 %v110, 4294901760
    %1454 = vmatpush1.msra.mxu0 %v1453
    %1455 = vmatprep.subr.mxu0 0.0
    %v1456 = vand.u32 %v109, 4294901760
    %1457 = vmatpush1.msra.mxu0 %v1456
    %1458 = vmatprep.subr.mxu0 0.0
    %v1459 = vand.u32 %v108, 4294901760
    %1460 = vmatpush1.msra.mxu0 %v1459
    %1461 = vmatprep.subr.mxu0 0.0
    %v1462 = vand.u32 %v107, 4294901760
    %1463 = vmatpush1.msra.mxu0 %v1462
    %1464 = vmatprep.subr.mxu0 0.0
    %1465 = vmatpush2.msra.mxu0 0.0
    %1466 = vmatprep.subr.mxu0 0.0
    %1467 = vmatpush2.msra.mxu0 0.0
    %1468 = vmatprep.subr.mxu0 0.0
    %1469 = vmatpush2.msra.mxu0 0.0
    %1470 = vmatprep.subr.mxu0 0.0
    %1471 = vmatpush2.msra.mxu0 0.0
    %1472 = vmatprep.subr.mxu0 0.0
    %1473 = vmatpush2.msra.mxu0 0.0
    %1474 = vmatprep.subr.mxu0 0.0
    %1475 = vmatpush2.msra.mxu0 0.0
    %1476 = vmatprep.subr.mxu0 0.0
    %1477 = vmatpush2.msra.mxu0 0.0
    %1478 = vmatprep.subr.mxu0 0.0
    %1479 = vmatpush2.msra.mxu0 0.0
    %1480 = vmatprep.subr.mxu0 0.0
    %1481 = vmatpush2.msra.mxu0 0.0
    %1482 = vmatprep.subr.mxu0 0.0
    %1483 = vmatpush2.msra.mxu0 0.0
    %1484 = vmatprep.subr.mxu0 0.0
    %1485 = vmatpush2.msra.mxu0 0.0
    %1486 = vmatprep.subr.mxu0 0.0
    %1487 = vmatpush2.msra.mxu0 0.0
    %1488 = vmatprep.subr.mxu0 0.0
    %1489 = vmatpush2.msra.mxu0 0.0
    %1490 = vmatprep.subr.mxu0 0.0
    %1491 = vmatpush2.msra.mxu0 0.0
    %1492 = vmatprep.subr.mxu0 0.0
    %1493 = vmatpush2.msra.mxu0 0.0
    %1494 = vmatprep.subr.mxu0 0.0
    %1495 = vmatpush2.msra.mxu0 0.0
    %1496 = vmatprep.mubr.f32.mxu0 0.0
    %v1497 = vand.u32 %v1415, 4294901760
    %v1498 = vsub.f32 %v1415, %v1497
    %v1499 = vand.u32 %v1498, 4294901760
    %v1500 = vsub.f32 %v1498, %v1499
    %v1501 = vand.u32 %v1500, 4294901760
    %1502 = vmatmul.mubr.f32.gmra.mxu0 %v1501
    %v1503 = vpop.f32.mrf.mxu0
    %v1504 = vadd.f32 0.0, %v1503
    %v1505 = vpop.f32.mrf.mxu0
    %1506 = vdwg.mxu0
    %1507 = vmatprep.subr.mxu0 0.0
    %v1508 = vand.u32 %v122, 4294901760
    %v1509 = vsub.f32 %v122, %v1508
    %v1510 = vand.u32 %v1509, 4294901760
    %v1511 = vsub.f32 %v1509, %v1510
    %v1512 = vand.u32 %v1511, 4294901760
    %1513 = vmatpush1.msra.mxu0 %v1512
    %1514 = vmatprep.subr.mxu0 0.0
    %v1515 = vand.u32 %v121, 4294901760
    %v1516 = vsub.f32 %v121, %v1515
    %v1517 = vand.u32 %v1516, 4294901760
    %v1518 = vsub.f32 %v1516, %v1517
    %v1519 = vand.u32 %v1518, 4294901760
    %1520 = vmatpush1.msra.mxu0 %v1519
    %1521 = vmatprep.subr.mxu0 0.0
    %v1522 = vand.u32 %v120, 4294901760
    %v1523 = vsub.f32 %v120, %v1522
    %v1524 = vand.u32 %v1523, 4294901760
    %v1525 = vsub.f32 %v1523, %v1524
    %v1526 = vand.u32 %v1525, 4294901760
    %1527 = vmatpush1.msra.mxu0 %v1526
    %1528 = vmatprep.subr.mxu0 0.0
    %v1529 = vand.u32 %v119, 4294901760
    %v1530 = vsub.f32 %v119, %v1529
    %v1531 = vand.u32 %v1530, 4294901760
    %v1532 = vsub.f32 %v1530, %v1531
    %v1533 = vand.u32 %v1532, 4294901760
    %1534 = vmatpush1.msra.mxu0 %v1533
    %1535 = vmatprep.subr.mxu0 0.0
    %v1536 = vand.u32 %v118, 4294901760
    %v1537 = vsub.f32 %v118, %v1536
    %v1538 = vand.u32 %v1537, 4294901760
    %v1539 = vsub.f32 %v1537, %v1538
    %v1540 = vand.u32 %v1539, 4294901760
    %1541 = vmatpush1.msra.mxu0 %v1540
    %1542 = vmatprep.subr.mxu0 0.0
    %v1543 = vand.u32 %v117, 4294901760
    %v1544 = vsub.f32 %v117, %v1543
    %v1545 = vand.u32 %v1544, 4294901760
    %v1546 = vsub.f32 %v1544, %v1545
    %v1547 = vand.u32 %v1546, 4294901760
    %1548 = vmatpush1.msra.mxu0 %v1547
    %1549 = vmatprep.subr.mxu0 0.0
    %v1550 = vand.u32 %v116, 4294901760
    %v1551 = vsub.f32 %v116, %v1550
    %v1552 = vand.u32 %v1551, 4294901760
    %v1553 = vsub.f32 %v1551, %v1552
    %v1554 = vand.u32 %v1553, 4294901760
    %1555 = vmatpush1.msra.mxu0 %v1554
    %1556 = vmatprep.subr.mxu0 0.0
    %v1557 = vand.u32 %v115, 4294901760
    %v1558 = vsub.f32 %v115, %v1557
    %v1559 = vand.u32 %v1558, 4294901760
    %v1560 = vsub.f32 %v1558, %v1559
    %v1561 = vand.u32 %v1560, 4294901760
    %1562 = vmatpush1.msra.mxu0 %v1561
    %1563 = vmatprep.subr.mxu0 0.0
    %v1564 = vand.u32 %v114, 4294901760
    %v1565 = vsub.f32 %v114, %v1564
    %v1566 = vand.u32 %v1565, 4294901760
    %v1567 = vsub.f32 %v1565, %v1566
    %v1568 = vand.u32 %v1567, 4294901760
    %1569 = vmatpush1.msra.mxu0 %v1568
    %1570 = vmatprep.subr.mxu0 0.0
    %v1571 = vand.u32 %v113, 4294901760
    %v1572 = vsub.f32 %v113, %v1571
    %v1573 = vand.u32 %v1572, 4294901760
    %v1574 = vsub.f32 %v1572, %v1573
    %v1575 = vand.u32 %v1574, 4294901760
    %1576 = vmatpush1.msra.mxu0 %v1575
    %1577 = vmatprep.subr.mxu0 0.0
    %v1578 = vand.u32 %v112, 4294901760
    %v1579 = vsub.f32 %v112, %v1578
    %v1580 = vand.u32 %v1579, 4294901760
    %v1581 = vsub.f32 %v1579, %v1580
    %v1582 = vand.u32 %v1581, 4294901760
    %1583 = vmatpush1.msra.mxu0 %v1582
    %1584 = vmatprep.subr.mxu0 0.0
    %v1585 = vand.u32 %v111, 4294901760
    %v1586 = vsub.f32 %v111, %v1585
    %v1587 = vand.u32 %v1586, 4294901760
    %v1588 = vsub.f32 %v1586, %v1587
    %v1589 = vand.u32 %v1588, 4294901760
    %1590 = vmatpush1.msra.mxu0 %v1589
    %1591 = vmatprep.subr.mxu0 0.0
    %v1592 = vand.u32 %v110, 4294901760
    %v1593 = vsub.f32 %v110, %v1592
    %v1594 = vand.u32 %v1593, 4294901760
    %v1595 = vsub.f32 %v1593, %v1594
    %v1596 = vand.u32 %v1595, 4294901760
    %1597 = vmatpush1.msra.mxu0 %v1596
    %1598 = vmatprep.subr.mxu0 0.0
    %v1599 = vand.u32 %v109, 4294901760
    %v1600 = vsub.f32 %v109, %v1599
    %v1601 = vand.u32 %v1600, 4294901760
    %v1602 = vsub.f32 %v1600, %v1601
    %v1603 = vand.u32 %v1602, 4294901760
    %1604 = vmatpush1.msra.mxu0 %v1603
    %1605 = vmatprep.subr.mxu0 0.0
    %v1606 = vand.u32 %v108, 4294901760
    %v1607 = vsub.f32 %v108, %v1606
    %v1608 = vand.u32 %v1607, 4294901760
    %v1609 = vsub.f32 %v1607, %v1608
    %v1610 = vand.u32 %v1609, 4294901760
    %1611 = vmatpush1.msra.mxu0 %v1610
    %1612 = vmatprep.subr.mxu0 0.0
    %v1613 = vand.u32 %v107, 4294901760
    %v1614 = vsub.f32 %v107, %v1613
    %v1615 = vand.u32 %v1614, 4294901760
    %v1616 = vsub.f32 %v1614, %v1615
    %v1617 = vand.u32 %v1616, 4294901760
    %1618 = vmatpush1.msra.mxu0 %v1617
    %1619 = vmatprep.subr.mxu0 0.0
    %1620 = vmatpush2.msra.mxu0 0.0
    %1621 = vmatprep.subr.mxu0 0.0
    %1622 = vmatpush2.msra.mxu0 0.0
    %1623 = vmatprep.subr.mxu0 0.0
    %1624 = vmatpush2.msra.mxu0 0.0
    %1625 = vmatprep.subr.mxu0 0.0
    %1626 = vmatpush2.msra.mxu0 0.0
    %1627 = vmatprep.subr.mxu0 0.0
    %1628 = vmatpush2.msra.mxu0 0.0
    %1629 = vmatprep.subr.mxu0 0.0
    %1630 = vmatpush2.msra.mxu0 0.0
    %1631 = vmatprep.subr.mxu0 0.0
    %1632 = vmatpush2.msra.mxu0 0.0
    %1633 = vmatprep.subr.mxu0 0.0
    %1634 = vmatpush2.msra.mxu0 0.0
    %1635 = vmatprep.subr.mxu0 0.0
    %1636 = vmatpush2.msra.mxu0 0.0
    %1637 = vmatprep.subr.mxu0 0.0
    %1638 = vmatpush2.msra.mxu0 0.0
    %1639 = vmatprep.subr.mxu0 0.0
    %1640 = vmatpush2.msra.mxu0 0.0
    %1641 = vmatprep.subr.mxu0 0.0
    %1642 = vmatpush2.msra.mxu0 0.0
    %1643 = vmatprep.subr.mxu0 0.0
    %1644 = vmatpush2.msra.mxu0 0.0
    %1645 = vmatprep.subr.mxu0 0.0
    %1646 = vmatpush2.msra.mxu0 0.0
    %1647 = vmatprep.subr.mxu0 0.0
    %1648 = vmatpush2.msra.mxu0 0.0
    %1649 = vmatprep.subr.mxu0 0.0
    %1650 = vmatpush2.msra.mxu0 0.0
    %1651 = vmatprep.mubr.f32.mxu0 0.0
    %v1652 = vand.u32 %v1415, 4294901760
    %1653 = vmatmul.mubr.f32.gmra.mxu0 %v1652
    %v1654 = vpop.f32.mrf.mxu0
    %v1655 = vadd.f32 %v1504, %v1654
    %v1656 = vpop.f32.mrf.mxu0
    %1657 = vdwg.mxu0
    %1658 = vmatprep.subr.mxu0 0.0
    %v1659 = vand.u32 %v122, 4294901760
    %v1660 = vsub.f32 %v122, %v1659
    %1661 = vmatpush1.msra.mxu0 %v1660
    %1662 = vmatprep.subr.mxu0 0.0
    %v1663 = vand.u32 %v121, 4294901760
    %v1664 = vsub.f32 %v121, %v1663
    %1665 = vmatpush1.msra.mxu0 %v1664
    %1666 = vmatprep.subr.mxu0 0.0
    %v1667 = vand.u32 %v120, 4294901760
    %v1668 = vsub.f32 %v120, %v1667
    %1669 = vmatpush1.msra.mxu0 %v1668
    %1670 = vmatprep.subr.mxu0 0.0
    %v1671 = vand.u32 %v119, 4294901760
    %v1672 = vsub.f32 %v119, %v1671
    %1673 = vmatpush1.msra.mxu0 %v1672
    %1674 = vmatprep.subr.mxu0 0.0
    %v1675 = vand.u32 %v118, 4294901760
    %v1676 = vsub.f32 %v118, %v1675
    %1677 = vmatpush1.msra.mxu0 %v1676
    %1678 = vmatprep.subr.mxu0 0.0
    %v1679 = vand.u32 %v117, 4294901760
    %v1680 = vsub.f32 %v117, %v1679
    %1681 = vmatpush1.msra.mxu0 %v1680
    %1682 = vmatprep.subr.mxu0 0.0
    %v1683 = vand.u32 %v116, 4294901760
    %v1684 = vsub.f32 %v116, %v1683
    %1685 = vmatpush1.msra.mxu0 %v1684
    %1686 = vmatprep.subr.mxu0 0.0
    %v1687 = vand.u32 %v115, 4294901760
    %v1688 = vsub.f32 %v115, %v1687
    %1689 = vmatpush1.msra.mxu0 %v1688
    %1690 = vmatprep.subr.mxu0 0.0
    %v1691 = vand.u32 %v114, 4294901760
    %v1692 = vsub.f32 %v114, %v1691
    %1693 = vmatpush1.msra.mxu0 %v1692
    %1694 = vmatprep.subr.mxu0 0.0
    %v1695 = vand.u32 %v113, 4294901760
    %v1696 = vsub.f32 %v113, %v1695
    %1697 = vmatpush1.msra.mxu0 %v1696
    %1698 = vmatprep.subr.mxu0 0.0
    %v1699 = vand.u32 %v112, 4294901760
    %v1700 = vsub.f32 %v112, %v1699
    %1701 = vmatpush1.msra.mxu0 %v1700
    %1702 = vmatprep.subr.mxu0 0.0
    %v1703 = vand.u32 %v111, 4294901760
    %v1704 = vsub.f32 %v111, %v1703
    %1705 = vmatpush1.msra.mxu0 %v1704
    %1706 = vmatprep.subr.mxu0 0.0
    %v1707 = vand.u32 %v110, 4294901760
    %v1708 = vsub.f32 %v110, %v1707
    %1709 = vmatpush1.msra.mxu0 %v1708
    %1710 = vmatprep.subr.mxu0 0.0
    %v1711 = vand.u32 %v109, 4294901760
    %v1712 = vsub.f32 %v109, %v1711
    %1713 = vmatpush1.msra.mxu0 %v1712
    %1714 = vmatprep.subr.mxu0 0.0
    %v1715 = vand.u32 %v108, 4294901760
    %v1716 = vsub.f32 %v108, %v1715
    %1717 = vmatpush1.msra.mxu0 %v1716
    %1718 = vmatprep.subr.mxu0 0.0
    %v1719 = vand.u32 %v107, 4294901760
    %v1720 = vsub.f32 %v107, %v1719
    %1721 = vmatpush1.msra.mxu0 %v1720
    %1722 = vmatprep.subr.mxu0 0.0
    %1723 = vmatpush2.msra.mxu0 0.0
    %1724 = vmatprep.subr.mxu0 0.0
    %1725 = vmatpush2.msra.mxu0 0.0
    %1726 = vmatprep.subr.mxu0 0.0
    %1727 = vmatpush2.msra.mxu0 0.0
    %1728 = vmatprep.subr.mxu0 0.0
    %1729 = vmatpush2.msra.mxu0 0.0
    %1730 = vmatprep.subr.mxu0 0.0
    %1731 = vmatpush2.msra.mxu0 0.0
    %1732 = vmatprep.subr.mxu0 0.0
    %1733 = vmatpush2.msra.mxu0 0.0
    %1734 = vmatprep.subr.mxu0 0.0
    %1735 = vmatpush2.msra.mxu0 0.0
    %1736 = vmatprep.subr.mxu0 0.0
    %1737 = vmatpush2.msra.mxu0 0.0
    %1738 = vmatprep.subr.mxu0 0.0
    %1739 = vmatpush2.msra.mxu0 0.0
    %1740 = vmatprep.subr.mxu0 0.0
    %1741 = vmatpush2.msra.mxu0 0.0
    %1742 = vmatprep.subr.mxu0 0.0
    %1743 = vmatpush2.msra.mxu0 0.0
    %1744 = vmatprep.subr.mxu0 0.0
    %1745 = vmatpush2.msra.mxu0 0.0
    %1746 = vmatprep.subr.mxu0 0.0
    %1747 = vmatpush2.msra.mxu0 0.0
    %1748 = vmatprep.subr.mxu0 0.0
    %1749 = vmatpush2.msra.mxu0 0.0
    %1750 = vmatprep.subr.mxu0 0.0
    %1751 = vmatpush2.msra.mxu0 0.0
    %1752 = vmatprep.subr.mxu0 0.0
    %1753 = vmatpush2.msra.mxu0 0.0
    %1754 = vmatprep.mubr.f32.mxu0 0.0
    %v1755 = vand.u32 %v1415, 4294901760
    %v1756 = vsub.f32 %v1415, %v1755
    %1757 = vmatmul.mubr.f32.gmra.mxu0 %v1756
    %v1758 = vpop.f32.mrf.mxu0
    %v1759 = vadd.f32 %v1655, %v1758
    %v1760 = vpop.f32.mrf.mxu0
    %1761 = vdwg.mxu0
    %1762 = vmatprep.subr.mxu0 0.0
    %v1763 = vand.u32 %v122, 4294901760
    %1764 = vmatpush1.msra.mxu0 %v1763
    %1765 = vmatprep.subr.mxu0 0.0
    %v1766 = vand.u32 %v121, 4294901760
    %1767 = vmatpush1.msra.mxu0 %v1766
    %1768 = vmatprep.subr.mxu0 0.0
    %v1769 = vand.u32 %v120, 4294901760
    %1770 = vmatpush1.msra.mxu0 %v1769
    %1771 = vmatprep.subr.mxu0 0.0
    %v1772 = vand.u32 %v119, 4294901760
    %1773 = vmatpush1.msra.mxu0 %v1772
    %1774 = vmatprep.subr.mxu0 0.0
    %v1775 = vand.u32 %v118, 4294901760
    %1776 = vmatpush1.msra.mxu0 %v1775
    %1777 = vmatprep.subr.mxu0 0.0
    %v1778 = vand.u32 %v117, 4294901760
    %1779 = vmatpush1.msra.mxu0 %v1778
    %1780 = vmatprep.subr.mxu0 0.0
    %v1781 = vand.u32 %v116, 4294901760
    %1782 = vmatpush1.msra.mxu0 %v1781
    %1783 = vmatprep.subr.mxu0 0.0
    %v1784 = vand.u32 %v115, 4294901760
    %1785 = vmatpush1.msra.mxu0 %v1784
    %1786 = vmatprep.subr.mxu0 0.0
    %v1787 = vand.u32 %v114, 4294901760
    %1788 = vmatpush1.msra.mxu0 %v1787
    %1789 = vmatprep.subr.mxu0 0.0
    %v1790 = vand.u32 %v113, 4294901760
    %1791 = vmatpush1.msra.mxu0 %v1790
    %1792 = vmatprep.subr.mxu0 0.0
    %v1793 = vand.u32 %v112, 4294901760
    %1794 = vmatpush1.msra.mxu0 %v1793
    %1795 = vmatprep.subr.mxu0 0.0
    %v1796 = vand.u32 %v111, 4294901760
    %1797 = vmatpush1.msra.mxu0 %v1796
    %1798 = vmatprep.subr.mxu0 0.0
    %v1799 = vand.u32 %v110, 4294901760
    %1800 = vmatpush1.msra.mxu0 %v1799
    %1801 = vmatprep.subr.mxu0 0.0
    %v1802 = vand.u32 %v109, 4294901760
    %1803 = vmatpush1.msra.mxu0 %v1802
    %1804 = vmatprep.subr.mxu0 0.0
    %v1805 = vand.u32 %v108, 4294901760
    %1806 = vmatpush1.msra.mxu0 %v1805
    %1807 = vmatprep.subr.mxu0 0.0
    %v1808 = vand.u32 %v107, 4294901760
    %1809 = vmatpush1.msra.mxu0 %v1808
    %1810 = vmatprep.subr.mxu0 0.0
    %1811 = vmatpush2.msra.mxu0 0.0
    %1812 = vmatprep.subr.mxu0 0.0
    %1813 = vmatpush2.msra.mxu0 0.0
    %1814 = vmatprep.subr.mxu0 0.0
    %1815 = vmatpush2.msra.mxu0 0.0
    %1816 = vmatprep.subr.mxu0 0.0
    %1817 = vmatpush2.msra.mxu0 0.0
    %1818 = vmatprep.subr.mxu0 0.0
    %1819 = vmatpush2.msra.mxu0 0.0
    %1820 = vmatprep.subr.mxu0 0.0
    %1821 = vmatpush2.msra.mxu0 0.0
    %1822 = vmatprep.subr.mxu0 0.0
    %1823 = vmatpush2.msra.mxu0 0.0
    %1824 = vmatprep.subr.mxu0 0.0
    %1825 = vmatpush2.msra.mxu0 0.0
    %1826 = vmatprep.subr.mxu0 0.0
    %1827 = vmatpush2.msra.mxu0 0.0
    %1828 = vmatprep.subr.mxu0 0.0
    %1829 = vmatpush2.msra.mxu0 0.0
    %1830 = vmatprep.subr.mxu0 0.0
    %1831 = vmatpush2.msra.mxu0 0.0
    %1832 = vmatprep.subr.mxu0 0.0
    %1833 = vmatpush2.msra.mxu0 0.0
    %1834 = vmatprep.subr.mxu0 0.0
    %1835 = vmatpush2.msra.mxu0 0.0
    %1836 = vmatprep.subr.mxu0 0.0
    %1837 = vmatpush2.msra.mxu0 0.0
    %1838 = vmatprep.subr.mxu0 0.0
    %1839 = vmatpush2.msra.mxu0 0.0
    %1840 = vmatprep.subr.mxu0 0.0
    %1841 = vmatpush2.msra.mxu0 0.0
    %1842 = vmatprep.mubr.f32.mxu0 0.0
    %v1843 = vand.u32 %v1415, 4294901760
    %v1844 = vsub.f32 %v1415, %v1843
    %v1845 = vand.u32 %v1844, 4294901760
    %1846 = vmatmul.mubr.f32.gmra.mxu0 %v1845
    %v1847 = vpop.f32.mrf.mxu0
    %v1848 = vadd.f32 %v1759, %v1847
    %v1849 = vpop.f32.mrf.mxu0
    %1850 = vdwg.mxu0
    %1851 = vmatprep.subr.mxu0 0.0
    %v1852 = vand.u32 %v122, 4294901760
    %v1853 = vsub.f32 %v122, %v1852
    %v1854 = vand.u32 %v1853, 4294901760
    %1855 = vmatpush1.msra.mxu0 %v1854
    %1856 = vmatprep.subr.mxu0 0.0
    %v1857 = vand.u32 %v121, 4294901760
    %v1858 = vsub.f32 %v121, %v1857
    %v1859 = vand.u32 %v1858, 4294901760
    %1860 = vmatpush1.msra.mxu0 %v1859
    %1861 = vmatprep.subr.mxu0 0.0
    %v1862 = vand.u32 %v120, 4294901760
    %v1863 = vsub.f32 %v120, %v1862
    %v1864 = vand.u32 %v1863, 4294901760
    %1865 = vmatpush1.msra.mxu0 %v1864
    %1866 = vmatprep.subr.mxu0 0.0
    %v1867 = vand.u32 %v119, 4294901760
    %v1868 = vsub.f32 %v119, %v1867
    %v1869 = vand.u32 %v1868, 4294901760
    %1870 = vmatpush1.msra.mxu0 %v1869
    %1871 = vmatprep.subr.mxu0 0.0
    %v1872 = vand.u32 %v118, 4294901760
    %v1873 = vsub.f32 %v118, %v1872
    %v1874 = vand.u32 %v1873, 4294901760
    %1875 = vmatpush1.msra.mxu0 %v1874
    %1876 = vmatprep.subr.mxu0 0.0
    %v1877 = vand.u32 %v117, 4294901760
    %v1878 = vsub.f32 %v117, %v1877
    %v1879 = vand.u32 %v1878, 4294901760
    %1880 = vmatpush1.msra.mxu0 %v1879
    %1881 = vmatprep.subr.mxu0 0.0
    %v1882 = vand.u32 %v116, 4294901760
    %v1883 = vsub.f32 %v116, %v1882
    %v1884 = vand.u32 %v1883, 4294901760
    %1885 = vmatpush1.msra.mxu0 %v1884
    %1886 = vmatprep.subr.mxu0 0.0
    %v1887 = vand.u32 %v115, 4294901760
    %v1888 = vsub.f32 %v115, %v1887
    %v1889 = vand.u32 %v1888, 4294901760
    %1890 = vmatpush1.msra.mxu0 %v1889
    %1891 = vmatprep.subr.mxu0 0.0
    %v1892 = vand.u32 %v114, 4294901760
    %v1893 = vsub.f32 %v114, %v1892
    %v1894 = vand.u32 %v1893, 4294901760
    %1895 = vmatpush1.msra.mxu0 %v1894
    %1896 = vmatprep.subr.mxu0 0.0
    %v1897 = vand.u32 %v113, 4294901760
    %v1898 = vsub.f32 %v113, %v1897
    %v1899 = vand.u32 %v1898, 4294901760
    %1900 = vmatpush1.msra.mxu0 %v1899
    %1901 = vmatprep.subr.mxu0 0.0
    %v1902 = vand.u32 %v112, 4294901760
    %v1903 = vsub.f32 %v112, %v1902
    %v1904 = vand.u32 %v1903, 4294901760
    %1905 = vmatpush1.msra.mxu0 %v1904
    %1906 = vmatprep.subr.mxu0 0.0
    %v1907 = vand.u32 %v111, 4294901760
    %v1908 = vsub.f32 %v111, %v1907
    %v1909 = vand.u32 %v1908, 4294901760
    %1910 = vmatpush1.msra.mxu0 %v1909
    %1911 = vmatprep.subr.mxu0 0.0
    %v1912 = vand.u32 %v110, 4294901760
    %v1913 = vsub.f32 %v110, %v1912
    %v1914 = vand.u32 %v1913, 4294901760
    %1915 = vmatpush1.msra.mxu0 %v1914
    %1916 = vmatprep.subr.mxu0 0.0
    %v1917 = vand.u32 %v109, 4294901760
    %v1918 = vsub.f32 %v109, %v1917
    %v1919 = vand.u32 %v1918, 4294901760
    %1920 = vmatpush1.msra.mxu0 %v1919
    %1921 = vmatprep.subr.mxu0 0.0
    %v1922 = vand.u32 %v108, 4294901760
    %v1923 = vsub.f32 %v108, %v1922
    %v1924 = vand.u32 %v1923, 4294901760
    %1925 = vmatpush1.msra.mxu0 %v1924
    %1926 = vmatprep.subr.mxu0 0.0
    %v1927 = vand.u32 %v107, 4294901760
    %v1928 = vsub.f32 %v107, %v1927
    %v1929 = vand.u32 %v1928, 4294901760
    %1930 = vmatpush1.msra.mxu0 %v1929
    %1931 = vmatprep.subr.mxu0 0.0
    %1932 = vmatpush2.msra.mxu0 0.0
    %1933 = vmatprep.subr.mxu0 0.0
    %1934 = vmatpush2.msra.mxu0 0.0
    %1935 = vmatprep.subr.mxu0 0.0
    %1936 = vmatpush2.msra.mxu0 0.0
    %1937 = vmatprep.subr.mxu0 0.0
    %1938 = vmatpush2.msra.mxu0 0.0
    %1939 = vmatprep.subr.mxu0 0.0
    %1940 = vmatpush2.msra.mxu0 0.0
    %1941 = vmatprep.subr.mxu0 0.0
    %1942 = vmatpush2.msra.mxu0 0.0
    %1943 = vmatprep.subr.mxu0 0.0
    %1944 = vmatpush2.msra.mxu0 0.0
    %1945 = vmatprep.subr.mxu0 0.0
    %1946 = vmatpush2.msra.mxu0 0.0
    %1947 = vmatprep.subr.mxu0 0.0
    %1948 = vmatpush2.msra.mxu0 0.0
    %1949 = vmatprep.subr.mxu0 0.0
    %1950 = vmatpush2.msra.mxu0 0.0
    %1951 = vmatprep.subr.mxu0 0.0
    %1952 = vmatpush2.msra.mxu0 0.0
    %1953 = vmatprep.subr.mxu0 0.0
    %1954 = vmatpush2.msra.mxu0 0.0
    %1955 = vmatprep.subr.mxu0 0.0
    %1956 = vmatpush2.msra.mxu0 0.0
    %1957 = vmatprep.subr.mxu0 0.0
    %1958 = vmatpush2.msra.mxu0 0.0
    %1959 = vmatprep.subr.mxu0 0.0
    %1960 = vmatpush2.msra.mxu0 0.0
    %1961 = vmatprep.subr.mxu0 0.0
    %1962 = vmatpush2.msra.mxu0 0.0
    %1963 = vmatprep.mubr.f32.mxu0 0.0
    %v1964 = vand.u32 %v1415, 4294901760
    %1965 = vmatmul.mubr.f32.gmra.mxu0 %v1964
    %v1966 = vpop.f32.mrf.mxu0
    %v1967 = vadd.f32 %v1848, %v1966
    %v1968 = vpop.f32.mrf.mxu0
    %1969 = vdwg.mxu0
    %1970 = vmatprep.subr.mxu0 0.0
    %v1971 = vand.u32 %v122, 4294901760
    %1972 = vmatpush1.msra.mxu0 %v1971
    %1973 = vmatprep.subr.mxu0 0.0
    %v1974 = vand.u32 %v121, 4294901760
    %1975 = vmatpush1.msra.mxu0 %v1974
    %1976 = vmatprep.subr.mxu0 0.0
    %v1977 = vand.u32 %v120, 4294901760
    %1978 = vmatpush1.msra.mxu0 %v1977
    %1979 = vmatprep.subr.mxu0 0.0
    %v1980 = vand.u32 %v119, 4294901760
    %1981 = vmatpush1.msra.mxu0 %v1980
    %1982 = vmatprep.subr.mxu0 0.0
    %v1983 = vand.u32 %v118, 4294901760
    %1984 = vmatpush1.msra.mxu0 %v1983
    %1985 = vmatprep.subr.mxu0 0.0
    %v1986 = vand.u32 %v117, 4294901760
    %1987 = vmatpush1.msra.mxu0 %v1986
    %1988 = vmatprep.subr.mxu0 0.0
    %v1989 = vand.u32 %v116, 4294901760
    %1990 = vmatpush1.msra.mxu0 %v1989
    %1991 = vmatprep.subr.mxu0 0.0
    %v1992 = vand.u32 %v115, 4294901760
    %1993 = vmatpush1.msra.mxu0 %v1992
    %1994 = vmatprep.subr.mxu0 0.0
    %v1995 = vand.u32 %v114, 4294901760
    %1996 = vmatpush1.msra.mxu0 %v1995
    %1997 = vmatprep.subr.mxu0 0.0
    %v1998 = vand.u32 %v113, 4294901760
    %1999 = vmatpush1.msra.mxu0 %v1998
    %2000 = vmatprep.subr.mxu0 0.0
    %v2001 = vand.u32 %v112, 4294901760
    %2002 = vmatpush1.msra.mxu0 %v2001
    %2003 = vmatprep.subr.mxu0 0.0
    %v2004 = vand.u32 %v111, 4294901760
    %2005 = vmatpush1.msra.mxu0 %v2004
    %2006 = vmatprep.subr.mxu0 0.0
    %v2007 = vand.u32 %v110, 4294901760
    %2008 = vmatpush1.msra.mxu0 %v2007
    %2009 = vmatprep.subr.mxu0 0.0
    %v2010 = vand.u32 %v109, 4294901760
    %2011 = vmatpush1.msra.mxu0 %v2010
    %2012 = vmatprep.subr.mxu0 0.0
    %v2013 = vand.u32 %v108, 4294901760
    %2014 = vmatpush1.msra.mxu0 %v2013
    %2015 = vmatprep.subr.mxu0 0.0
    %v2016 = vand.u32 %v107, 4294901760
    %2017 = vmatpush1.msra.mxu0 %v2016
    %2018 = vmatprep.subr.mxu0 0.0
    %2019 = vmatpush2.msra.mxu0 0.0
    %2020 = vmatprep.subr.mxu0 0.0
    %2021 = vmatpush2.msra.mxu0 0.0
    %2022 = vmatprep.subr.mxu0 0.0
    %2023 = vmatpush2.msra.mxu0 0.0
    %2024 = vmatprep.subr.mxu0 0.0
    %2025 = vmatpush2.msra.mxu0 0.0
    %2026 = vmatprep.subr.mxu0 0.0
    %2027 = vmatpush2.msra.mxu0 0.0
    %2028 = vmatprep.subr.mxu0 0.0
    %2029 = vmatpush2.msra.mxu0 0.0
    %2030 = vmatprep.subr.mxu0 0.0
    %2031 = vmatpush2.msra.mxu0 0.0
    %2032 = vmatprep.subr.mxu0 0.0
    %2033 = vmatpush2.msra.mxu0 0.0
    %2034 = vmatprep.subr.mxu0 0.0
    %2035 = vmatpush2.msra.mxu0 0.0
    %2036 = vmatprep.subr.mxu0 0.0
    %2037 = vmatpush2.msra.mxu0 0.0
    %2038 = vmatprep.subr.mxu0 0.0
    %2039 = vmatpush2.msra.mxu0 0.0
    %2040 = vmatprep.subr.mxu0 0.0
    %2041 = vmatpush2.msra.mxu0 0.0
    %2042 = vmatprep.subr.mxu0 0.0
    %2043 = vmatpush2.msra.mxu0 0.0
    %2044 = vmatprep.subr.mxu0 0.0
    %2045 = vmatpush2.msra.mxu0 0.0
    %2046 = vmatprep.subr.mxu0 0.0
    %2047 = vmatpush2.msra.mxu0 0.0
    %2048 = vmatprep.subr.mxu0 0.0
    %2049 = vmatpush2.msra.mxu0 0.0
    %2050 = vmatprep.mubr.f32.mxu0 0.0
    %v2051 = vand.u32 %v1415, 4294901760
    %2052 = vmatmul.mubr.f32.gmra.mxu0 %v2051
    %v2053 = vpop.f32.mrf.mxu0
    %v2054 = vadd.f32 %v1967, %v2053
    %v2055 = vpop.f32.mrf.mxu0
    %2056 = vdwg.mxu0
    %v2057 = vrcp.pop %v2054
    %v2058 = vmul.f32 %v1415, %v2057
    %2059 = vmatprep.subr.mxu0 0.0
    %v2060 = vand.u32 %v106, 4294901760
    %2061 = vmatpush1.msra.mxu0 %v2060
    %2062 = vmatprep.subr.mxu0 0.0
    %v2063 = vand.u32 %v105, 4294901760
    %2064 = vmatpush1.msra.mxu0 %v2063
    %2065 = vmatprep.subr.mxu0 0.0
    %v2066 = vand.u32 %v104, 4294901760
    %2067 = vmatpush1.msra.mxu0 %v2066
    %2068 = vmatprep.subr.mxu0 0.0
    %v2069 = vand.u32 %v103, 4294901760
    %2070 = vmatpush1.msra.mxu0 %v2069
    %2071 = vmatprep.subr.mxu0 0.0
    %v2072 = vand.u32 %v102, 4294901760
    %2073 = vmatpush1.msra.mxu0 %v2072
    %2074 = vmatprep.subr.mxu0 0.0
    %v2075 = vand.u32 %v101, 4294901760
    %2076 = vmatpush1.msra.mxu0 %v2075
    %2077 = vmatprep.subr.mxu0 0.0
    %v2078 = vand.u32 %v100, 4294901760
    %2079 = vmatpush1.msra.mxu0 %v2078
    %2080 = vmatprep.subr.mxu0 0.0
    %v2081 = vand.u32 %v99, 4294901760
    %2082 = vmatpush1.msra.mxu0 %v2081
    %2083 = vmatprep.subr.mxu0 0.0
    %v2084 = vand.u32 %v98, 4294901760
    %2085 = vmatpush1.msra.mxu0 %v2084
    %2086 = vmatprep.subr.mxu0 0.0
    %v2087 = vand.u32 %v97, 4294901760
    %2088 = vmatpush1.msra.mxu0 %v2087
    %2089 = vmatprep.subr.mxu0 0.0
    %v2090 = vand.u32 %v96, 4294901760
    %2091 = vmatpush1.msra.mxu0 %v2090
    %2092 = vmatprep.subr.mxu0 0.0
    %v2093 = vand.u32 %v95, 4294901760
    %2094 = vmatpush1.msra.mxu0 %v2093
    %2095 = vmatprep.subr.mxu0 0.0
    %v2096 = vand.u32 %v94, 4294901760
    %2097 = vmatpush1.msra.mxu0 %v2096
    %2098 = vmatprep.subr.mxu0 0.0
    %v2099 = vand.u32 %v93, 4294901760
    %2100 = vmatpush1.msra.mxu0 %v2099
    %2101 = vmatprep.subr.mxu0 0.0
    %v2102 = vand.u32 %v92, 4294901760
    %2103 = vmatpush1.msra.mxu0 %v2102
    %2104 = vmatprep.subr.mxu0 0.0
    %v2105 = vand.u32 %v91, 4294901760
    %2106 = vmatpush1.msra.mxu0 %v2105
    %2107 = vmatprep.subr.mxu0 0.0
    %2108 = vmatpush2.msra.mxu0 0.0
    %2109 = vmatprep.subr.mxu0 0.0
    %2110 = vmatpush2.msra.mxu0 0.0
    %2111 = vmatprep.subr.mxu0 0.0
    %2112 = vmatpush2.msra.mxu0 0.0
    %2113 = vmatprep.subr.mxu0 0.0
    %2114 = vmatpush2.msra.mxu0 0.0
    %2115 = vmatprep.subr.mxu0 0.0
    %2116 = vmatpush2.msra.mxu0 0.0
    %2117 = vmatprep.subr.mxu0 0.0
    %2118 = vmatpush2.msra.mxu0 0.0
    %2119 = vmatprep.subr.mxu0 0.0
    %2120 = vmatpush2.msra.mxu0 0.0
    %2121 = vmatprep.subr.mxu0 0.0
    %2122 = vmatpush2.msra.mxu0 0.0
    %2123 = vmatprep.subr.mxu0 0.0
    %2124 = vmatpush2.msra.mxu0 0.0
    %2125 = vmatprep.subr.mxu0 0.0
    %2126 = vmatpush2.msra.mxu0 0.0
    %2127 = vmatprep.subr.mxu0 0.0
    %2128 = vmatpush2.msra.mxu0 0.0
    %2129 = vmatprep.subr.mxu0 0.0
    %2130 = vmatpush2.msra.mxu0 0.0
    %2131 = vmatprep.subr.mxu0 0.0
    %2132 = vmatpush2.msra.mxu0 0.0
    %2133 = vmatprep.subr.mxu0 0.0
    %2134 = vmatpush2.msra.mxu0 0.0
    %2135 = vmatprep.subr.mxu0 0.0
    %2136 = vmatpush2.msra.mxu0 0.0
    %2137 = vmatprep.subr.mxu0 0.0
    %2138 = vmatpush2.msra.mxu0 0.0
    %2139 = vmatprep.mubr.f32.mxu0 0.0
    %v2140 = vand.u32 %v2058, 4294901760
    %v2141 = vsub.f32 %v2058, %v2140
    %v2142 = vand.u32 %v2141, 4294901760
    %v2143 = vsub.f32 %v2141, %v2142
    %v2144 = vand.u32 %v2143, 4294901760
    %2145 = vmatmul.mubr.f32.gmra.mxu0 %v2144
    %v2146 = vpop.f32.mrf.mxu0
    %v2147 = vadd.f32 %v129, %v2146
    %v2148 = vpop.f32.mrf.mxu0
    %2149 = vdwg.mxu0
    %2150 = vmatprep.subr.mxu0 0.0
    %v2151 = vand.u32 %v106, 4294901760
    %v2152 = vsub.f32 %v106, %v2151
    %v2153 = vand.u32 %v2152, 4294901760
    %v2154 = vsub.f32 %v2152, %v2153
    %v2155 = vand.u32 %v2154, 4294901760
    %2156 = vmatpush1.msra.mxu0 %v2155
    %2157 = vmatprep.subr.mxu0 0.0
    %v2158 = vand.u32 %v105, 4294901760
    %v2159 = vsub.f32 %v105, %v2158
    %v2160 = vand.u32 %v2159, 4294901760
    %v2161 = vsub.f32 %v2159, %v2160
    %v2162 = vand.u32 %v2161, 4294901760
    %2163 = vmatpush1.msra.mxu0 %v2162
    %2164 = vmatprep.subr.mxu0 0.0
    %v2165 = vand.u32 %v104, 4294901760
    %v2166 = vsub.f32 %v104, %v2165
    %v2167 = vand.u32 %v2166, 4294901760
    %v2168 = vsub.f32 %v2166, %v2167
    %v2169 = vand.u32 %v2168, 4294901760
    %2170 = vmatpush1.msra.mxu0 %v2169
    %2171 = vmatprep.subr.mxu0 0.0
    %v2172 = vand.u32 %v103, 4294901760
    %v2173 = vsub.f32 %v103, %v2172
    %v2174 = vand.u32 %v2173, 4294901760
    %v2175 = vsub.f32 %v2173, %v2174
    %v2176 = vand.u32 %v2175, 4294901760
    %2177 = vmatpush1.msra.mxu0 %v2176
    %2178 = vmatprep.subr.mxu0 0.0
    %v2179 = vand.u32 %v102, 4294901760
    %v2180 = vsub.f32 %v102, %v2179
    %v2181 = vand.u32 %v2180, 4294901760
    %v2182 = vsub.f32 %v2180, %v2181
    %v2183 = vand.u32 %v2182, 4294901760
    %2184 = vmatpush1.msra.mxu0 %v2183
    %2185 = vmatprep.subr.mxu0 0.0
    %v2186 = vand.u32 %v101, 4294901760
    %v2187 = vsub.f32 %v101, %v2186
    %v2188 = vand.u32 %v2187, 4294901760
    %v2189 = vsub.f32 %v2187, %v2188
    %v2190 = vand.u32 %v2189, 4294901760
    %2191 = vmatpush1.msra.mxu0 %v2190
    %2192 = vmatprep.subr.mxu0 0.0
    %v2193 = vand.u32 %v100, 4294901760
    %v2194 = vsub.f32 %v100, %v2193
    %v2195 = vand.u32 %v2194, 4294901760
    %v2196 = vsub.f32 %v2194, %v2195
    %v2197 = vand.u32 %v2196, 4294901760
    %2198 = vmatpush1.msra.mxu0 %v2197
    %2199 = vmatprep.subr.mxu0 0.0
    %v2200 = vand.u32 %v99, 4294901760
    %v2201 = vsub.f32 %v99, %v2200
    %v2202 = vand.u32 %v2201, 4294901760
    %v2203 = vsub.f32 %v2201, %v2202
    %v2204 = vand.u32 %v2203, 4294901760
    %2205 = vmatpush1.msra.mxu0 %v2204
    %2206 = vmatprep.subr.mxu0 0.0
    %v2207 = vand.u32 %v98, 4294901760
    %v2208 = vsub.f32 %v98, %v2207
    %v2209 = vand.u32 %v2208, 4294901760
    %v2210 = vsub.f32 %v2208, %v2209
    %v2211 = vand.u32 %v2210, 4294901760
    %2212 = vmatpush1.msra.mxu0 %v2211
    %2213 = vmatprep.subr.mxu0 0.0
    %v2214 = vand.u32 %v97, 4294901760
    %v2215 = vsub.f32 %v97, %v2214
    %v2216 = vand.u32 %v2215, 4294901760
    %v2217 = vsub.f32 %v2215, %v2216
    %v2218 = vand.u32 %v2217, 4294901760
    %2219 = vmatpush1.msra.mxu0 %v2218
    %2220 = vmatprep.subr.mxu0 0.0
    %v2221 = vand.u32 %v96, 4294901760
    %v2222 = vsub.f32 %v96, %v2221
    %v2223 = vand.u32 %v2222, 4294901760
    %v2224 = vsub.f32 %v2222, %v2223
    %v2225 = vand.u32 %v2224, 4294901760
    %2226 = vmatpush1.msra.mxu0 %v2225
    %2227 = vmatprep.subr.mxu0 0.0
    %v2228 = vand.u32 %v95, 4294901760
    %v2229 = vsub.f32 %v95, %v2228
    %v2230 = vand.u32 %v2229, 4294901760
    %v2231 = vsub.f32 %v2229, %v2230
    %v2232 = vand.u32 %v2231, 4294901760
    %2233 = vmatpush1.msra.mxu0 %v2232
    %2234 = vmatprep.subr.mxu0 0.0
    %v2235 = vand.u32 %v94, 4294901760
    %v2236 = vsub.f32 %v94, %v2235
    %v2237 = vand.u32 %v2236, 4294901760
    %v2238 = vsub.f32 %v2236, %v2237
    %v2239 = vand.u32 %v2238, 4294901760
    %2240 = vmatpush1.msra.mxu0 %v2239
    %2241 = vmatprep.subr.mxu0 0.0
    %v2242 = vand.u32 %v93, 4294901760
    %v2243 = vsub.f32 %v93, %v2242
    %v2244 = vand.u32 %v2243, 4294901760
    %v2245 = vsub.f32 %v2243, %v2244
    %v2246 = vand.u32 %v2245, 4294901760
    %2247 = vmatpush1.msra.mxu0 %v2246
    %2248 = vmatprep.subr.mxu0 0.0
    %v2249 = vand.u32 %v92, 4294901760
    %v2250 = vsub.f32 %v92, %v2249
    %v2251 = vand.u32 %v2250, 4294901760
    %v2252 = vsub.f32 %v2250, %v2251
    %v2253 = vand.u32 %v2252, 4294901760
    %2254 = vmatpush1.msra.mxu0 %v2253
    %2255 = vmatprep.subr.mxu0 0.0
    %v2256 = vand.u32 %v91, 4294901760
    %v2257 = vsub.f32 %v91, %v2256
    %v2258 = vand.u32 %v2257, 4294901760
    %v2259 = vsub.f32 %v2257, %v2258
    %v2260 = vand.u32 %v2259, 4294901760
    %2261 = vmatpush1.msra.mxu0 %v2260
    %2262 = vmatprep.subr.mxu0 0.0
    %2263 = vmatpush2.msra.mxu0 0.0
    %2264 = vmatprep.subr.mxu0 0.0
    %2265 = vmatpush2.msra.mxu0 0.0
    %2266 = vmatprep.subr.mxu0 0.0
    %2267 = vmatpush2.msra.mxu0 0.0
    %2268 = vmatprep.subr.mxu0 0.0
    %2269 = vmatpush2.msra.mxu0 0.0
    %2270 = vmatprep.subr.mxu0 0.0
    %2271 = vmatpush2.msra.mxu0 0.0
    %2272 = vmatprep.subr.mxu0 0.0
    %2273 = vmatpush2.msra.mxu0 0.0
    %2274 = vmatprep.subr.mxu0 0.0
    %2275 = vmatpush2.msra.mxu0 0.0
    %2276 = vmatprep.subr.mxu0 0.0
    %2277 = vmatpush2.msra.mxu0 0.0
    %2278 = vmatprep.subr.mxu0 0.0
    %2279 = vmatpush2.msra.mxu0 0.0
    %2280 = vmatprep.subr.mxu0 0.0
    %2281 = vmatpush2.msra.mxu0 0.0
    %2282 = vmatprep.subr.mxu0 0.0
    %2283 = vmatpush2.msra.mxu0 0.0
    %2284 = vmatprep.subr.mxu0 0.0
    %2285 = vmatpush2.msra.mxu0 0.0
    %2286 = vmatprep.subr.mxu0 0.0
    %2287 = vmatpush2.msra.mxu0 0.0
    %2288 = vmatprep.subr.mxu0 0.0
    %2289 = vmatpush2.msra.mxu0 0.0
    %2290 = vmatprep.subr.mxu0 0.0
    %2291 = vmatpush2.msra.mxu0 0.0
    %2292 = vmatprep.subr.mxu0 0.0
    %2293 = vmatpush2.msra.mxu0 0.0
    %2294 = vmatprep.mubr.f32.mxu0 0.0
    %v2295 = vand.u32 %v2058, 4294901760
    %2296 = vmatmul.mubr.f32.gmra.mxu0 %v2295
    %v2297 = vpop.f32.mrf.mxu0
    %v2298 = vadd.f32 %v2147, %v2297
    %v2299 = vpop.f32.mrf.mxu0
    %2300 = vdwg.mxu0
    %2301 = vmatprep.subr.mxu0 0.0
    %v2302 = vand.u32 %v106, 4294901760
    %v2303 = vsub.f32 %v106, %v2302
    %2304 = vmatpush1.msra.mxu0 %v2303
    %2305 = vmatprep.subr.mxu0 0.0
    %v2306 = vand.u32 %v105, 4294901760
    %v2307 = vsub.f32 %v105, %v2306
    %2308 = vmatpush1.msra.mxu0 %v2307
    %2309 = vmatprep.subr.mxu0 0.0
    %v2310 = vand.u32 %v104, 4294901760
    %v2311 = vsub.f32 %v104, %v2310
    %2312 = vmatpush1.msra.mxu0 %v2311
    %2313 = vmatprep.subr.mxu0 0.0
    %v2314 = vand.u32 %v103, 4294901760
    %v2315 = vsub.f32 %v103, %v2314
    %2316 = vmatpush1.msra.mxu0 %v2315
    %2317 = vmatprep.subr.mxu0 0.0
    %v2318 = vand.u32 %v102, 4294901760
    %v2319 = vsub.f32 %v102, %v2318
    %2320 = vmatpush1.msra.mxu0 %v2319
    %2321 = vmatprep.subr.mxu0 0.0
    %v2322 = vand.u32 %v101, 4294901760
    %v2323 = vsub.f32 %v101, %v2322
    %2324 = vmatpush1.msra.mxu0 %v2323
    %2325 = vmatprep.subr.mxu0 0.0
    %v2326 = vand.u32 %v100, 4294901760
    %v2327 = vsub.f32 %v100, %v2326
    %2328 = vmatpush1.msra.mxu0 %v2327
    %2329 = vmatprep.subr.mxu0 0.0
    %v2330 = vand.u32 %v99, 4294901760
    %v2331 = vsub.f32 %v99, %v2330
    %2332 = vmatpush1.msra.mxu0 %v2331
    %2333 = vmatprep.subr.mxu0 0.0
    %v2334 = vand.u32 %v98, 4294901760
    %v2335 = vsub.f32 %v98, %v2334
    %2336 = vmatpush1.msra.mxu0 %v2335
    %2337 = vmatprep.subr.mxu0 0.0
    %v2338 = vand.u32 %v97, 4294901760
    %v2339 = vsub.f32 %v97, %v2338
    %2340 = vmatpush1.msra.mxu0 %v2339
    %2341 = vmatprep.subr.mxu0 0.0
    %v2342 = vand.u32 %v96, 4294901760
    %v2343 = vsub.f32 %v96, %v2342
    %2344 = vmatpush1.msra.mxu0 %v2343
    %2345 = vmatprep.subr.mxu0 0.0
    %v2346 = vand.u32 %v95, 4294901760
    %v2347 = vsub.f32 %v95, %v2346
    %2348 = vmatpush1.msra.mxu0 %v2347
    %2349 = vmatprep.subr.mxu0 0.0
    %v2350 = vand.u32 %v94, 4294901760
    %v2351 = vsub.f32 %v94, %v2350
    %2352 = vmatpush1.msra.mxu0 %v2351
    %2353 = vmatprep.subr.mxu0 0.0
    %v2354 = vand.u32 %v93, 4294901760
    %v2355 = vsub.f32 %v93, %v2354
    %2356 = vmatpush1.msra.mxu0 %v2355
    %2357 = vmatprep.subr.mxu0 0.0
    %v2358 = vand.u32 %v92, 4294901760
    %v2359 = vsub.f32 %v92, %v2358
    %2360 = vmatpush1.msra.mxu0 %v2359
    %2361 = vmatprep.subr.mxu0 0.0
    %v2362 = vand.u32 %v91, 4294901760
    %v2363 = vsub.f32 %v91, %v2362
    %2364 = vmatpush1.msra.mxu0 %v2363
    %2365 = vmatprep.subr.mxu0 0.0
    %2366 = vmatpush2.msra.mxu0 0.0
    %2367 = vmatprep.subr.mxu0 0.0
    %2368 = vmatpush2.msra.mxu0 0.0
    %2369 = vmatprep.subr.mxu0 0.0
    %2370 = vmatpush2.msra.mxu0 0.0
    %2371 = vmatprep.subr.mxu0 0.0
    %2372 = vmatpush2.msra.mxu0 0.0
    %2373 = vmatprep.subr.mxu0 0.0
    %2374 = vmatpush2.msra.mxu0 0.0
    %2375 = vmatprep.subr.mxu0 0.0
    %2376 = vmatpush2.msra.mxu0 0.0
    %2377 = vmatprep.subr.mxu0 0.0
    %2378 = vmatpush2.msra.mxu0 0.0
    %2379 = vmatprep.subr.mxu0 0.0
    %2380 = vmatpush2.msra.mxu0 0.0
    %2381 = vmatprep.subr.mxu0 0.0
    %2382 = vmatpush2.msra.mxu0 0.0
    %2383 = vmatprep.subr.mxu0 0.0
    %2384 = vmatpush2.msra.mxu0 0.0
    %2385 = vmatprep.subr.mxu0 0.0
    %2386 = vmatpush2.msra.mxu0 0.0
    %2387 = vmatprep.subr.mxu0 0.0
    %2388 = vmatpush2.msra.mxu0 0.0
    %2389 = vmatprep.subr.mxu0 0.0
    %2390 = vmatpush2.msra.mxu0 0.0
    %2391 = vmatprep.subr.mxu0 0.0
    %2392 = vmatpush2.msra.mxu0 0.0
    %2393 = vmatprep.subr.mxu0 0.0
    %2394 = vmatpush2.msra.mxu0 0.0
    %2395 = vmatprep.subr.mxu0 0.0
    %2396 = vmatpush2.msra.mxu0 0.0
    %2397 = vmatprep.mubr.f32.mxu0 0.0
    %v2398 = vand.u32 %v2058, 4294901760
    %v2399 = vsub.f32 %v2058, %v2398
    %2400 = vmatmul.mubr.f32.gmra.mxu0 %v2399
    %v2401 = vpop.f32.mrf.mxu0
    %v2402 = vadd.f32 %v2298, %v2401
    %v2403 = vpop.f32.mrf.mxu0
    %2404 = vdwg.mxu0
    %2405 = vmatprep.subr.mxu0 0.0
    %v2406 = vand.u32 %v106, 4294901760
    %2407 = vmatpush1.msra.mxu0 %v2406
    %2408 = vmatprep.subr.mxu0 0.0
    %v2409 = vand.u32 %v105, 4294901760
    %2410 = vmatpush1.msra.mxu0 %v2409
    %2411 = vmatprep.subr.mxu0 0.0
    %v2412 = vand.u32 %v104, 4294901760
    %2413 = vmatpush1.msra.mxu0 %v2412
    %2414 = vmatprep.subr.mxu0 0.0
    %v2415 = vand.u32 %v103, 4294901760
    %2416 = vmatpush1.msra.mxu0 %v2415
    %2417 = vmatprep.subr.mxu0 0.0
    %v2418 = vand.u32 %v102, 4294901760
    %2419 = vmatpush1.msra.mxu0 %v2418
    %2420 = vmatprep.subr.mxu0 0.0
    %v2421 = vand.u32 %v101, 4294901760
    %2422 = vmatpush1.msra.mxu0 %v2421
    %2423 = vmatprep.subr.mxu0 0.0
    %v2424 = vand.u32 %v100, 4294901760
    %2425 = vmatpush1.msra.mxu0 %v2424
    %2426 = vmatprep.subr.mxu0 0.0
    %v2427 = vand.u32 %v99, 4294901760
    %2428 = vmatpush1.msra.mxu0 %v2427
    %2429 = vmatprep.subr.mxu0 0.0
    %v2430 = vand.u32 %v98, 4294901760
    %2431 = vmatpush1.msra.mxu0 %v2430
    %2432 = vmatprep.subr.mxu0 0.0
    %v2433 = vand.u32 %v97, 4294901760
    %2434 = vmatpush1.msra.mxu0 %v2433
    %2435 = vmatprep.subr.mxu0 0.0
    %v2436 = vand.u32 %v96, 4294901760
    %2437 = vmatpush1.msra.mxu0 %v2436
    %2438 = vmatprep.subr.mxu0 0.0
    %v2439 = vand.u32 %v95, 4294901760
    %2440 = vmatpush1.msra.mxu0 %v2439
    %2441 = vmatprep.subr.mxu0 0.0
    %v2442 = vand.u32 %v94, 4294901760
    %2443 = vmatpush1.msra.mxu0 %v2442
    %2444 = vmatprep.subr.mxu0 0.0
    %v2445 = vand.u32 %v93, 4294901760
    %2446 = vmatpush1.msra.mxu0 %v2445
    %2447 = vmatprep.subr.mxu0 0.0
    %v2448 = vand.u32 %v92, 4294901760
    %2449 = vmatpush1.msra.mxu0 %v2448
    %2450 = vmatprep.subr.mxu0 0.0
    %v2451 = vand.u32 %v91, 4294901760
    %2452 = vmatpush1.msra.mxu0 %v2451
    %2453 = vmatprep.subr.mxu0 0.0
    %2454 = vmatpush2.msra.mxu0 0.0
    %2455 = vmatprep.subr.mxu0 0.0
    %2456 = vmatpush2.msra.mxu0 0.0
    %2457 = vmatprep.subr.mxu0 0.0
    %2458 = vmatpush2.msra.mxu0 0.0
    %2459 = vmatprep.subr.mxu0 0.0
    %2460 = vmatpush2.msra.mxu0 0.0
    %2461 = vmatprep.subr.mxu0 0.0
    %2462 = vmatpush2.msra.mxu0 0.0
    %2463 = vmatprep.subr.mxu0 0.0
    %2464 = vmatpush2.msra.mxu0 0.0
    %2465 = vmatprep.subr.mxu0 0.0
    %2466 = vmatpush2.msra.mxu0 0.0
    %2467 = vmatprep.subr.mxu0 0.0
    %2468 = vmatpush2.msra.mxu0 0.0
    %2469 = vmatprep.subr.mxu0 0.0
    %2470 = vmatpush2.msra.mxu0 0.0
    %2471 = vmatprep.subr.mxu0 0.0
    %2472 = vmatpush2.msra.mxu0 0.0
    %2473 = vmatprep.subr.mxu0 0.0
    %2474 = vmatpush2.msra.mxu0 0.0
    %2475 = vmatprep.subr.mxu0 0.0
    %2476 = vmatpush2.msra.mxu0 0.0
    %2477 = vmatprep.subr.mxu0 0.0
    %2478 = vmatpush2.msra.mxu0 0.0
    %2479 = vmatprep.subr.mxu0 0.0
    %2480 = vmatpush2.msra.mxu0 0.0
    %2481 = vmatprep.subr.mxu0 0.0
    %2482 = vmatpush2.msra.mxu0 0.0
    %2483 = vmatprep.subr.mxu0 0.0
    %2484 = vmatpush2.msra.mxu0 0.0
    %2485 = vmatprep.mubr.f32.mxu0 0.0
    %v2486 = vand.u32 %v2058, 4294901760
    %v2487 = vsub.f32 %v2058, %v2486
    %v2488 = vand.u32 %v2487, 4294901760
    %2489 = vmatmul.mubr.f32.gmra.mxu0 %v2488
    %v2490 = vpop.f32.mrf.mxu0
    %v2491 = vadd.f32 %v2402, %v2490
    %v2492 = vpop.f32.mrf.mxu0
    %2493 = vdwg.mxu0
    %2494 = vmatprep.subr.mxu0 0.0
    %v2495 = vand.u32 %v106, 4294901760
    %v2496 = vsub.f32 %v106, %v2495
    %v2497 = vand.u32 %v2496, 4294901760
    %2498 = vmatpush1.msra.mxu0 %v2497
    %2499 = vmatprep.subr.mxu0 0.0
    %v2500 = vand.u32 %v105, 4294901760
    %v2501 = vsub.f32 %v105, %v2500
    %v2502 = vand.u32 %v2501, 4294901760
    %2503 = vmatpush1.msra.mxu0 %v2502
    %2504 = vmatprep.subr.mxu0 0.0
    %v2505 = vand.u32 %v104, 4294901760
    %v2506 = vsub.f32 %v104, %v2505
    %v2507 = vand.u32 %v2506, 4294901760
    %2508 = vmatpush1.msra.mxu0 %v2507
    %2509 = vmatprep.subr.mxu0 0.0
    %v2510 = vand.u32 %v103, 4294901760
    %v2511 = vsub.f32 %v103, %v2510
    %v2512 = vand.u32 %v2511, 4294901760
    %2513 = vmatpush1.msra.mxu0 %v2512
    %2514 = vmatprep.subr.mxu0 0.0
    %v2515 = vand.u32 %v102, 4294901760
    %v2516 = vsub.f32 %v102, %v2515
    %v2517 = vand.u32 %v2516, 4294901760
    %2518 = vmatpush1.msra.mxu0 %v2517
    %2519 = vmatprep.subr.mxu0 0.0
    %v2520 = vand.u32 %v101, 4294901760
    %v2521 = vsub.f32 %v101, %v2520
    %v2522 = vand.u32 %v2521, 4294901760
    %2523 = vmatpush1.msra.mxu0 %v2522
    %2524 = vmatprep.subr.mxu0 0.0
    %v2525 = vand.u32 %v100, 4294901760
    %v2526 = vsub.f32 %v100, %v2525
    %v2527 = vand.u32 %v2526, 4294901760
    %2528 = vmatpush1.msra.mxu0 %v2527
    %2529 = vmatprep.subr.mxu0 0.0
    %v2530 = vand.u32 %v99, 4294901760
    %v2531 = vsub.f32 %v99, %v2530
    %v2532 = vand.u32 %v2531, 4294901760
    %2533 = vmatpush1.msra.mxu0 %v2532
    %2534 = vmatprep.subr.mxu0 0.0
    %v2535 = vand.u32 %v98, 4294901760
    %v2536 = vsub.f32 %v98, %v2535
    %v2537 = vand.u32 %v2536, 4294901760
    %2538 = vmatpush1.msra.mxu0 %v2537
    %2539 = vmatprep.subr.mxu0 0.0
    %v2540 = vand.u32 %v97, 4294901760
    %v2541 = vsub.f32 %v97, %v2540
    %v2542 = vand.u32 %v2541, 4294901760
    %2543 = vmatpush1.msra.mxu0 %v2542
    %2544 = vmatprep.subr.mxu0 0.0
    %v2545 = vand.u32 %v96, 4294901760
    %v2546 = vsub.f32 %v96, %v2545
    %v2547 = vand.u32 %v2546, 4294901760
    %2548 = vmatpush1.msra.mxu0 %v2547
    %2549 = vmatprep.subr.mxu0 0.0
    %v2550 = vand.u32 %v95, 4294901760
    %v2551 = vsub.f32 %v95, %v2550
    %v2552 = vand.u32 %v2551, 4294901760
    %2553 = vmatpush1.msra.mxu0 %v2552
    %2554 = vmatprep.subr.mxu0 0.0
    %v2555 = vand.u32 %v94, 4294901760
    %v2556 = vsub.f32 %v94, %v2555
    %v2557 = vand.u32 %v2556, 4294901760
    %2558 = vmatpush1.msra.mxu0 %v2557
    %2559 = vmatprep.subr.mxu0 0.0
    %v2560 = vand.u32 %v93, 4294901760
    %v2561 = vsub.f32 %v93, %v2560
    %v2562 = vand.u32 %v2561, 4294901760
    %2563 = vmatpush1.msra.mxu0 %v2562
    %2564 = vmatprep.subr.mxu0 0.0
    %v2565 = vand.u32 %v92, 4294901760
    %v2566 = vsub.f32 %v92, %v2565
    %v2567 = vand.u32 %v2566, 4294901760
    %2568 = vmatpush1.msra.mxu0 %v2567
    %2569 = vmatprep.subr.mxu0 0.0
    %v2570 = vand.u32 %v91, 4294901760
    %v2571 = vsub.f32 %v91, %v2570
    %v2572 = vand.u32 %v2571, 4294901760
    %2573 = vmatpush1.msra.mxu0 %v2572
    %2574 = vmatprep.subr.mxu0 0.0
    %2575 = vmatpush2.msra.mxu0 0.0
    %2576 = vmatprep.subr.mxu0 0.0
    %2577 = vmatpush2.msra.mxu0 0.0
    %2578 = vmatprep.subr.mxu0 0.0
    %2579 = vmatpush2.msra.mxu0 0.0
    %2580 = vmatprep.subr.mxu0 0.0
    %2581 = vmatpush2.msra.mxu0 0.0
    %2582 = vmatprep.subr.mxu0 0.0
    %2583 = vmatpush2.msra.mxu0 0.0
    %2584 = vmatprep.subr.mxu0 0.0
    %2585 = vmatpush2.msra.mxu0 0.0
    %2586 = vmatprep.subr.mxu0 0.0
    %2587 = vmatpush2.msra.mxu0 0.0
    %2588 = vmatprep.subr.mxu0 0.0
    %2589 = vmatpush2.msra.mxu0 0.0
    %2590 = vmatprep.subr.mxu0 0.0
    %2591 = vmatpush2.msra.mxu0 0.0
    %2592 = vmatprep.subr.mxu0 0.0
    %2593 = vmatpush2.msra.mxu0 0.0
    %2594 = vmatprep.subr.mxu0 0.0
    %2595 = vmatpush2.msra.mxu0 0.0
    %2596 = vmatprep.subr.mxu0 0.0
    %2597 = vmatpush2.msra.mxu0 0.0
    %2598 = vmatprep.subr.mxu0 0.0
    %2599 = vmatpush2.msra.mxu0 0.0
    %2600 = vmatprep.subr.mxu0 0.0
    %2601 = vmatpush2.msra.mxu0 0.0
    %2602 = vmatprep.subr.mxu0 0.0
    %2603 = vmatpush2.msra.mxu0 0.0
    %2604 = vmatprep.subr.mxu0 0.0
    %2605 = vmatpush2.msra.mxu0 0.0
    %2606 = vmatprep.mubr.f32.mxu0 0.0
    %v2607 = vand.u32 %v2058, 4294901760
    %2608 = vmatmul.mubr.f32.gmra.mxu0 %v2607
    %v2609 = vpop.f32.mrf.mxu0
    %v2610 = vadd.f32 %v2491, %v2609
    %v2611 = vpop.f32.mrf.mxu0
    %2612 = vdwg.mxu0
    %2613 = vmatprep.subr.mxu0 0.0
    %v2614 = vand.u32 %v106, 4294901760
    %2615 = vmatpush1.msra.mxu0 %v2614
    %2616 = vmatprep.subr.mxu0 0.0
    %v2617 = vand.u32 %v105, 4294901760
    %2618 = vmatpush1.msra.mxu0 %v2617
    %2619 = vmatprep.subr.mxu0 0.0
    %v2620 = vand.u32 %v104, 4294901760
    %2621 = vmatpush1.msra.mxu0 %v2620
    %2622 = vmatprep.subr.mxu0 0.0
    %v2623 = vand.u32 %v103, 4294901760
    %2624 = vmatpush1.msra.mxu0 %v2623
    %2625 = vmatprep.subr.mxu0 0.0
    %v2626 = vand.u32 %v102, 4294901760
    %2627 = vmatpush1.msra.mxu0 %v2626
    %2628 = vmatprep.subr.mxu0 0.0
    %v2629 = vand.u32 %v101, 4294901760
    %2630 = vmatpush1.msra.mxu0 %v2629
    %2631 = vmatprep.subr.mxu0 0.0
    %v2632 = vand.u32 %v100, 4294901760
    %2633 = vmatpush1.msra.mxu0 %v2632
    %2634 = vmatprep.subr.mxu0 0.0
    %v2635 = vand.u32 %v99, 4294901760
    %2636 = vmatpush1.msra.mxu0 %v2635
    %2637 = vmatprep.subr.mxu0 0.0
    %v2638 = vand.u32 %v98, 4294901760
    %2639 = vmatpush1.msra.mxu0 %v2638
    %2640 = vmatprep.subr.mxu0 0.0
    %v2641 = vand.u32 %v97, 4294901760
    %2642 = vmatpush1.msra.mxu0 %v2641
    %2643 = vmatprep.subr.mxu0 0.0
    %v2644 = vand.u32 %v96, 4294901760
    %2645 = vmatpush1.msra.mxu0 %v2644
    %2646 = vmatprep.subr.mxu0 0.0
    %v2647 = vand.u32 %v95, 4294901760
    %2648 = vmatpush1.msra.mxu0 %v2647
    %2649 = vmatprep.subr.mxu0 0.0
    %v2650 = vand.u32 %v94, 4294901760
    %2651 = vmatpush1.msra.mxu0 %v2650
    %2652 = vmatprep.subr.mxu0 0.0
    %v2653 = vand.u32 %v93, 4294901760
    %2654 = vmatpush1.msra.mxu0 %v2653
    %2655 = vmatprep.subr.mxu0 0.0
    %v2656 = vand.u32 %v92, 4294901760
    %2657 = vmatpush1.msra.mxu0 %v2656
    %2658 = vmatprep.subr.mxu0 0.0
    %v2659 = vand.u32 %v91, 4294901760
    %2660 = vmatpush1.msra.mxu0 %v2659
    %2661 = vmatprep.subr.mxu0 0.0
    %2662 = vmatpush2.msra.mxu0 0.0
    %2663 = vmatprep.subr.mxu0 0.0
    %2664 = vmatpush2.msra.mxu0 0.0
    %2665 = vmatprep.subr.mxu0 0.0
    %2666 = vmatpush2.msra.mxu0 0.0
    %2667 = vmatprep.subr.mxu0 0.0
    %2668 = vmatpush2.msra.mxu0 0.0
    %2669 = vmatprep.subr.mxu0 0.0
    %2670 = vmatpush2.msra.mxu0 0.0
    %2671 = vmatprep.subr.mxu0 0.0
    %2672 = vmatpush2.msra.mxu0 0.0
    %2673 = vmatprep.subr.mxu0 0.0
    %2674 = vmatpush2.msra.mxu0 0.0
    %2675 = vmatprep.subr.mxu0 0.0
    %2676 = vmatpush2.msra.mxu0 0.0
    %2677 = vmatprep.subr.mxu0 0.0
    %2678 = vmatpush2.msra.mxu0 0.0
    %2679 = vmatprep.subr.mxu0 0.0
    %2680 = vmatpush2.msra.mxu0 0.0
    %2681 = vmatprep.subr.mxu0 0.0
    %2682 = vmatpush2.msra.mxu0 0.0
    %2683 = vmatprep.subr.mxu0 0.0
    %2684 = vmatpush2.msra.mxu0 0.0
    %2685 = vmatprep.subr.mxu0 0.0
    %2686 = vmatpush2.msra.mxu0 0.0
    %2687 = vmatprep.subr.mxu0 0.0
    %2688 = vmatpush2.msra.mxu0 0.0
    %2689 = vmatprep.subr.mxu0 0.0
    %2690 = vmatpush2.msra.mxu0 0.0
    %2691 = vmatprep.subr.mxu0 0.0
    %2692 = vmatpush2.msra.mxu0 0.0
    %2693 = vmatprep.mubr.f32.mxu0 0.0
    %v2694 = vand.u32 %v2058, 4294901760
    %2695 = vmatmul.mubr.f32.gmra.mxu0 %v2694
    %v2696 = vpop.f32.mrf.mxu0
    %v2697 = vadd.f32 %v2610, %v2696
    %v2698 = vpop.f32.mrf.mxu0
    %2699 = vdwg.mxu0
    %v2700 = vld [vmem:[#allocation7] sm:$0xff]
    %v2701 = vld [vmem:[#allocation7 + $0x8] sm:$0xff]
    %v2702 = vld [vmem:[#allocation7 + $0x10] sm:$0xff]
    %v2703 = vld [vmem:[#allocation7 + $0x18] sm:$0xff]
    %v2704 = vld [vmem:[#allocation7 + $0x20] sm:$0xff]
    %v2705 = vld [vmem:[#allocation7 + $0x28] sm:$0xff]
    %v2706 = vld [vmem:[#allocation7 + $0x30] sm:$0xff]
    %v2707 = vld [vmem:[#allocation7 + $0x38] sm:$0xff]
    %v2708 = vld [vmem:[#allocation7 + $0x40] sm:$0xff]
    %v2709 = vld [vmem:[#allocation7 + $0x48] sm:$0xff]
    %v2710 = vld [vmem:[#allocation7 + $0x50] sm:$0xff]
    %v2711 = vld [vmem:[#allocation7 + $0x58] sm:$0xff]
    %v2712 = vld [vmem:[#allocation7 + $0x60] sm:$0xff]
    %v2713 = vld [vmem:[#allocation7 + $0x68] sm:$0xff]
    %v2714 = vld [vmem:[#allocation7 + $0x70] sm:$0xff]
    %v2715 = vld [vmem:[#allocation7 + $0x78] sm:$0xff]
    %v2716 = vlaneseq
    %v2717 = vshrl.u32 %v2716, 7
    %v2718 = vsub.s32 0, %v2717
    %v2719 = vrot.slane %v124, %v2718
    %2720 = vmatprep.subr.mxu0 0.0
    %v2721 = vand.u32 %v2715, 4294901760
    %2722 = vmatpush1.msra.mxu0 %v2721
    %2723 = vmatprep.subr.mxu0 0.0
    %v2724 = vand.u32 %v2714, 4294901760
    %2725 = vmatpush1.msra.mxu0 %v2724
    %2726 = vmatprep.subr.mxu0 0.0
    %v2727 = vand.u32 %v2713, 4294901760
    %2728 = vmatpush1.msra.mxu0 %v2727
    %2729 = vmatprep.subr.mxu0 0.0
    %v2730 = vand.u32 %v2712, 4294901760
    %2731 = vmatpush1.msra.mxu0 %v2730
    %2732 = vmatprep.subr.mxu0 0.0
    %v2733 = vand.u32 %v2711, 4294901760
    %2734 = vmatpush1.msra.mxu0 %v2733
    %2735 = vmatprep.subr.mxu0 0.0
    %v2736 = vand.u32 %v2710, 4294901760
    %2737 = vmatpush1.msra.mxu0 %v2736
    %2738 = vmatprep.subr.mxu0 0.0
    %v2739 = vand.u32 %v2709, 4294901760
    %2740 = vmatpush1.msra.mxu0 %v2739
    %2741 = vmatprep.subr.mxu0 0.0
    %v2742 = vand.u32 %v2708, 4294901760
    %2743 = vmatpush1.msra.mxu0 %v2742
    %2744 = vmatprep.subr.mxu0 0.0
    %v2745 = vand.u32 %v2707, 4294901760
    %2746 = vmatpush1.msra.mxu0 %v2745
    %2747 = vmatprep.subr.mxu0 0.0
    %v2748 = vand.u32 %v2706, 4294901760
    %2749 = vmatpush1.msra.mxu0 %v2748
    %2750 = vmatprep.subr.mxu0 0.0
    %v2751 = vand.u32 %v2705, 4294901760
    %2752 = vmatpush1.msra.mxu0 %v2751
    %2753 = vmatprep.subr.mxu0 0.0
    %v2754 = vand.u32 %v2704, 4294901760
    %2755 = vmatpush1.msra.mxu0 %v2754
    %2756 = vmatprep.subr.mxu0 0.0
    %v2757 = vand.u32 %v2703, 4294901760
    %2758 = vmatpush1.msra.mxu0 %v2757
    %2759 = vmatprep.subr.mxu0 0.0
    %v2760 = vand.u32 %v2702, 4294901760
    %2761 = vmatpush1.msra.mxu0 %v2760
    %2762 = vmatprep.subr.mxu0 0.0
    %v2763 = vand.u32 %v2701, 4294901760
    %2764 = vmatpush1.msra.mxu0 %v2763
    %2765 = vmatprep.subr.mxu0 0.0
    %v2766 = vand.u32 %v2700, 4294901760
    %2767 = vmatpush1.msra.mxu0 %v2766
    %2768 = vmatprep.subr.mxu0 0.0
    %2769 = vmatpush2.msra.mxu0 0.0
    %2770 = vmatprep.subr.mxu0 0.0
    %2771 = vmatpush2.msra.mxu0 0.0
    %2772 = vmatprep.subr.mxu0 0.0
    %2773 = vmatpush2.msra.mxu0 0.0
    %2774 = vmatprep.subr.mxu0 0.0
    %2775 = vmatpush2.msra.mxu0 0.0
    %2776 = vmatprep.subr.mxu0 0.0
    %2777 = vmatpush2.msra.mxu0 0.0
    %2778 = vmatprep.subr.mxu0 0.0
    %2779 = vmatpush2.msra.mxu0 0.0
    %2780 = vmatprep.subr.mxu0 0.0
    %2781 = vmatpush2.msra.mxu0 0.0
    %2782 = vmatprep.subr.mxu0 0.0
    %2783 = vmatpush2.msra.mxu0 0.0
    %2784 = vmatprep.subr.mxu0 0.0
    %2785 = vmatpush2.msra.mxu0 0.0
    %2786 = vmatprep.subr.mxu0 0.0
    %2787 = vmatpush2.msra.mxu0 0.0
    %2788 = vmatprep.subr.mxu0 0.0
    %2789 = vmatpush2.msra.mxu0 0.0
    %2790 = vmatprep.subr.mxu0 0.0
    %2791 = vmatpush2.msra.mxu0 0.0
    %2792 = vmatprep.subr.mxu0 0.0
    %2793 = vmatpush2.msra.mxu0 0.0
    %2794 = vmatprep.subr.mxu0 0.0
    %2795 = vmatpush2.msra.mxu0 0.0
    %2796 = vmatprep.subr.mxu0 0.0
    %2797 = vmatpush2.msra.mxu0 0.0
    %2798 = vmatprep.subr.mxu0 0.0
    %2799 = vmatpush2.msra.mxu0 0.0
    %2800 = vmatprep.mubr.f32.mxu0 0.0
    %v2801 = vand.u32 %v2697, 4294901760
    %v2802 = vsub.f32 %v2697, %v2801
    %v2803 = vand.u32 %v2802, 4294901760
    %v2804 = vsub.f32 %v2802, %v2803
    %v2805 = vand.u32 %v2804, 4294901760
    %2806 = vmatmul.mubr.f32.gmra.mxu0 %v2805
    %v2807 = vpop.f32.mrf.mxu0
    %v2808 = vadd.f32 %v2719, %v2807
    %v2809 = vpop.f32.mrf.mxu0
    %2810 = vdwg.mxu0
    %2811 = vmatprep.subr.mxu0 0.0
    %v2812 = vand.u32 %v2715, 4294901760
    %v2813 = vsub.f32 %v2715, %v2812
    %v2814 = vand.u32 %v2813, 4294901760
    %v2815 = vsub.f32 %v2813, %v2814
    %v2816 = vand.u32 %v2815, 4294901760
    %2817 = vmatpush1.msra.mxu0 %v2816
    %2818 = vmatprep.subr.mxu0 0.0
    %v2819 = vand.u32 %v2714, 4294901760
    %v2820 = vsub.f32 %v2714, %v2819
    %v2821 = vand.u32 %v2820, 4294901760
    %v2822 = vsub.f32 %v2820, %v2821
    %v2823 = vand.u32 %v2822, 4294901760
    %2824 = vmatpush1.msra.mxu0 %v2823
    %2825 = vmatprep.subr.mxu0 0.0
    %v2826 = vand.u32 %v2713, 4294901760
    %v2827 = vsub.f32 %v2713, %v2826
    %v2828 = vand.u32 %v2827, 4294901760
    %v2829 = vsub.f32 %v2827, %v2828
    %v2830 = vand.u32 %v2829, 4294901760
    %2831 = vmatpush1.msra.mxu0 %v2830
    %2832 = vmatprep.subr.mxu0 0.0
    %v2833 = vand.u32 %v2712, 4294901760
    %v2834 = vsub.f32 %v2712, %v2833
    %v2835 = vand.u32 %v2834, 4294901760
    %v2836 = vsub.f32 %v2834, %v2835
    %v2837 = vand.u32 %v2836, 4294901760
    %2838 = vmatpush1.msra.mxu0 %v2837
    %2839 = vmatprep.subr.mxu0 0.0
    %v2840 = vand.u32 %v2711, 4294901760
    %v2841 = vsub.f32 %v2711, %v2840
    %v2842 = vand.u32 %v2841, 4294901760
    %v2843 = vsub.f32 %v2841, %v2842
    %v2844 = vand.u32 %v2843, 4294901760
    %2845 = vmatpush1.msra.mxu0 %v2844
    %2846 = vmatprep.subr.mxu0 0.0
    %v2847 = vand.u32 %v2710, 4294901760
    %v2848 = vsub.f32 %v2710, %v2847
    %v2849 = vand.u32 %v2848, 4294901760
    %v2850 = vsub.f32 %v2848, %v2849
    %v2851 = vand.u32 %v2850, 4294901760
    %2852 = vmatpush1.msra.mxu0 %v2851
    %2853 = vmatprep.subr.mxu0 0.0
    %v2854 = vand.u32 %v2709, 4294901760
    %v2855 = vsub.f32 %v2709, %v2854
    %v2856 = vand.u32 %v2855, 4294901760
    %v2857 = vsub.f32 %v2855, %v2856
    %v2858 = vand.u32 %v2857, 4294901760
    %2859 = vmatpush1.msra.mxu0 %v2858
    %2860 = vmatprep.subr.mxu0 0.0
    %v2861 = vand.u32 %v2708, 4294901760
    %v2862 = vsub.f32 %v2708, %v2861
    %v2863 = vand.u32 %v2862, 4294901760
    %v2864 = vsub.f32 %v2862, %v2863
    %v2865 = vand.u32 %v2864, 4294901760
    %2866 = vmatpush1.msra.mxu0 %v2865
    %2867 = vmatprep.subr.mxu0 0.0
    %v2868 = vand.u32 %v2707, 4294901760
    %v2869 = vsub.f32 %v2707, %v2868
    %v2870 = vand.u32 %v2869, 4294901760
    %v2871 = vsub.f32 %v2869, %v2870
    %v2872 = vand.u32 %v2871, 4294901760
    %2873 = vmatpush1.msra.mxu0 %v2872
    %2874 = vmatprep.subr.mxu0 0.0
    %v2875 = vand.u32 %v2706, 4294901760
    %v2876 = vsub.f32 %v2706, %v2875
    %v2877 = vand.u32 %v2876, 4294901760
    %v2878 = vsub.f32 %v2876, %v2877
    %v2879 = vand.u32 %v2878, 4294901760
    %2880 = vmatpush1.msra.mxu0 %v2879
    %2881 = vmatprep.subr.mxu0 0.0
    %v2882 = vand.u32 %v2705, 4294901760
    %v2883 = vsub.f32 %v2705, %v2882
    %v2884 = vand.u32 %v2883, 4294901760
    %v2885 = vsub.f32 %v2883, %v2884
    %v2886 = vand.u32 %v2885, 4294901760
    %2887 = vmatpush1.msra.mxu0 %v2886
    %2888 = vmatprep.subr.mxu0 0.0
    %v2889 = vand.u32 %v2704, 4294901760
    %v2890 = vsub.f32 %v2704, %v2889
    %v2891 = vand.u32 %v2890, 4294901760
    %v2892 = vsub.f32 %v2890, %v2891
    %v2893 = vand.u32 %v2892, 4294901760
    %2894 = vmatpush1.msra.mxu0 %v2893
    %2895 = vmatprep.subr.mxu0 0.0
    %v2896 = vand.u32 %v2703, 4294901760
    %v2897 = vsub.f32 %v2703, %v2896
    %v2898 = vand.u32 %v2897, 4294901760
    %v2899 = vsub.f32 %v2897, %v2898
    %v2900 = vand.u32 %v2899, 4294901760
    %2901 = vmatpush1.msra.mxu0 %v2900
    %2902 = vmatprep.subr.mxu0 0.0
    %v2903 = vand.u32 %v2702, 4294901760
    %v2904 = vsub.f32 %v2702, %v2903
    %v2905 = vand.u32 %v2904, 4294901760
    %v2906 = vsub.f32 %v2904, %v2905
    %v2907 = vand.u32 %v2906, 4294901760
    %2908 = vmatpush1.msra.mxu0 %v2907
    %2909 = vmatprep.subr.mxu0 0.0
    %v2910 = vand.u32 %v2701, 4294901760
    %v2911 = vsub.f32 %v2701, %v2910
    %v2912 = vand.u32 %v2911, 4294901760
    %v2913 = vsub.f32 %v2911, %v2912
    %v2914 = vand.u32 %v2913, 4294901760
    %2915 = vmatpush1.msra.mxu0 %v2914
    %2916 = vmatprep.subr.mxu0 0.0
    %v2917 = vand.u32 %v2700, 4294901760
    %v2918 = vsub.f32 %v2700, %v2917
    %v2919 = vand.u32 %v2918, 4294901760
    %v2920 = vsub.f32 %v2918, %v2919
    %v2921 = vand.u32 %v2920, 4294901760
    %2922 = vmatpush1.msra.mxu0 %v2921
    %2923 = vmatprep.subr.mxu0 0.0
    %2924 = vmatpush2.msra.mxu0 0.0
    %2925 = vmatprep.subr.mxu0 0.0
    %2926 = vmatpush2.msra.mxu0 0.0
    %2927 = vmatprep.subr.mxu0 0.0
    %2928 = vmatpush2.msra.mxu0 0.0
    %2929 = vmatprep.subr.mxu0 0.0
    %2930 = vmatpush2.msra.mxu0 0.0
    %2931 = vmatprep.subr.mxu0 0.0
    %2932 = vmatpush2.msra.mxu0 0.0
    %2933 = vmatprep.subr.mxu0 0.0
    %2934 = vmatpush2.msra.mxu0 0.0
    %2935 = vmatprep.subr.mxu0 0.0
    %2936 = vmatpush2.msra.mxu0 0.0
    %2937 = vmatprep.subr.mxu0 0.0
    %2938 = vmatpush2.msra.mxu0 0.0
    %2939 = vmatprep.subr.mxu0 0.0
    %2940 = vmatpush2.msra.mxu0 0.0
    %2941 = vmatprep.subr.mxu0 0.0
    %2942 = vmatpush2.msra.mxu0 0.0
    %2943 = vmatprep.subr.mxu0 0.0
    %2944 = vmatpush2.msra.mxu0 0.0
    %2945 = vmatprep.subr.mxu0 0.0
    %2946 = vmatpush2.msra.mxu0 0.0
    %2947 = vmatprep.subr.mxu0 0.0
    %2948 = vmatpush2.msra.mxu0 0.0
    %2949 = vmatprep.subr.mxu0 0.0
    %2950 = vmatpush2.msra.mxu0 0.0
    %2951 = vmatprep.subr.mxu0 0.0
    %2952 = vmatpush2.msra.mxu0 0.0
    %2953 = vmatprep.subr.mxu0 0.0
    %2954 = vmatpush2.msra.mxu0 0.0
    %2955 = vmatprep.mubr.f32.mxu0 0.0
    %v2956 = vand.u32 %v2697, 4294901760
    %2957 = vmatmul.mubr.f32.gmra.mxu0 %v2956
    %v2958 = vpop.f32.mrf.mxu0
    %v2959 = vadd.f32 %v2808, %v2958
    %v2960 = vpop.f32.mrf.mxu0
    %2961 = vdwg.mxu0
    %2962 = vmatprep.subr.mxu0 0.0
    %v2963 = vand.u32 %v2715, 4294901760
    %v2964 = vsub.f32 %v2715, %v2963
    %2965 = vmatpush1.msra.mxu0 %v2964
    %2966 = vmatprep.subr.mxu0 0.0
    %v2967 = vand.u32 %v2714, 4294901760
    %v2968 = vsub.f32 %v2714, %v2967
    %2969 = vmatpush1.msra.mxu0 %v2968
    %2970 = vmatprep.subr.mxu0 0.0
    %v2971 = vand.u32 %v2713, 4294901760
    %v2972 = vsub.f32 %v2713, %v2971
    %2973 = vmatpush1.msra.mxu0 %v2972
    %2974 = vmatprep.subr.mxu0 0.0
    %v2975 = vand.u32 %v2712, 4294901760
    %v2976 = vsub.f32 %v2712, %v2975
    %2977 = vmatpush1.msra.mxu0 %v2976
    %2978 = vmatprep.subr.mxu0 0.0
    %v2979 = vand.u32 %v2711, 4294901760
    %v2980 = vsub.f32 %v2711, %v2979
    %2981 = vmatpush1.msra.mxu0 %v2980
    %2982 = vmatprep.subr.mxu0 0.0
    %v2983 = vand.u32 %v2710, 4294901760
    %v2984 = vsub.f32 %v2710, %v2983
    %2985 = vmatpush1.msra.mxu0 %v2984
    %2986 = vmatprep.subr.mxu0 0.0
    %v2987 = vand.u32 %v2709, 4294901760
    %v2988 = vsub.f32 %v2709, %v2987
    %2989 = vmatpush1.msra.mxu0 %v2988
    %2990 = vmatprep.subr.mxu0 0.0
    %v2991 = vand.u32 %v2708, 4294901760
    %v2992 = vsub.f32 %v2708, %v2991
    %2993 = vmatpush1.msra.mxu0 %v2992
    %2994 = vmatprep.subr.mxu0 0.0
    %v2995 = vand.u32 %v2707, 4294901760
    %v2996 = vsub.f32 %v2707, %v2995
    %2997 = vmatpush1.msra.mxu0 %v2996
    %2998 = vmatprep.subr.mxu0 0.0
    %v2999 = vand.u32 %v2706, 4294901760
    %v3000 = vsub.f32 %v2706, %v2999
    %3001 = vmatpush1.msra.mxu0 %v3000
    %3002 = vmatprep.subr.mxu0 0.0
    %v3003 = vand.u32 %v2705, 4294901760
    %v3004 = vsub.f32 %v2705, %v3003
    %3005 = vmatpush1.msra.mxu0 %v3004
    %3006 = vmatprep.subr.mxu0 0.0
    %v3007 = vand.u32 %v2704, 4294901760
    %v3008 = vsub.f32 %v2704, %v3007
    %3009 = vmatpush1.msra.mxu0 %v3008
    %3010 = vmatprep.subr.mxu0 0.0
    %v3011 = vand.u32 %v2703, 4294901760
    %v3012 = vsub.f32 %v2703, %v3011
    %3013 = vmatpush1.msra.mxu0 %v3012
    %3014 = vmatprep.subr.mxu0 0.0
    %v3015 = vand.u32 %v2702, 4294901760
    %v3016 = vsub.f32 %v2702, %v3015
    %3017 = vmatpush1.msra.mxu0 %v3016
    %3018 = vmatprep.subr.mxu0 0.0
    %v3019 = vand.u32 %v2701, 4294901760
    %v3020 = vsub.f32 %v2701, %v3019
    %3021 = vmatpush1.msra.mxu0 %v3020
    %3022 = vmatprep.subr.mxu0 0.0
    %v3023 = vand.u32 %v2700, 4294901760
    %v3024 = vsub.f32 %v2700, %v3023
    %3025 = vmatpush1.msra.mxu0 %v3024
    %3026 = vmatprep.subr.mxu0 0.0
    %3027 = vmatpush2.msra.mxu0 0.0
    %3028 = vmatprep.subr.mxu0 0.0
    %3029 = vmatpush2.msra.mxu0 0.0
    %3030 = vmatprep.subr.mxu0 0.0
    %3031 = vmatpush2.msra.mxu0 0.0
    %3032 = vmatprep.subr.mxu0 0.0
    %3033 = vmatpush2.msra.mxu0 0.0
    %3034 = vmatprep.subr.mxu0 0.0
    %3035 = vmatpush2.msra.mxu0 0.0
    %3036 = vmatprep.subr.mxu0 0.0
    %3037 = vmatpush2.msra.mxu0 0.0
    %3038 = vmatprep.subr.mxu0 0.0
    %3039 = vmatpush2.msra.mxu0 0.0
    %3040 = vmatprep.subr.mxu0 0.0
    %3041 = vmatpush2.msra.mxu0 0.0
    %3042 = vmatprep.subr.mxu0 0.0
    %3043 = vmatpush2.msra.mxu0 0.0
    %3044 = vmatprep.subr.mxu0 0.0
    %3045 = vmatpush2.msra.mxu0 0.0
    %3046 = vmatprep.subr.mxu0 0.0
    %3047 = vmatpush2.msra.mxu0 0.0
    %3048 = vmatprep.subr.mxu0 0.0
    %3049 = vmatpush2.msra.mxu0 0.0
    %3050 = vmatprep.subr.mxu0 0.0
    %3051 = vmatpush2.msra.mxu0 0.0
    %3052 = vmatprep.subr.mxu0 0.0
    %3053 = vmatpush2.msra.mxu0 0.0
    %3054 = vmatprep.subr.mxu0 0.0
    %3055 = vmatpush2.msra.mxu0 0.0
    %3056 = vmatprep.subr.mxu0 0.0
    %3057 = vmatpush2.msra.mxu0 0.0
    %3058 = vmatprep.mubr.f32.mxu0 0.0
    %v3059 = vand.u32 %v2697, 4294901760
    %v3060 = vsub.f32 %v2697, %v3059
    %3061 = vmatmul.mubr.f32.gmra.mxu0 %v3060
    %v3062 = vpop.f32.mrf.mxu0
    %v3063 = vadd.f32 %v2959, %v3062
    %v3064 = vpop.f32.mrf.mxu0
    %3065 = vdwg.mxu0
    %3066 = vmatprep.subr.mxu0 0.0
    %v3067 = vand.u32 %v2715, 4294901760
    %3068 = vmatpush1.msra.mxu0 %v3067
    %3069 = vmatprep.subr.mxu0 0.0
    %v3070 = vand.u32 %v2714, 4294901760
    %3071 = vmatpush1.msra.mxu0 %v3070
    %3072 = vmatprep.subr.mxu0 0.0
    %v3073 = vand.u32 %v2713, 4294901760
    %3074 = vmatpush1.msra.mxu0 %v3073
    %3075 = vmatprep.subr.mxu0 0.0
    %v3076 = vand.u32 %v2712, 4294901760
    %3077 = vmatpush1.msra.mxu0 %v3076
    %3078 = vmatprep.subr.mxu0 0.0
    %v3079 = vand.u32 %v2711, 4294901760
    %3080 = vmatpush1.msra.mxu0 %v3079
    %3081 = vmatprep.subr.mxu0 0.0
    %v3082 = vand.u32 %v2710, 4294901760
    %3083 = vmatpush1.msra.mxu0 %v3082
    %3084 = vmatprep.subr.mxu0 0.0
    %v3085 = vand.u32 %v2709, 4294901760
    %3086 = vmatpush1.msra.mxu0 %v3085
    %3087 = vmatprep.subr.mxu0 0.0
    %v3088 = vand.u32 %v2708, 4294901760
    %3089 = vmatpush1.msra.mxu0 %v3088
    %3090 = vmatprep.subr.mxu0 0.0
    %v3091 = vand.u32 %v2707, 4294901760
    %3092 = vmatpush1.msra.mxu0 %v3091
    %3093 = vmatprep.subr.mxu0 0.0
    %v3094 = vand.u32 %v2706, 4294901760
    %3095 = vmatpush1.msra.mxu0 %v3094
    %3096 = vmatprep.subr.mxu0 0.0
    %v3097 = vand.u32 %v2705, 4294901760
    %3098 = vmatpush1.msra.mxu0 %v3097
    %3099 = vmatprep.subr.mxu0 0.0
    %v3100 = vand.u32 %v2704, 4294901760
    %3101 = vmatpush1.msra.mxu0 %v3100
    %3102 = vmatprep.subr.mxu0 0.0
    %v3103 = vand.u32 %v2703, 4294901760
    %3104 = vmatpush1.msra.mxu0 %v3103
    %3105 = vmatprep.subr.mxu0 0.0
    %v3106 = vand.u32 %v2702, 4294901760
    %3107 = vmatpush1.msra.mxu0 %v3106
    %3108 = vmatprep.subr.mxu0 0.0
    %v3109 = vand.u32 %v2701, 4294901760
    %3110 = vmatpush1.msra.mxu0 %v3109
    %3111 = vmatprep.subr.mxu0 0.0
    %v3112 = vand.u32 %v2700, 4294901760
    %3113 = vmatpush1.msra.mxu0 %v3112
    %3114 = vmatprep.subr.mxu0 0.0
    %3115 = vmatpush2.msra.mxu0 0.0
    %3116 = vmatprep.subr.mxu0 0.0
    %3117 = vmatpush2.msra.mxu0 0.0
    %3118 = vmatprep.subr.mxu0 0.0
    %3119 = vmatpush2.msra.mxu0 0.0
    %3120 = vmatprep.subr.mxu0 0.0
    %3121 = vmatpush2.msra.mxu0 0.0
    %3122 = vmatprep.subr.mxu0 0.0
    %3123 = vmatpush2.msra.mxu0 0.0
    %3124 = vmatprep.subr.mxu0 0.0
    %3125 = vmatpush2.msra.mxu0 0.0
    %3126 = vmatprep.subr.mxu0 0.0
    %3127 = vmatpush2.msra.mxu0 0.0
    %3128 = vmatprep.subr.mxu0 0.0
    %3129 = vmatpush2.msra.mxu0 0.0
    %3130 = vmatprep.subr.mxu0 0.0
    %3131 = vmatpush2.msra.mxu0 0.0
    %3132 = vmatprep.subr.mxu0 0.0
    %3133 = vmatpush2.msra.mxu0 0.0
    %3134 = vmatprep.subr.mxu0 0.0
    %3135 = vmatpush2.msra.mxu0 0.0
    %3136 = vmatprep.subr.mxu0 0.0
    %3137 = vmatpush2.msra.mxu0 0.0
    %3138 = vmatprep.subr.mxu0 0.0
    %3139 = vmatpush2.msra.mxu0 0.0
    %3140 = vmatprep.subr.mxu0 0.0
    %3141 = vmatpush2.msra.mxu0 0.0
    %3142 = vmatprep.subr.mxu0 0.0
    %3143 = vmatpush2.msra.mxu0 0.0
    %3144 = vmatprep.subr.mxu0 0.0
    %3145 = vmatpush2.msra.mxu0 0.0
    %3146 = vmatprep.mubr.f32.mxu0 0.0
    %v3147 = vand.u32 %v2697, 4294901760
    %v3148 = vsub.f32 %v2697, %v3147
    %v3149 = vand.u32 %v3148, 4294901760
    %3150 = vmatmul.mubr.f32.gmra.mxu0 %v3149
    %v3151 = vpop.f32.mrf.mxu0
    %v3152 = vadd.f32 %v3063, %v3151
    %v3153 = vpop.f32.mrf.mxu0
    %3154 = vdwg.mxu0
    %3155 = vmatprep.subr.mxu0 0.0
    %v3156 = vand.u32 %v2715, 4294901760
    %v3157 = vsub.f32 %v2715, %v3156
    %v3158 = vand.u32 %v3157, 4294901760
    %3159 = vmatpush1.msra.mxu0 %v3158
    %3160 = vmatprep.subr.mxu0 0.0
    %v3161 = vand.u32 %v2714, 4294901760
    %v3162 = vsub.f32 %v2714, %v3161
    %v3163 = vand.u32 %v3162, 4294901760
    %3164 = vmatpush1.msra.mxu0 %v3163
    %3165 = vmatprep.subr.mxu0 0.0
    %v3166 = vand.u32 %v2713, 4294901760
    %v3167 = vsub.f32 %v2713, %v3166
    %v3168 = vand.u32 %v3167, 4294901760
    %3169 = vmatpush1.msra.mxu0 %v3168
    %3170 = vmatprep.subr.mxu0 0.0
    %v3171 = vand.u32 %v2712, 4294901760
    %v3172 = vsub.f32 %v2712, %v3171
    %v3173 = vand.u32 %v3172, 4294901760
    %3174 = vmatpush1.msra.mxu0 %v3173
    %3175 = vmatprep.subr.mxu0 0.0
    %v3176 = vand.u32 %v2711, 4294901760
    %v3177 = vsub.f32 %v2711, %v3176
    %v3178 = vand.u32 %v3177, 4294901760
    %3179 = vmatpush1.msra.mxu0 %v3178
    %3180 = vmatprep.subr.mxu0 0.0
    %v3181 = vand.u32 %v2710, 4294901760
    %v3182 = vsub.f32 %v2710, %v3181
    %v3183 = vand.u32 %v3182, 4294901760
    %3184 = vmatpush1.msra.mxu0 %v3183
    %3185 = vmatprep.subr.mxu0 0.0
    %v3186 = vand.u32 %v2709, 4294901760
    %v3187 = vsub.f32 %v2709, %v3186
    %v3188 = vand.u32 %v3187, 4294901760
    %3189 = vmatpush1.msra.mxu0 %v3188
    %3190 = vmatprep.subr.mxu0 0.0
    %v3191 = vand.u32 %v2708, 4294901760
    %v3192 = vsub.f32 %v2708, %v3191
    %v3193 = vand.u32 %v3192, 4294901760
    %3194 = vmatpush1.msra.mxu0 %v3193
    %3195 = vmatprep.subr.mxu0 0.0
    %v3196 = vand.u32 %v2707, 4294901760
    %v3197 = vsub.f32 %v2707, %v3196
    %v3198 = vand.u32 %v3197, 4294901760
    %3199 = vmatpush1.msra.mxu0 %v3198
    %3200 = vmatprep.subr.mxu0 0.0
    %v3201 = vand.u32 %v2706, 4294901760
    %v3202 = vsub.f32 %v2706, %v3201
    %v3203 = vand.u32 %v3202, 4294901760
    %3204 = vmatpush1.msra.mxu0 %v3203
    %3205 = vmatprep.subr.mxu0 0.0
    %v3206 = vand.u32 %v2705, 4294901760
    %v3207 = vsub.f32 %v2705, %v3206
    %v3208 = vand.u32 %v3207, 4294901760
    %3209 = vmatpush1.msra.mxu0 %v3208
    %3210 = vmatprep.subr.mxu0 0.0
    %v3211 = vand.u32 %v2704, 4294901760
    %v3212 = vsub.f32 %v2704, %v3211
    %v3213 = vand.u32 %v3212, 4294901760
    %3214 = vmatpush1.msra.mxu0 %v3213
    %3215 = vmatprep.subr.mxu0 0.0
    %v3216 = vand.u32 %v2703, 4294901760
    %v3217 = vsub.f32 %v2703, %v3216
    %v3218 = vand.u32 %v3217, 4294901760
    %3219 = vmatpush1.msra.mxu0 %v3218
    %3220 = vmatprep.subr.mxu0 0.0
    %v3221 = vand.u32 %v2702, 4294901760
    %v3222 = vsub.f32 %v2702, %v3221
    %v3223 = vand.u32 %v3222, 4294901760
    %3224 = vmatpush1.msra.mxu0 %v3223
    %3225 = vmatprep.subr.mxu0 0.0
    %v3226 = vand.u32 %v2701, 4294901760
    %v3227 = vsub.f32 %v2701, %v3226
    %v3228 = vand.u32 %v3227, 4294901760
    %3229 = vmatpush1.msra.mxu0 %v3228
    %3230 = vmatprep.subr.mxu0 0.0
    %v3231 = vand.u32 %v2700, 4294901760
    %v3232 = vsub.f32 %v2700, %v3231
    %v3233 = vand.u32 %v3232, 4294901760
    %3234 = vmatpush1.msra.mxu0 %v3233
    %3235 = vmatprep.subr.mxu0 0.0
    %3236 = vmatpush2.msra.mxu0 0.0
    %3237 = vmatprep.subr.mxu0 0.0
    %3238 = vmatpush2.msra.mxu0 0.0
    %3239 = vmatprep.subr.mxu0 0.0
    %3240 = vmatpush2.msra.mxu0 0.0
    %3241 = vmatprep.subr.mxu0 0.0
    %3242 = vmatpush2.msra.mxu0 0.0
    %3243 = vmatprep.subr.mxu0 0.0
    %3244 = vmatpush2.msra.mxu0 0.0
    %3245 = vmatprep.subr.mxu0 0.0
    %3246 = vmatpush2.msra.mxu0 0.0
    %3247 = vmatprep.subr.mxu0 0.0
    %3248 = vmatpush2.msra.mxu0 0.0
    %3249 = vmatprep.subr.mxu0 0.0
    %3250 = vmatpush2.msra.mxu0 0.0
    %3251 = vmatprep.subr.mxu0 0.0
    %3252 = vmatpush2.msra.mxu0 0.0
    %3253 = vmatprep.subr.mxu0 0.0
    %3254 = vmatpush2.msra.mxu0 0.0
    %3255 = vmatprep.subr.mxu0 0.0
    %3256 = vmatpush2.msra.mxu0 0.0
    %3257 = vmatprep.subr.mxu0 0.0
    %3258 = vmatpush2.msra.mxu0 0.0
    %3259 = vmatprep.subr.mxu0 0.0
    %3260 = vmatpush2.msra.mxu0 0.0
    %3261 = vmatprep.subr.mxu0 0.0
    %3262 = vmatpush2.msra.mxu0 0.0
    %3263 = vmatprep.subr.mxu0 0.0
    %3264 = vmatpush2.msra.mxu0 0.0
    %3265 = vmatprep.subr.mxu0 0.0
    %3266 = vmatpush2.msra.mxu0 0.0
    %3267 = vmatprep.mubr.f32.mxu0 0.0
    %v3268 = vand.u32 %v2697, 4294901760
    %3269 = vmatmul.mubr.f32.gmra.mxu0 %v3268
    %v3270 = vpop.f32.mrf.mxu0
    %v3271 = vadd.f32 %v3152, %v3270
    %v3272 = vpop.f32.mrf.mxu0
    %3273 = vdwg.mxu0
    %3274 = vmatprep.subr.mxu0 0.0
    %v3275 = vand.u32 %v2715, 4294901760
    %3276 = vmatpush1.msra.mxu0 %v3275
    %3277 = vmatprep.subr.mxu0 0.0
    %v3278 = vand.u32 %v2714, 4294901760
    %3279 = vmatpush1.msra.mxu0 %v3278
    %3280 = vmatprep.subr.mxu0 0.0
    %v3281 = vand.u32 %v2713, 4294901760
    %3282 = vmatpush1.msra.mxu0 %v3281
    %3283 = vmatprep.subr.mxu0 0.0
    %v3284 = vand.u32 %v2712, 4294901760
    %3285 = vmatpush1.msra.mxu0 %v3284
    %3286 = vmatprep.subr.mxu0 0.0
    %v3287 = vand.u32 %v2711, 4294901760
    %3288 = vmatpush1.msra.mxu0 %v3287
    %3289 = vmatprep.subr.mxu0 0.0
    %v3290 = vand.u32 %v2710, 4294901760
    %3291 = vmatpush1.msra.mxu0 %v3290
    %3292 = vmatprep.subr.mxu0 0.0
    %v3293 = vand.u32 %v2709, 4294901760
    %3294 = vmatpush1.msra.mxu0 %v3293
    %3295 = vmatprep.subr.mxu0 0.0
    %v3296 = vand.u32 %v2708, 4294901760
    %3297 = vmatpush1.msra.mxu0 %v3296
    %3298 = vmatprep.subr.mxu0 0.0
    %v3299 = vand.u32 %v2707, 4294901760
    %3300 = vmatpush1.msra.mxu0 %v3299
    %3301 = vmatprep.subr.mxu0 0.0
    %v3302 = vand.u32 %v2706, 4294901760
    %3303 = vmatpush1.msra.mxu0 %v3302
    %3304 = vmatprep.subr.mxu0 0.0
    %v3305 = vand.u32 %v2705, 4294901760
    %3306 = vmatpush1.msra.mxu0 %v3305
    %3307 = vmatprep.subr.mxu0 0.0
    %v3308 = vand.u32 %v2704, 4294901760
    %3309 = vmatpush1.msra.mxu0 %v3308
    %3310 = vmatprep.subr.mxu0 0.0
    %v3311 = vand.u32 %v2703, 4294901760
    %3312 = vmatpush1.msra.mxu0 %v3311
    %3313 = vmatprep.subr.mxu0 0.0
    %v3314 = vand.u32 %v2702, 4294901760
    %3315 = vmatpush1.msra.mxu0 %v3314
    %3316 = vmatprep.subr.mxu0 0.0
    %v3317 = vand.u32 %v2701, 4294901760
    %3318 = vmatpush1.msra.mxu0 %v3317
    %3319 = vmatprep.subr.mxu0 0.0
    %v3320 = vand.u32 %v2700, 4294901760
    %3321 = vmatpush1.msra.mxu0 %v3320
    %3322 = vmatprep.subr.mxu0 0.0
    %3323 = vmatpush2.msra.mxu0 0.0
    %3324 = vmatprep.subr.mxu0 0.0
    %3325 = vmatpush2.msra.mxu0 0.0
    %3326 = vmatprep.subr.mxu0 0.0
    %3327 = vmatpush2.msra.mxu0 0.0
    %3328 = vmatprep.subr.mxu0 0.0
    %3329 = vmatpush2.msra.mxu0 0.0
    %3330 = vmatprep.subr.mxu0 0.0
    %3331 = vmatpush2.msra.mxu0 0.0
    %3332 = vmatprep.subr.mxu0 0.0
    %3333 = vmatpush2.msra.mxu0 0.0
    %3334 = vmatprep.subr.mxu0 0.0
    %3335 = vmatpush2.msra.mxu0 0.0
    %3336 = vmatprep.subr.mxu0 0.0
    %3337 = vmatpush2.msra.mxu0 0.0
    %3338 = vmatprep.subr.mxu0 0.0
    %3339 = vmatpush2.msra.mxu0 0.0
    %3340 = vmatprep.subr.mxu0 0.0
    %3341 = vmatpush2.msra.mxu0 0.0
    %3342 = vmatprep.subr.mxu0 0.0
    %3343 = vmatpush2.msra.mxu0 0.0
    %3344 = vmatprep.subr.mxu0 0.0
    %3345 = vmatpush2.msra.mxu0 0.0
    %3346 = vmatprep.subr.mxu0 0.0
    %3347 = vmatpush2.msra.mxu0 0.0
    %3348 = vmatprep.subr.mxu0 0.0
    %3349 = vmatpush2.msra.mxu0 0.0
    %3350 = vmatprep.subr.mxu0 0.0
    %3351 = vmatpush2.msra.mxu0 0.0
    %3352 = vmatprep.subr.mxu0 0.0
    %3353 = vmatpush2.msra.mxu0 0.0
    %3354 = vmatprep.mubr.f32.mxu0 0.0
    %v3355 = vand.u32 %v2697, 4294901760
    %3356 = vmatmul.mubr.f32.gmra.mxu0 %v3355
    %v3357 = vpop.f32.mrf.mxu0
    %v3358 = vadd.f32 %v3271, %v3357
    %v3359 = vpop.f32.mrf.mxu0
    %3360 = vdwg.mxu0
    %v3361 = vld [vmem:[#allocation8] sm:$0xff]
    %v3362 = vld [vmem:[#allocation8 + $0x8] sm:$0xff]
    %v3363 = vld [vmem:[#allocation8 + $0x10] sm:$0xff]
    %v3364 = vld [vmem:[#allocation8 + $0x18] sm:$0xff]
    %v3365 = vld [vmem:[#allocation8 + $0x20] sm:$0xff]
    %v3366 = vld [vmem:[#allocation8 + $0x28] sm:$0xff]
    %v3367 = vld [vmem:[#allocation8 + $0x30] sm:$0xff]
    %v3368 = vld [vmem:[#allocation8 + $0x38] sm:$0xff]
    %v3369 = vld [vmem:[#allocation8 + $0x40] sm:$0xff]
    %v3370 = vld [vmem:[#allocation8 + $0x48] sm:$0xff]
    %v3371 = vld [vmem:[#allocation8 + $0x50] sm:$0xff]
    %v3372 = vld [vmem:[#allocation8 + $0x58] sm:$0xff]
    %v3373 = vld [vmem:[#allocation8 + $0x60] sm:$0xff]
    %v3374 = vld [vmem:[#allocation8 + $0x68] sm:$0xff]
    %v3375 = vld [vmem:[#allocation8 + $0x70] sm:$0xff]
    %v3376 = vld [vmem:[#allocation8 + $0x78] sm:$0xff]
    %v3377 = vlaneseq
    %v3378 = vshrl.u32 %v3377, 7
    %v3379 = vsub.s32 0, %v3378
    %v3380 = vrot.slane %v125, %v3379
    %3381 = vmatprep.subr.mxu0 0.0
    %v3382 = vand.u32 %v3376, 4294901760
    %3383 = vmatpush1.msra.mxu0 %v3382
    %3384 = vmatprep.subr.mxu0 0.0
    %v3385 = vand.u32 %v3375, 4294901760
    %3386 = vmatpush1.msra.mxu0 %v3385
    %3387 = vmatprep.subr.mxu0 0.0
    %v3388 = vand.u32 %v3374, 4294901760
    %3389 = vmatpush1.msra.mxu0 %v3388
    %3390 = vmatprep.subr.mxu0 0.0
    %v3391 = vand.u32 %v3373, 4294901760
    %3392 = vmatpush1.msra.mxu0 %v3391
    %3393 = vmatprep.subr.mxu0 0.0
    %v3394 = vand.u32 %v3372, 4294901760
    %3395 = vmatpush1.msra.mxu0 %v3394
    %3396 = vmatprep.subr.mxu0 0.0
    %v3397 = vand.u32 %v3371, 4294901760
    %3398 = vmatpush1.msra.mxu0 %v3397
    %3399 = vmatprep.subr.mxu0 0.0
    %v3400 = vand.u32 %v3370, 4294901760
    %3401 = vmatpush1.msra.mxu0 %v3400
    %3402 = vmatprep.subr.mxu0 0.0
    %v3403 = vand.u32 %v3369, 4294901760
    %3404 = vmatpush1.msra.mxu0 %v3403
    %3405 = vmatprep.subr.mxu0 0.0
    %v3406 = vand.u32 %v3368, 4294901760
    %3407 = vmatpush1.msra.mxu0 %v3406
    %3408 = vmatprep.subr.mxu0 0.0
    %v3409 = vand.u32 %v3367, 4294901760
    %3410 = vmatpush1.msra.mxu0 %v3409
    %3411 = vmatprep.subr.mxu0 0.0
    %v3412 = vand.u32 %v3366, 4294901760
    %3413 = vmatpush1.msra.mxu0 %v3412
    %3414 = vmatprep.subr.mxu0 0.0
    %v3415 = vand.u32 %v3365, 4294901760
    %3416 = vmatpush1.msra.mxu0 %v3415
    %3417 = vmatprep.subr.mxu0 0.0
    %v3418 = vand.u32 %v3364, 4294901760
    %3419 = vmatpush1.msra.mxu0 %v3418
    %3420 = vmatprep.subr.mxu0 0.0
    %v3421 = vand.u32 %v3363, 4294901760
    %3422 = vmatpush1.msra.mxu0 %v3421
    %3423 = vmatprep.subr.mxu0 0.0
    %v3424 = vand.u32 %v3362, 4294901760
    %3425 = vmatpush1.msra.mxu0 %v3424
    %3426 = vmatprep.subr.mxu0 0.0
    %v3427 = vand.u32 %v3361, 4294901760
    %3428 = vmatpush1.msra.mxu0 %v3427
    %3429 = vmatprep.subr.mxu0 0.0
    %3430 = vmatpush2.msra.mxu0 0.0
    %3431 = vmatprep.subr.mxu0 0.0
    %3432 = vmatpush2.msra.mxu0 0.0
    %3433 = vmatprep.subr.mxu0 0.0
    %3434 = vmatpush2.msra.mxu0 0.0
    %3435 = vmatprep.subr.mxu0 0.0
    %3436 = vmatpush2.msra.mxu0 0.0
    %3437 = vmatprep.subr.mxu0 0.0
    %3438 = vmatpush2.msra.mxu0 0.0
    %3439 = vmatprep.subr.mxu0 0.0
    %3440 = vmatpush2.msra.mxu0 0.0
    %3441 = vmatprep.subr.mxu0 0.0
    %3442 = vmatpush2.msra.mxu0 0.0
    %3443 = vmatprep.subr.mxu0 0.0
    %3444 = vmatpush2.msra.mxu0 0.0
    %3445 = vmatprep.subr.mxu0 0.0
    %3446 = vmatpush2.msra.mxu0 0.0
    %3447 = vmatprep.subr.mxu0 0.0
    %3448 = vmatpush2.msra.mxu0 0.0
    %3449 = vmatprep.subr.mxu0 0.0
    %3450 = vmatpush2.msra.mxu0 0.0
    %3451 = vmatprep.subr.mxu0 0.0
    %3452 = vmatpush2.msra.mxu0 0.0
    %3453 = vmatprep.subr.mxu0 0.0
    %3454 = vmatpush2.msra.mxu0 0.0
    %3455 = vmatprep.subr.mxu0 0.0
    %3456 = vmatpush2.msra.mxu0 0.0
    %3457 = vmatprep.subr.mxu0 0.0
    %3458 = vmatpush2.msra.mxu0 0.0
    %3459 = vmatprep.subr.mxu0 0.0
    %3460 = vmatpush2.msra.mxu0 0.0
    %3461 = vmatprep.mubr.f32.mxu0 0.0
    %v3462 = vand.u32 %v3358, 4294901760
    %v3463 = vsub.f32 %v3358, %v3462
    %v3464 = vand.u32 %v3463, 4294901760
    %v3465 = vsub.f32 %v3463, %v3464
    %v3466 = vand.u32 %v3465, 4294901760
    %3467 = vmatmul.mubr.f32.gmra.mxu0 %v3466
    %v3468 = vpop.f32.mrf.mxu0
    %v3469 = vadd.f32 %v3380, %v3468
    %v3470 = vpop.f32.mrf.mxu0
    %3471 = vdwg.mxu0
    %3472 = vmatprep.subr.mxu0 0.0
    %v3473 = vand.u32 %v3376, 4294901760
    %v3474 = vsub.f32 %v3376, %v3473
    %v3475 = vand.u32 %v3474, 4294901760
    %v3476 = vsub.f32 %v3474, %v3475
    %v3477 = vand.u32 %v3476, 4294901760
    %3478 = vmatpush1.msra.mxu0 %v3477
    %3479 = vmatprep.subr.mxu0 0.0
    %v3480 = vand.u32 %v3375, 4294901760
    %v3481 = vsub.f32 %v3375, %v3480
    %v3482 = vand.u32 %v3481, 4294901760
    %v3483 = vsub.f32 %v3481, %v3482
    %v3484 = vand.u32 %v3483, 4294901760
    %3485 = vmatpush1.msra.mxu0 %v3484
    %3486 = vmatprep.subr.mxu0 0.0
    %v3487 = vand.u32 %v3374, 4294901760
    %v3488 = vsub.f32 %v3374, %v3487
    %v3489 = vand.u32 %v3488, 4294901760
    %v3490 = vsub.f32 %v3488, %v3489
    %v3491 = vand.u32 %v3490, 4294901760
    %3492 = vmatpush1.msra.mxu0 %v3491
    %3493 = vmatprep.subr.mxu0 0.0
    %v3494 = vand.u32 %v3373, 4294901760
    %v3495 = vsub.f32 %v3373, %v3494
    %v3496 = vand.u32 %v3495, 4294901760
    %v3497 = vsub.f32 %v3495, %v3496
    %v3498 = vand.u32 %v3497, 4294901760
    %3499 = vmatpush1.msra.mxu0 %v3498
    %3500 = vmatprep.subr.mxu0 0.0
    %v3501 = vand.u32 %v3372, 4294901760
    %v3502 = vsub.f32 %v3372, %v3501
    %v3503 = vand.u32 %v3502, 4294901760
    %v3504 = vsub.f32 %v3502, %v3503
    %v3505 = vand.u32 %v3504, 4294901760
    %3506 = vmatpush1.msra.mxu0 %v3505
    %3507 = vmatprep.subr.mxu0 0.0
    %v3508 = vand.u32 %v3371, 4294901760
    %v3509 = vsub.f32 %v3371, %v3508
    %v3510 = vand.u32 %v3509, 4294901760
    %v3511 = vsub.f32 %v3509, %v3510
    %v3512 = vand.u32 %v3511, 4294901760
    %3513 = vmatpush1.msra.mxu0 %v3512
    %3514 = vmatprep.subr.mxu0 0.0
    %v3515 = vand.u32 %v3370, 4294901760
    %v3516 = vsub.f32 %v3370, %v3515
    %v3517 = vand.u32 %v3516, 4294901760
    %v3518 = vsub.f32 %v3516, %v3517
    %v3519 = vand.u32 %v3518, 4294901760
    %3520 = vmatpush1.msra.mxu0 %v3519
    %3521 = vmatprep.subr.mxu0 0.0
    %v3522 = vand.u32 %v3369, 4294901760
    %v3523 = vsub.f32 %v3369, %v3522
    %v3524 = vand.u32 %v3523, 4294901760
    %v3525 = vsub.f32 %v3523, %v3524
    %v3526 = vand.u32 %v3525, 4294901760
    %3527 = vmatpush1.msra.mxu0 %v3526
    %3528 = vmatprep.subr.mxu0 0.0
    %v3529 = vand.u32 %v3368, 4294901760
    %v3530 = vsub.f32 %v3368, %v3529
    %v3531 = vand.u32 %v3530, 4294901760
    %v3532 = vsub.f32 %v3530, %v3531
    %v3533 = vand.u32 %v3532, 4294901760
    %3534 = vmatpush1.msra.mxu0 %v3533
    %3535 = vmatprep.subr.mxu0 0.0
    %v3536 = vand.u32 %v3367, 4294901760
    %v3537 = vsub.f32 %v3367, %v3536
    %v3538 = vand.u32 %v3537, 4294901760
    %v3539 = vsub.f32 %v3537, %v3538
    %v3540 = vand.u32 %v3539, 4294901760
    %3541 = vmatpush1.msra.mxu0 %v3540
    %3542 = vmatprep.subr.mxu0 0.0
    %v3543 = vand.u32 %v3366, 4294901760
    %v3544 = vsub.f32 %v3366, %v3543
    %v3545 = vand.u32 %v3544, 4294901760
    %v3546 = vsub.f32 %v3544, %v3545
    %v3547 = vand.u32 %v3546, 4294901760
    %3548 = vmatpush1.msra.mxu0 %v3547
    %3549 = vmatprep.subr.mxu0 0.0
    %v3550 = vand.u32 %v3365, 4294901760
    %v3551 = vsub.f32 %v3365, %v3550
    %v3552 = vand.u32 %v3551, 4294901760
    %v3553 = vsub.f32 %v3551, %v3552
    %v3554 = vand.u32 %v3553, 4294901760
    %3555 = vmatpush1.msra.mxu0 %v3554
    %3556 = vmatprep.subr.mxu0 0.0
    %v3557 = vand.u32 %v3364, 4294901760
    %v3558 = vsub.f32 %v3364, %v3557
    %v3559 = vand.u32 %v3558, 4294901760
    %v3560 = vsub.f32 %v3558, %v3559
    %v3561 = vand.u32 %v3560, 4294901760
    %3562 = vmatpush1.msra.mxu0 %v3561
    %3563 = vmatprep.subr.mxu0 0.0
    %v3564 = vand.u32 %v3363, 4294901760
    %v3565 = vsub.f32 %v3363, %v3564
    %v3566 = vand.u32 %v3565, 4294901760
    %v3567 = vsub.f32 %v3565, %v3566
    %v3568 = vand.u32 %v3567, 4294901760
    %3569 = vmatpush1.msra.mxu0 %v3568
    %3570 = vmatprep.subr.mxu0 0.0
    %v3571 = vand.u32 %v3362, 4294901760
    %v3572 = vsub.f32 %v3362, %v3571
    %v3573 = vand.u32 %v3572, 4294901760
    %v3574 = vsub.f32 %v3572, %v3573
    %v3575 = vand.u32 %v3574, 4294901760
    %3576 = vmatpush1.msra.mxu0 %v3575
    %3577 = vmatprep.subr.mxu0 0.0
    %v3578 = vand.u32 %v3361, 4294901760
    %v3579 = vsub.f32 %v3361, %v3578
    %v3580 = vand.u32 %v3579, 4294901760
    %v3581 = vsub.f32 %v3579, %v3580
    %v3582 = vand.u32 %v3581, 4294901760
    %3583 = vmatpush1.msra.mxu0 %v3582
    %3584 = vmatprep.subr.mxu0 0.0
    %3585 = vmatpush2.msra.mxu0 0.0
    %3586 = vmatprep.subr.mxu0 0.0
    %3587 = vmatpush2.msra.mxu0 0.0
    %3588 = vmatprep.subr.mxu0 0.0
    %3589 = vmatpush2.msra.mxu0 0.0
    %3590 = vmatprep.subr.mxu0 0.0
    %3591 = vmatpush2.msra.mxu0 0.0
    %3592 = vmatprep.subr.mxu0 0.0
    %3593 = vmatpush2.msra.mxu0 0.0
    %3594 = vmatprep.subr.mxu0 0.0
    %3595 = vmatpush2.msra.mxu0 0.0
    %3596 = vmatprep.subr.mxu0 0.0
    %3597 = vmatpush2.msra.mxu0 0.0
    %3598 = vmatprep.subr.mxu0 0.0
    %3599 = vmatpush2.msra.mxu0 0.0
    %3600 = vmatprep.subr.mxu0 0.0
    %3601 = vmatpush2.msra.mxu0 0.0
    %3602 = vmatprep.subr.mxu0 0.0
    %3603 = vmatpush2.msra.mxu0 0.0
    %3604 = vmatprep.subr.mxu0 0.0
    %3605 = vmatpush2.msra.mxu0 0.0
    %3606 = vmatprep.subr.mxu0 0.0
    %3607 = vmatpush2.msra.mxu0 0.0
    %3608 = vmatprep.subr.mxu0 0.0
    %3609 = vmatpush2.msra.mxu0 0.0
    %3610 = vmatprep.subr.mxu0 0.0
    %3611 = vmatpush2.msra.mxu0 0.0
    %3612 = vmatprep.subr.mxu0 0.0
    %3613 = vmatpush2.msra.mxu0 0.0
    %3614 = vmatprep.subr.mxu0 0.0
    %3615 = vmatpush2.msra.mxu0 0.0
    %3616 = vmatprep.mubr.f32.mxu0 0.0
    %v3617 = vand.u32 %v3358, 4294901760
    %3618 = vmatmul.mubr.f32.gmra.mxu0 %v3617
    %v3619 = vpop.f32.mrf.mxu0
    %v3620 = vadd.f32 %v3469, %v3619
    %v3621 = vpop.f32.mrf.mxu0
    %3622 = vdwg.mxu0
    %3623 = vmatprep.subr.mxu0 0.0
    %v3624 = vand.u32 %v3376, 4294901760
    %v3625 = vsub.f32 %v3376, %v3624
    %3626 = vmatpush1.msra.mxu0 %v3625
    %3627 = vmatprep.subr.mxu0 0.0
    %v3628 = vand.u32 %v3375, 4294901760
    %v3629 = vsub.f32 %v3375, %v3628
    %3630 = vmatpush1.msra.mxu0 %v3629
    %3631 = vmatprep.subr.mxu0 0.0
    %v3632 = vand.u32 %v3374, 4294901760
    %v3633 = vsub.f32 %v3374, %v3632
    %3634 = vmatpush1.msra.mxu0 %v3633
    %3635 = vmatprep.subr.mxu0 0.0
    %v3636 = vand.u32 %v3373, 4294901760
    %v3637 = vsub.f32 %v3373, %v3636
    %3638 = vmatpush1.msra.mxu0 %v3637
    %3639 = vmatprep.subr.mxu0 0.0
    %v3640 = vand.u32 %v3372, 4294901760
    %v3641 = vsub.f32 %v3372, %v3640
    %3642 = vmatpush1.msra.mxu0 %v3641
    %3643 = vmatprep.subr.mxu0 0.0
    %v3644 = vand.u32 %v3371, 4294901760
    %v3645 = vsub.f32 %v3371, %v3644
    %3646 = vmatpush1.msra.mxu0 %v3645
    %3647 = vmatprep.subr.mxu0 0.0
    %v3648 = vand.u32 %v3370, 4294901760
    %v3649 = vsub.f32 %v3370, %v3648
    %3650 = vmatpush1.msra.mxu0 %v3649
    %3651 = vmatprep.subr.mxu0 0.0
    %v3652 = vand.u32 %v3369, 4294901760
    %v3653 = vsub.f32 %v3369, %v3652
    %3654 = vmatpush1.msra.mxu0 %v3653
    %3655 = vmatprep.subr.mxu0 0.0
    %v3656 = vand.u32 %v3368, 4294901760
    %v3657 = vsub.f32 %v3368, %v3656
    %3658 = vmatpush1.msra.mxu0 %v3657
    %3659 = vmatprep.subr.mxu0 0.0
    %v3660 = vand.u32 %v3367, 4294901760
    %v3661 = vsub.f32 %v3367, %v3660
    %3662 = vmatpush1.msra.mxu0 %v3661
    %3663 = vmatprep.subr.mxu0 0.0
    %v3664 = vand.u32 %v3366, 4294901760
    %v3665 = vsub.f32 %v3366, %v3664
    %3666 = vmatpush1.msra.mxu0 %v3665
    %3667 = vmatprep.subr.mxu0 0.0
    %v3668 = vand.u32 %v3365, 4294901760
    %v3669 = vsub.f32 %v3365, %v3668
    %3670 = vmatpush1.msra.mxu0 %v3669
    %3671 = vmatprep.subr.mxu0 0.0
    %v3672 = vand.u32 %v3364, 4294901760
    %v3673 = vsub.f32 %v3364, %v3672
    %3674 = vmatpush1.msra.mxu0 %v3673
    %3675 = vmatprep.subr.mxu0 0.0
    %v3676 = vand.u32 %v3363, 4294901760
    %v3677 = vsub.f32 %v3363, %v3676
    %3678 = vmatpush1.msra.mxu0 %v3677
    %3679 = vmatprep.subr.mxu0 0.0
    %v3680 = vand.u32 %v3362, 4294901760
    %v3681 = vsub.f32 %v3362, %v3680
    %3682 = vmatpush1.msra.mxu0 %v3681
    %3683 = vmatprep.subr.mxu0 0.0
    %v3684 = vand.u32 %v3361, 4294901760
    %v3685 = vsub.f32 %v3361, %v3684
    %3686 = vmatpush1.msra.mxu0 %v3685
    %3687 = vmatprep.subr.mxu0 0.0
    %3688 = vmatpush2.msra.mxu0 0.0
    %3689 = vmatprep.subr.mxu0 0.0
    %3690 = vmatpush2.msra.mxu0 0.0
    %3691 = vmatprep.subr.mxu0 0.0
    %3692 = vmatpush2.msra.mxu0 0.0
    %3693 = vmatprep.subr.mxu0 0.0
    %3694 = vmatpush2.msra.mxu0 0.0
    %3695 = vmatprep.subr.mxu0 0.0
    %3696 = vmatpush2.msra.mxu0 0.0
    %3697 = vmatprep.subr.mxu0 0.0
    %3698 = vmatpush2.msra.mxu0 0.0
    %3699 = vmatprep.subr.mxu0 0.0
    %3700 = vmatpush2.msra.mxu0 0.0
    %3701 = vmatprep.subr.mxu0 0.0
    %3702 = vmatpush2.msra.mxu0 0.0
    %3703 = vmatprep.subr.mxu0 0.0
    %3704 = vmatpush2.msra.mxu0 0.0
    %3705 = vmatprep.subr.mxu0 0.0
    %3706 = vmatpush2.msra.mxu0 0.0
    %3707 = vmatprep.subr.mxu0 0.0
    %3708 = vmatpush2.msra.mxu0 0.0
    %3709 = vmatprep.subr.mxu0 0.0
    %3710 = vmatpush2.msra.mxu0 0.0
    %3711 = vmatprep.subr.mxu0 0.0
    %3712 = vmatpush2.msra.mxu0 0.0
    %3713 = vmatprep.subr.mxu0 0.0
    %3714 = vmatpush2.msra.mxu0 0.0
    %3715 = vmatprep.subr.mxu0 0.0
    %3716 = vmatpush2.msra.mxu0 0.0
    %3717 = vmatprep.subr.mxu0 0.0
    %3718 = vmatpush2.msra.mxu0 0.0
    %3719 = vmatprep.mubr.f32.mxu0 0.0
    %v3720 = vand.u32 %v3358, 4294901760
    %v3721 = vsub.f32 %v3358, %v3720
    %3722 = vmatmul.mubr.f32.gmra.mxu0 %v3721
    %v3723 = vpop.f32.mrf.mxu0
    %v3724 = vadd.f32 %v3620, %v3723
    %v3725 = vpop.f32.mrf.mxu0
    %3726 = vdwg.mxu0
    %3727 = vmatprep.subr.mxu0 0.0
    %v3728 = vand.u32 %v3376, 4294901760
    %3729 = vmatpush1.msra.mxu0 %v3728
    %3730 = vmatprep.subr.mxu0 0.0
    %v3731 = vand.u32 %v3375, 4294901760
    %3732 = vmatpush1.msra.mxu0 %v3731
    %3733 = vmatprep.subr.mxu0 0.0
    %v3734 = vand.u32 %v3374, 4294901760
    %3735 = vmatpush1.msra.mxu0 %v3734
    %3736 = vmatprep.subr.mxu0 0.0
    %v3737 = vand.u32 %v3373, 4294901760
    %3738 = vmatpush1.msra.mxu0 %v3737
    %3739 = vmatprep.subr.mxu0 0.0
    %v3740 = vand.u32 %v3372, 4294901760
    %3741 = vmatpush1.msra.mxu0 %v3740
    %3742 = vmatprep.subr.mxu0 0.0
    %v3743 = vand.u32 %v3371, 4294901760
    %3744 = vmatpush1.msra.mxu0 %v3743
    %3745 = vmatprep.subr.mxu0 0.0
    %v3746 = vand.u32 %v3370, 4294901760
    %3747 = vmatpush1.msra.mxu0 %v3746
    %3748 = vmatprep.subr.mxu0 0.0
    %v3749 = vand.u32 %v3369, 4294901760
    %3750 = vmatpush1.msra.mxu0 %v3749
    %3751 = vmatprep.subr.mxu0 0.0
    %v3752 = vand.u32 %v3368, 4294901760
    %3753 = vmatpush1.msra.mxu0 %v3752
    %3754 = vmatprep.subr.mxu0 0.0
    %v3755 = vand.u32 %v3367, 4294901760
    %3756 = vmatpush1.msra.mxu0 %v3755
    %3757 = vmatprep.subr.mxu0 0.0
    %v3758 = vand.u32 %v3366, 4294901760
    %3759 = vmatpush1.msra.mxu0 %v3758
    %3760 = vmatprep.subr.mxu0 0.0
    %v3761 = vand.u32 %v3365, 4294901760
    %3762 = vmatpush1.msra.mxu0 %v3761
    %3763 = vmatprep.subr.mxu0 0.0
    %v3764 = vand.u32 %v3364, 4294901760
    %3765 = vmatpush1.msra.mxu0 %v3764
    %3766 = vmatprep.subr.mxu0 0.0
    %v3767 = vand.u32 %v3363, 4294901760
    %3768 = vmatpush1.msra.mxu0 %v3767
    %3769 = vmatprep.subr.mxu0 0.0
    %v3770 = vand.u32 %v3362, 4294901760
    %3771 = vmatpush1.msra.mxu0 %v3770
    %3772 = vmatprep.subr.mxu0 0.0
    %v3773 = vand.u32 %v3361, 4294901760
    %3774 = vmatpush1.msra.mxu0 %v3773
    %3775 = vmatprep.subr.mxu0 0.0
    %3776 = vmatpush2.msra.mxu0 0.0
    %3777 = vmatprep.subr.mxu0 0.0
    %3778 = vmatpush2.msra.mxu0 0.0
    %3779 = vmatprep.subr.mxu0 0.0
    %3780 = vmatpush2.msra.mxu0 0.0
    %3781 = vmatprep.subr.mxu0 0.0
    %3782 = vmatpush2.msra.mxu0 0.0
    %3783 = vmatprep.subr.mxu0 0.0
    %3784 = vmatpush2.msra.mxu0 0.0
    %3785 = vmatprep.subr.mxu0 0.0
    %3786 = vmatpush2.msra.mxu0 0.0
    %3787 = vmatprep.subr.mxu0 0.0
    %3788 = vmatpush2.msra.mxu0 0.0
    %3789 = vmatprep.subr.mxu0 0.0
    %3790 = vmatpush2.msra.mxu0 0.0
    %3791 = vmatprep.subr.mxu0 0.0
    %3792 = vmatpush2.msra.mxu0 0.0
    %3793 = vmatprep.subr.mxu0 0.0
    %3794 = vmatpush2.msra.mxu0 0.0
    %3795 = vmatprep.subr.mxu0 0.0
    %3796 = vmatpush2.msra.mxu0 0.0
    %3797 = vmatprep.subr.mxu0 0.0
    %3798 = vmatpush2.msra.mxu0 0.0
    %3799 = vmatprep.subr.mxu0 0.0
    %3800 = vmatpush2.msra.mxu0 0.0
    %3801 = vmatprep.subr.mxu0 0.0
    %3802 = vmatpush2.msra.mxu0 0.0
    %3803 = vmatprep.subr.mxu0 0.0
    %3804 = vmatpush2.msra.mxu0 0.0
    %3805 = vmatprep.subr.mxu0 0.0
    %3806 = vmatpush2.msra.mxu0 0.0
    %3807 = vmatprep.mubr.f32.mxu0 0.0
    %v3808 = vand.u32 %v3358, 4294901760
    %v3809 = vsub.f32 %v3358, %v3808
    %v3810 = vand.u32 %v3809, 4294901760
    %3811 = vmatmul.mubr.f32.gmra.mxu0 %v3810
    %v3812 = vpop.f32.mrf.mxu0
    %v3813 = vadd.f32 %v3724, %v3812
    %v3814 = vpop.f32.mrf.mxu0
    %3815 = vdwg.mxu0
    %3816 = vmatprep.subr.mxu0 0.0
    %v3817 = vand.u32 %v3376, 4294901760
    %v3818 = vsub.f32 %v3376, %v3817
    %v3819 = vand.u32 %v3818, 4294901760
    %3820 = vmatpush1.msra.mxu0 %v3819
    %3821 = vmatprep.subr.mxu0 0.0
    %v3822 = vand.u32 %v3375, 4294901760
    %v3823 = vsub.f32 %v3375, %v3822
    %v3824 = vand.u32 %v3823, 4294901760
    %3825 = vmatpush1.msra.mxu0 %v3824
    %3826 = vmatprep.subr.mxu0 0.0
    %v3827 = vand.u32 %v3374, 4294901760
    %v3828 = vsub.f32 %v3374, %v3827
    %v3829 = vand.u32 %v3828, 4294901760
    %3830 = vmatpush1.msra.mxu0 %v3829
    %3831 = vmatprep.subr.mxu0 0.0
    %v3832 = vand.u32 %v3373, 4294901760
    %v3833 = vsub.f32 %v3373, %v3832
    %v3834 = vand.u32 %v3833, 4294901760
    %3835 = vmatpush1.msra.mxu0 %v3834
    %3836 = vmatprep.subr.mxu0 0.0
    %v3837 = vand.u32 %v3372, 4294901760
    %v3838 = vsub.f32 %v3372, %v3837
    %v3839 = vand.u32 %v3838, 4294901760
    %3840 = vmatpush1.msra.mxu0 %v3839
    %3841 = vmatprep.subr.mxu0 0.0
    %v3842 = vand.u32 %v3371, 4294901760
    %v3843 = vsub.f32 %v3371, %v3842
    %v3844 = vand.u32 %v3843, 4294901760
    %3845 = vmatpush1.msra.mxu0 %v3844
    %3846 = vmatprep.subr.mxu0 0.0
    %v3847 = vand.u32 %v3370, 4294901760
    %v3848 = vsub.f32 %v3370, %v3847
    %v3849 = vand.u32 %v3848, 4294901760
    %3850 = vmatpush1.msra.mxu0 %v3849
    %3851 = vmatprep.subr.mxu0 0.0
    %v3852 = vand.u32 %v3369, 4294901760
    %v3853 = vsub.f32 %v3369, %v3852
    %v3854 = vand.u32 %v3853, 4294901760
    %3855 = vmatpush1.msra.mxu0 %v3854
    %3856 = vmatprep.subr.mxu0 0.0
    %v3857 = vand.u32 %v3368, 4294901760
    %v3858 = vsub.f32 %v3368, %v3857
    %v3859 = vand.u32 %v3858, 4294901760
    %3860 = vmatpush1.msra.mxu0 %v3859
    %3861 = vmatprep.subr.mxu0 0.0
    %v3862 = vand.u32 %v3367, 4294901760
    %v3863 = vsub.f32 %v3367, %v3862
    %v3864 = vand.u32 %v3863, 4294901760
    %3865 = vmatpush1.msra.mxu0 %v3864
    %3866 = vmatprep.subr.mxu0 0.0
    %v3867 = vand.u32 %v3366, 4294901760
    %v3868 = vsub.f32 %v3366, %v3867
    %v3869 = vand.u32 %v3868, 4294901760
    %3870 = vmatpush1.msra.mxu0 %v3869
    %3871 = vmatprep.subr.mxu0 0.0
    %v3872 = vand.u32 %v3365, 4294901760
    %v3873 = vsub.f32 %v3365, %v3872
    %v3874 = vand.u32 %v3873, 4294901760
    %3875 = vmatpush1.msra.mxu0 %v3874
    %3876 = vmatprep.subr.mxu0 0.0
    %v3877 = vand.u32 %v3364, 4294901760
    %v3878 = vsub.f32 %v3364, %v3877
    %v3879 = vand.u32 %v3878, 4294901760
    %3880 = vmatpush1.msra.mxu0 %v3879
    %3881 = vmatprep.subr.mxu0 0.0
    %v3882 = vand.u32 %v3363, 4294901760
    %v3883 = vsub.f32 %v3363, %v3882
    %v3884 = vand.u32 %v3883, 4294901760
    %3885 = vmatpush1.msra.mxu0 %v3884
    %3886 = vmatprep.subr.mxu0 0.0
    %v3887 = vand.u32 %v3362, 4294901760
    %v3888 = vsub.f32 %v3362, %v3887
    %v3889 = vand.u32 %v3888, 4294901760
    %3890 = vmatpush1.msra.mxu0 %v3889
    %3891 = vmatprep.subr.mxu0 0.0
    %v3892 = vand.u32 %v3361, 4294901760
    %v3893 = vsub.f32 %v3361, %v3892
    %v3894 = vand.u32 %v3893, 4294901760
    %3895 = vmatpush1.msra.mxu0 %v3894
    %3896 = vmatprep.subr.mxu0 0.0
    %3897 = vmatpush2.msra.mxu0 0.0
    %3898 = vmatprep.subr.mxu0 0.0
    %3899 = vmatpush2.msra.mxu0 0.0
    %3900 = vmatprep.subr.mxu0 0.0
    %3901 = vmatpush2.msra.mxu0 0.0
    %3902 = vmatprep.subr.mxu0 0.0
    %3903 = vmatpush2.msra.mxu0 0.0
    %3904 = vmatprep.subr.mxu0 0.0
    %3905 = vmatpush2.msra.mxu0 0.0
    %3906 = vmatprep.subr.mxu0 0.0
    %3907 = vmatpush2.msra.mxu0 0.0
    %3908 = vmatprep.subr.mxu0 0.0
    %3909 = vmatpush2.msra.mxu0 0.0
    %3910 = vmatprep.subr.mxu0 0.0
    %3911 = vmatpush2.msra.mxu0 0.0
    %3912 = vmatprep.subr.mxu0 0.0
    %3913 = vmatpush2.msra.mxu0 0.0
    %3914 = vmatprep.subr.mxu0 0.0
    %3915 = vmatpush2.msra.mxu0 0.0
    %3916 = vmatprep.subr.mxu0 0.0
    %3917 = vmatpush2.msra.mxu0 0.0
    %3918 = vmatprep.subr.mxu0 0.0
    %3919 = vmatpush2.msra.mxu0 0.0
    %3920 = vmatprep.subr.mxu0 0.0
    %3921 = vmatpush2.msra.mxu0 0.0
    %3922 = vmatprep.subr.mxu0 0.0
    %3923 = vmatpush2.msra.mxu0 0.0
    %3924 = vmatprep.subr.mxu0 0.0
    %3925 = vmatpush2.msra.mxu0 0.0
    %3926 = vmatprep.subr.mxu0 0.0
    %3927 = vmatpush2.msra.mxu0 0.0
    %3928 = vmatprep.mubr.f32.mxu0 0.0
    %v3929 = vand.u32 %v3358, 4294901760
    %3930 = vmatmul.mubr.f32.gmra.mxu0 %v3929
    %v3931 = vpop.f32.mrf.mxu0
    %v3932 = vadd.f32 %v3813, %v3931
    %v3933 = vpop.f32.mrf.mxu0
    %3934 = vdwg.mxu0
    %3935 = vmatprep.subr.mxu0 0.0
    %v3936 = vand.u32 %v3376, 4294901760
    %3937 = vmatpush1.msra.mxu0 %v3936
    %3938 = vmatprep.subr.mxu0 0.0
    %v3939 = vand.u32 %v3375, 4294901760
    %3940 = vmatpush1.msra.mxu0 %v3939
    %3941 = vmatprep.subr.mxu0 0.0
    %v3942 = vand.u32 %v3374, 4294901760
    %3943 = vmatpush1.msra.mxu0 %v3942
    %3944 = vmatprep.subr.mxu0 0.0
    %v3945 = vand.u32 %v3373, 4294901760
    %3946 = vmatpush1.msra.mxu0 %v3945
    %3947 = vmatprep.subr.mxu0 0.0
    %v3948 = vand.u32 %v3372, 4294901760
    %3949 = vmatpush1.msra.mxu0 %v3948
    %3950 = vmatprep.subr.mxu0 0.0
    %v3951 = vand.u32 %v3371, 4294901760
    %3952 = vmatpush1.msra.mxu0 %v3951
    %3953 = vmatprep.subr.mxu0 0.0
    %v3954 = vand.u32 %v3370, 4294901760
    %3955 = vmatpush1.msra.mxu0 %v3954
    %3956 = vmatprep.subr.mxu0 0.0
    %v3957 = vand.u32 %v3369, 4294901760
    %3958 = vmatpush1.msra.mxu0 %v3957
    %3959 = vmatprep.subr.mxu0 0.0
    %v3960 = vand.u32 %v3368, 4294901760
    %3961 = vmatpush1.msra.mxu0 %v3960
    %3962 = vmatprep.subr.mxu0 0.0
    %v3963 = vand.u32 %v3367, 4294901760
    %3964 = vmatpush1.msra.mxu0 %v3963
    %3965 = vmatprep.subr.mxu0 0.0
    %v3966 = vand.u32 %v3366, 4294901760
    %3967 = vmatpush1.msra.mxu0 %v3966
    %3968 = vmatprep.subr.mxu0 0.0
    %v3969 = vand.u32 %v3365, 4294901760
    %3970 = vmatpush1.msra.mxu0 %v3969
    %3971 = vmatprep.subr.mxu0 0.0
    %v3972 = vand.u32 %v3364, 4294901760
    %3973 = vmatpush1.msra.mxu0 %v3972
    %3974 = vmatprep.subr.mxu0 0.0
    %v3975 = vand.u32 %v3363, 4294901760
    %3976 = vmatpush1.msra.mxu0 %v3975
    %3977 = vmatprep.subr.mxu0 0.0
    %v3978 = vand.u32 %v3362, 4294901760
    %3979 = vmatpush1.msra.mxu0 %v3978
    %3980 = vmatprep.subr.mxu0 0.0
    %v3981 = vand.u32 %v3361, 4294901760
    %3982 = vmatpush1.msra.mxu0 %v3981
    %3983 = vmatprep.subr.mxu0 0.0
    %3984 = vmatpush2.msra.mxu0 0.0
    %3985 = vmatprep.subr.mxu0 0.0
    %3986 = vmatpush2.msra.mxu0 0.0
    %3987 = vmatprep.subr.mxu0 0.0
    %3988 = vmatpush2.msra.mxu0 0.0
    %3989 = vmatprep.subr.mxu0 0.0
    %3990 = vmatpush2.msra.mxu0 0.0
    %3991 = vmatprep.subr.mxu0 0.0
    %3992 = vmatpush2.msra.mxu0 0.0
    %3993 = vmatprep.subr.mxu0 0.0
    %3994 = vmatpush2.msra.mxu0 0.0
    %3995 = vmatprep.subr.mxu0 0.0
    %3996 = vmatpush2.msra.mxu0 0.0
    %3997 = vmatprep.subr.mxu0 0.0
    %3998 = vmatpush2.msra.mxu0 0.0
    %3999 = vmatprep.subr.mxu0 0.0
    %4000 = vmatpush2.msra.mxu0 0.0
    %4001 = vmatprep.subr.mxu0 0.0
    %4002 = vmatpush2.msra.mxu0 0.0
    %4003 = vmatprep.subr.mxu0 0.0
    %4004 = vmatpush2.msra.mxu0 0.0
    %4005 = vmatprep.subr.mxu0 0.0
    %4006 = vmatpush2.msra.mxu0 0.0
    %4007 = vmatprep.subr.mxu0 0.0
    %4008 = vmatpush2.msra.mxu0 0.0
    %4009 = vmatprep.subr.mxu0 0.0
    %4010 = vmatpush2.msra.mxu0 0.0
    %4011 = vmatprep.subr.mxu0 0.0
    %4012 = vmatpush2.msra.mxu0 0.0
    %4013 = vmatprep.subr.mxu0 0.0
    %4014 = vmatpush2.msra.mxu0 0.0
    %4015 = vmatprep.mubr.f32.mxu0 0.0
    %v4016 = vand.u32 %v3358, 4294901760
    %4017 = vmatmul.mubr.f32.gmra.mxu0 %v4016
    %v4018 = vpop.f32.mrf.mxu0
    %v4019 = vadd.f32 %v3932, %v4018
    %v4020 = vpop.f32.mrf.mxu0
    %4021 = vdwg.mxu0
    %v4022 = vmin.f32 %v4019, 0.0
    %v4023 = vmul.f32 %v4022, 1.442695
    %v4024 = vpow.pop %v4023
    %v4025 = vsub.f32 %v4024, 1.0
    %vm4026 = vcmp.gt.f32.partialorder %v4019, 0.0
    %v4027 = vsel %vm4026, %v4019, %v4025
    %4028 = vst [vmem:[#allocation11] sm:$0xff] %v4027
    // Predicated region
    $region46: #{tpu_custom_call.1} parent=1 // pred_check
      _
    $region47: #{tpu_custom_call.1} parent=1 // pred_check_branch
      %4030 = sbr.rel (0) target = $region49
    $region48: #{tpu_custom_call.1} parent=1 // pred_region
      %s4032 = ssub.s32 128, 128
      %4033 = vsyncadd [#allocation4], %s4032
      %s4035 = sshll.u32 [#allocation11], 4
      %s4036 = int_to_ptr.vmem [resolvable:$true] %s4035
      %4038 = dma.vmem_to_hbm [thread:$0]  %s4036, 128, %s6, [#allocation4]
    $region49: #{tpu_custom_call.1} parent=1 // pred_fallthru
      _
    // Predicated region
    $region50: #{tpu_custom_call.1} parent=1 // pred_check
      _
    $region51: #{tpu_custom_call.1} parent=1 // pred_check_branch
      %4040 = sbr.rel (0) target = $region53
    $region52: #{tpu_custom_call.1} parent=1 // pred_region
      %4041 = dma.done [#allocation4], 128
    $region53: #{tpu_custom_call.1} parent=1 // pred_fallthru
      _
    %4042 = vsyncpa [#allocation3], 1
    %4043 = vsyncpa [#allocation6], 1
    %4044 = vsyncpa [#allocation9], 1
    %4045 = vsyncpa [#allocation4], 1

</llo_original>
